<compile_context>
chip_gen: v7x
topology: tpu7x:2x2x1
jax: 0.10.0
libtpu: 0.0.40
codegen_flags: <defaults>
</compile_context>

<pallas_src>
import jax
import jax.numpy as jnp
from jax.experimental import pallas as pl
from jax.experimental.pallas import tpu as pltpu

NUM_LAYERS = 4


def lstm_kernel(x_ref, wih_ref, whh_ref, bias_ref, wlin_ref, blin_ref, y_ref):
    """Wavefront-parallel LSTM recurrence, fully VMEM-resident.

    x_ref    : (W, L*B, H)  f32   x[t] (lane-padded D->H) in rows [0, B), zeros
                                  elsewhere; zero slabs for the L-1 tail wavefronts.
    wih_ref  : (L, H, 4H)   bf16  input->gate weights (layer 0 zero-padded D->H rows).
    whh_ref  : (L, H, 4H)   bf16  hidden->gate weights.
    bias_ref : (L*B, 4H)    f32   per-layer (b_ih + b_hh), replicated over batch rows.
    wlin_ref : (1, H)       f32   linear head weight row.
    blin_ref : (1, 1)       f32   linear head bias.
    y_ref    : (B, 1)       f32
    """
    W, LB, H = x_ref.shape
    L = wih_ref.shape[0]
    B = LB // L
    G = 4 * H

    # Loop-invariant constants, hoisted out of the unrolled wavefront loop.
    bias = bias_ref[...]                                            # (LB, G)
    lane = jax.lax.broadcasted_iota(jnp.int32, (LB, G), 1)
    g_lanes = (lane >= 2 * H) & (lane < 3 * H)                      # "g" gate lanes
    grow = jax.lax.broadcasted_iota(jnp.int32, (LB, G), 0)
    band = [(grow >= l * B) & (grow < (l + 1) * B) for l in range(L)]
    srow = jax.lax.broadcasted_iota(jnp.int32, (LB, H), 0)
    top_rows = srow < B                                             # layer-0 rows

    # Layer-packed state: rows [l*B, (l+1)*B) hold layer l's h / c.
    h_pk = jnp.zeros((LB, H), jnp.float32)
    c_pk = jnp.zeros((LB, H), jnp.float32)

    # Wavefront w processes cell (t = w - l, layer l) for all layers at once:
    # every active cell depends only on wavefront w-1 state, so the serial
    # chain is W = T + L - 1 steps instead of T * L.
    for w in range(W):
        # Below-input for layer l is h_{l-1} (x[t] for layer 0): shift the
        # packed block down by one layer band (one XLU sublane roll) and drop
        # x on the top rows (VPU select).
        below = jnp.where(top_rows, x_ref[w],
                          pltpu.roll(h_pk, shift=B, axis=0))

        below_bf = below.astype(jnp.bfloat16)
        h_bf = h_pk.astype(jnp.bfloat16)

        # 2L independent single-pass bf16 MXU matmuls (M = L*B = 8) that
        # pipeline back-to-back; each layer keeps only its own row band via a
        # static VPU select (no lane/sublane moves, no concatenation).
        gates = None
        for l in range(L):
            g_l = (jnp.dot(below_bf, wih_ref[l],
                           preferred_element_type=jnp.float32)
                   + jnp.dot(h_bf, whh_ref[l],
                             preferred_element_type=jnp.float32))
            gates = g_l if gates is None else jnp.where(band[l], g_l, gates)
        gates = gates + bias

        # Gate activations on the full (L*B, 4H) = (8, 128) block: one sigmoid
        # + one tanh + lane select, then static lane slices (order i, f, g, o).
        act = jnp.where(g_lanes, jnp.tanh(gates), jax.nn.sigmoid(gates))
        i_g = act[:, 0 * H:1 * H]
        f_g = act[:, 1 * H:2 * H]
        g_g = act[:, 2 * H:3 * H]
        o_g = act[:, 3 * H:4 * H]
        c_new = f_g * c_pk + i_g * g_g
        h_new = o_g * jnp.tanh(c_new)

        # Layers that have not started yet (l > w) must keep their zero init.
        # Post-final (tail) spurious updates are harmless: consumers read the
        # previous wavefront's state and the head only reads the top layer,
        # whose last update is the last wavefront.
        if w < L - 1:
            started = srow < (w + 1) * B
            h_pk = jnp.where(started, h_new, h_pk)
            c_pk = jnp.where(started, c_new, c_pk)
        else:
            h_pk, c_pk = h_new, c_new

    # Linear head on the top layer's last-timestep hidden state: f32 VPU
    # multiply + XLU lane reduce (avoids an N=1 MXU matmul / masked store path).
    h_top = h_pk[(L - 1) * B:, :]                                   # (B, H)
    y_ref[...] = (jnp.sum(h_top * wlin_ref[...], axis=1, keepdims=True)
                  + blin_ref[...])


def pack_params(wih0, wihr, whh, b, wlin, blin, batch_size):
    """One-time packing of the module's weights into the kernel layout."""
    H = whh.shape[1]
    D = wih0.shape[0]
    assert D <= H, "kernel assumes input_dim <= hidden_dim (lane padding)"
    # Layer-0 input weight zero-padded (D, 4H) -> (H, 4H) so every layer's
    # below-input matmul has the same K = H contraction.
    wih0_pad = jnp.pad(wih0, ((0, H - D), (0, 0)))
    wih_all = jnp.concatenate([wih0_pad[None], wihr], axis=0).astype(jnp.bfloat16)
    whh_all = whh.astype(jnp.bfloat16)
    # Combined b_ih + b_hh, replicated to the packed (L*B, 4H) row layout.
    bias_pk = jnp.repeat(b.reshape(NUM_LAYERS, 4 * H), batch_size,
                         axis=0).astype(jnp.float32)
    wlin_row = wlin.reshape(1, H).astype(jnp.float32)
    blin_sc = blin.reshape(1, 1).astype(jnp.float32)
    return wih_all, whh_all, bias_pk, wlin_row, blin_sc


@jax.jit
def lstm_forward(x, wih_all, whh_all, bias_pk, wlin_row, blin_sc):
    T, B, D = x.shape
    L, H, _ = wih_all.shape
    # Lane-pad x (D -> H), row-pad to the packed L*B block, and time-pad with
    # L-1 zero wavefront slabs (consumed only by already-finished layers).
    x_slab = jnp.pad(x, ((0, L - 1), (0, L * B - B), (0, H - D)))
    vmem = pl.BlockSpec(memory_space=pltpu.MemorySpace.VMEM)
    y = pl.pallas_call(
        lstm_kernel,
        out_shape=jax.ShapeDtypeStruct((B, 1), jnp.float32),
        in_specs=[vmem] * 6,
        out_specs=vmem,
    )(x_slab, wih_all, whh_all, bias_pk, wlin_row, blin_sc)
    return y.reshape(-1)  # y_pred.view(-1)


def _ref_forward(x, wih0, wihr, whh, b, wlin, blin, *, bf16_matmuls):
    """Pure-JAX reference with the module's exact cell math.

    bf16_matmuls=True mirrors the kernel's single-pass bf16 MXU operands with
    f32 accumulation; False keeps full-precision f32 matmuls.
    """
    T, B, D = x.shape
    H = whh.shape[1]

    if bf16_matmuls:
        def mm(a, w):
            return jnp.dot(a.astype(jnp.bfloat16), w.astype(jnp.bfloat16),
                           preferred_element_type=jnp.float32)
    else:
        def mm(a, w):
            return jnp.dot(a, w, precision=jax.lax.Precision.HIGHEST)

    h = [jnp.zeros((B, H), jnp.float32) for _ in range(NUM_LAYERS)]
    c = [jnp.zeros((B, H), jnp.float32) for _ in range(NUM_LAYERS)]
    for t in range(T):
        xi = x[t]
        for l in range(NUM_LAYERS):
            w_ih = wih0 if l == 0 else wihr[l - 1]
            gates = mm(xi, w_ih) + mm(h[l], whh[l]) + b[l]
            i_g = jax.nn.sigmoid(gates[:, 0 * H:1 * H])
            f_g = jax.nn.sigmoid(gates[:, 1 * H:2 * H])
            g_g = jnp.tanh(gates[:, 2 * H:3 * H])
            o_g = jax.nn.sigmoid(gates[:, 3 * H:4 * H])
            c[l] = f_g * c[l] + i_g * g_g
            h[l] = o_g * jnp.tanh(c[l])
            xi = h[l]
    # Head is f32 elementwise + reduce in the kernel; mirror that exactly.
    return (jnp.sum(h[-1] * wlin.reshape(1, H), axis=1)
            + blin.reshape(())).reshape(-1)


if __name__ == "__main__":
    # Shapes implied by the module: input_dim=8, hidden_dim=32, batch_size=2,
    # seq_len=8, output_dim=1, num_layers=4.
    T, B, D, H = 8, 2, 8, 32
    key = jax.random.PRNGKey(0)
    ks = jax.random.split(key, 8)
    k = 1.0 / jnp.sqrt(H)

    x = jax.random.normal(ks[0], (T, B, D), jnp.float32)

    # PyTorch-style uniform(-1/sqrt(H), 1/sqrt(H)) init; weights pre-transposed
    # to (in_features, 4H); b = b_ih + b_hh combined (same effect as the two
    # PyTorch bias vectors).
    wih0 = jax.random.uniform(ks[1], (D, 4 * H), jnp.float32, -k, k)
    wihr = jax.random.uniform(ks[2], (NUM_LAYERS - 1, H, 4 * H), jnp.float32, -k, k)
    whh = jax.random.uniform(ks[3], (NUM_LAYERS, H, 4 * H), jnp.float32, -k, k)
    b = (jax.random.uniform(ks[4], (NUM_LAYERS, 1, 4 * H), jnp.float32, -k, k)
         + jax.random.uniform(ks[5], (NUM_LAYERS, 1, 4 * H), jnp.float32, -k, k))
    wlin = jax.random.uniform(ks[6], (H, 1), jnp.float32, -k, k)
    blin = jax.random.uniform(ks[7], (1, 1), jnp.float32, -k, k)

    packed = pack_params(wih0, wihr, whh, b, wlin, blin, B)
    y = lstm_forward(x, *packed)
    jax.block_until_ready(y)
    assert y.shape == (B,), y.shape

    # Tight check vs. a reference applying the same bf16 operand rounding
    # (isolates wavefront/packing restructuring from MXU precision choice).
    y_bf = _ref_forward(x, wih0, wihr, whh, b, wlin, blin, bf16_matmuls=True)
    assert jnp.allclose(y, y_bf, rtol=1e-3, atol=1e-3), (y, y_bf)

    # Loose sanity check vs. the full-f32 module semantics (bf16-MXU noise only).
    y_f32 = _ref_forward(x, wih0, wihr, whh, b, wlin, blin, bf16_matmuls=False)
    assert jnp.allclose(y, y_f32, rtol=3e-2, atol=3e-2), (y, y_f32)

    print("KERNEL_OK")
</pallas_src>

<mosaic_0001>
module attributes {stable_mosaic.version = 11 : i64} {
  func.func @lstm_kernel(%arg0: memref<11x8x32xf32, #tpu.memory_space<vmem>>, %arg1: memref<4x32x128xbf16, #tpu.memory_space<vmem>>, %arg2: memref<4x32x128xbf16, #tpu.memory_space<vmem>>, %arg3: memref<8x128xf32, #tpu.memory_space<vmem>>, %arg4: memref<1x32xf32, #tpu.memory_space<vmem>>, %arg5: memref<1x1xf32, #tpu.memory_space<vmem>>, %arg6: memref<2x1xf32, #tpu.memory_space<vmem>>) attributes {dimension_semantics = [], scalar_prefetch = 0 : i64, scratch_operands = 0 : i64, tpu.core_type = #tpu.core_type<tc>} {
    %c0 = arith.constant 0 : index
    %c0_0 = arith.constant 0 : index
    %0 = vector.load %arg3[%c0, %c0_0] : memref<8x128xf32, #tpu.memory_space<vmem>>, vector<8x128xf32>
    %1 = tpu.iota {dimensions = array<i32: 1>} : vector<8x128xi32>
    %c64_i32 = arith.constant 64 : i32
    %2 = vector.broadcast %c64_i32 : i32 to vector<8x128xi32>
    %3 = arith.cmpi sge, %1, %2 : vector<8x128xi32>
    %c96_i32 = arith.constant 96 : i32
    %4 = vector.broadcast %c96_i32 : i32 to vector<8x128xi32>
    %5 = arith.cmpi slt, %1, %4 : vector<8x128xi32>
    %6 = arith.andi %3, %5 : vector<8x128xi1>
    %7 = tpu.iota {dimensions = array<i32: 0>} : vector<8x128xi32>
    %c2_i32 = arith.constant 2 : i32
    %8 = vector.broadcast %c2_i32 : i32 to vector<8x128xi32>
    %9 = arith.cmpi sge, %7, %8 : vector<8x128xi32>
    %c4_i32 = arith.constant 4 : i32
    %10 = vector.broadcast %c4_i32 : i32 to vector<8x128xi32>
    %11 = arith.cmpi slt, %7, %10 : vector<8x128xi32>
    %12 = arith.andi %9, %11 : vector<8x128xi1>
    %c4_i32_1 = arith.constant 4 : i32
    %13 = vector.broadcast %c4_i32_1 : i32 to vector<8x128xi32>
    %14 = arith.cmpi sge, %7, %13 : vector<8x128xi32>
    %c6_i32 = arith.constant 6 : i32
    %15 = vector.broadcast %c6_i32 : i32 to vector<8x128xi32>
    %16 = arith.cmpi slt, %7, %15 : vector<8x128xi32>
    %17 = arith.andi %14, %16 : vector<8x128xi1>
    %c6_i32_2 = arith.constant 6 : i32
    %18 = vector.broadcast %c6_i32_2 : i32 to vector<8x128xi32>
    %19 = arith.cmpi sge, %7, %18 : vector<8x128xi32>
    %c8_i32 = arith.constant 8 : i32
    %20 = vector.broadcast %c8_i32 : i32 to vector<8x128xi32>
    %21 = arith.cmpi slt, %7, %20 : vector<8x128xi32>
    %22 = arith.andi %19, %21 : vector<8x128xi1>
    %23 = tpu.iota {dimensions = array<i32: 0>} : vector<8x32xi32>
    %c2_i32_3 = arith.constant 2 : i32
    %24 = vector.broadcast %c2_i32_3 : i32 to vector<8x32xi32>
    %25 = arith.cmpi slt, %23, %24 : vector<8x32xi32>
    %cst = arith.constant 0.000000e+00 : f32
    %26 = vector.broadcast %cst : f32 to vector<8x32xf32>
    %cst_4 = arith.constant 0.000000e+00 : f32
    %27 = vector.broadcast %cst_4 : f32 to vector<8x32xf32>
    %c0_5 = arith.constant 0 : index
    %c0_6 = arith.constant 0 : index
    %c0_7 = arith.constant 0 : index
    %28 = vector.load %arg0[%c0_5, %c0_6, %c0_7] : memref<11x8x32xf32, #tpu.memory_space<vmem>>, vector<1x8x32xf32>
    %29 = vector.shape_cast %28 : vector<1x8x32xf32> to vector<8x32xf32>
    %c2_i32_8 = arith.constant 2 : i32
    %30 = tpu.dynamic_rotate %26 by %c2_i32_8 dim 0 : vector<8x32xf32>, i32 -> vector<8x32xf32>
    %31 = arith.select %25, %29, %30 : vector<8x32xi1>, vector<8x32xf32>
    %32 = arith.truncf %31 : vector<8x32xf32> to vector<8x32xbf16>
    %33 = arith.truncf %26 : vector<8x32xf32> to vector<8x32xbf16>
    %c0_9 = arith.constant 0 : index
    %c0_10 = arith.constant 0 : index
    %c0_11 = arith.constant 0 : index
    %34 = vector.load %arg1[%c0_9, %c0_10, %c0_11] : memref<4x32x128xbf16, #tpu.memory_space<vmem>>, vector<1x32x128xbf16>
    %35 = vector.shape_cast %34 : vector<1x32x128xbf16> to vector<32x128xbf16>
    %cst_12 = arith.constant dense<0.000000e+00> : vector<8x128xf32>
    %36 = tpu.matmul %32, %35, %cst_12 {dimension_numbers = #tpu.dot_dimension_numbers<[1], [0], [0], [1], [0, 0, 1, 1], [], []>} : vector<8x32xbf16>, vector<32x128xbf16>, vector<8x128xf32> -> vector<8x128xf32>
    %c0_13 = arith.constant 0 : index
    %c0_14 = arith.constant 0 : index
    %c0_15 = arith.constant 0 : index
    %37 = vector.load %arg2[%c0_13, %c0_14, %c0_15] : memref<4x32x128xbf16, #tpu.memory_space<vmem>>, vector<1x32x128xbf16>
    %38 = vector.shape_cast %37 : vector<1x32x128xbf16> to vector<32x128xbf16>
    %cst_16 = arith.constant dense<0.000000e+00> : vector<8x128xf32>
    %39 = tpu.matmul %33, %38, %cst_16 {dimension_numbers = #tpu.dot_dimension_numbers<[1], [0], [0], [1], [0, 0, 1, 1], [], []>} : vector<8x32xbf16>, vector<32x128xbf16>, vector<8x128xf32> -> vector<8x128xf32>
    %40 = arith.addf %36, %39 : vector<8x128xf32>
    %c1 = arith.constant 1 : index
    %c0_17 = arith.constant 0 : index
    %c0_18 = arith.constant 0 : index
    %41 = vector.load %arg1[%c1, %c0_17, %c0_18] : memref<4x32x128xbf16, #tpu.memory_space<vmem>>, vector<1x32x128xbf16>
    %42 = vector.shape_cast %41 : vector<1x32x128xbf16> to vector<32x128xbf16>
    %cst_19 = arith.constant dense<0.000000e+00> : vector<8x128xf32>
    %43 = tpu.matmul %32, %42, %cst_19 {dimension_numbers = #tpu.dot_dimension_numbers<[1], [0], [0], [1], [0, 0, 1, 1], [], []>} : vector<8x32xbf16>, vector<32x128xbf16>, vector<8x128xf32> -> vector<8x128xf32>
    %c1_20 = arith.constant 1 : index
    %c0_21 = arith.constant 0 : index
    %c0_22 = arith.constant 0 : index
    %44 = vector.load %arg2[%c1_20, %c0_21, %c0_22] : memref<4x32x128xbf16, #tpu.memory_space<vmem>>, vector<1x32x128xbf16>
    %45 = vector.shape_cast %44 : vector<1x32x128xbf16> to vector<32x128xbf16>
    %cst_23 = arith.constant dense<0.000000e+00> : vector<8x128xf32>
    %46 = tpu.matmul %33, %45, %cst_23 {dimension_numbers = #tpu.dot_dimension_numbers<[1], [0], [0], [1], [0, 0, 1, 1], [], []>} : vector<8x32xbf16>, vector<32x128xbf16>, vector<8x128xf32> -> vector<8x128xf32>
    %47 = arith.addf %43, %46 : vector<8x128xf32>
    %48 = arith.select %12, %47, %40 : vector<8x128xi1>, vector<8x128xf32>
    %c2 = arith.constant 2 : index
    %c0_24 = arith.constant 0 : index
    %c0_25 = arith.constant 0 : index
    %49 = vector.load %arg1[%c2, %c0_24, %c0_25] : memref<4x32x128xbf16, #tpu.memory_space<vmem>>, vector<1x32x128xbf16>
    %50 = vector.shape_cast %49 : vector<1x32x128xbf16> to vector<32x128xbf16>
    %cst_26 = arith.constant dense<0.000000e+00> : vector<8x128xf32>
    %51 = tpu.matmul %32, %50, %cst_26 {dimension_numbers = #tpu.dot_dimension_numbers<[1], [0], [0], [1], [0, 0, 1, 1], [], []>} : vector<8x32xbf16>, vector<32x128xbf16>, vector<8x128xf32> -> vector<8x128xf32>
    %c2_27 = arith.constant 2 : index
    %c0_28 = arith.constant 0 : index
    %c0_29 = arith.constant 0 : index
    %52 = vector.load %arg2[%c2_27, %c0_28, %c0_29] : memref<4x32x128xbf16, #tpu.memory_space<vmem>>, vector<1x32x128xbf16>
    %53 = vector.shape_cast %52 : vector<1x32x128xbf16> to vector<32x128xbf16>
    %cst_30 = arith.constant dense<0.000000e+00> : vector<8x128xf32>
    %54 = tpu.matmul %33, %53, %cst_30 {dimension_numbers = #tpu.dot_dimension_numbers<[1], [0], [0], [1], [0, 0, 1, 1], [], []>} : vector<8x32xbf16>, vector<32x128xbf16>, vector<8x128xf32> -> vector<8x128xf32>
    %55 = arith.addf %51, %54 : vector<8x128xf32>
    %56 = arith.select %17, %55, %48 : vector<8x128xi1>, vector<8x128xf32>
    %c3 = arith.constant 3 : index
    %c0_31 = arith.constant 0 : index
    %c0_32 = arith.constant 0 : index
    %57 = vector.load %arg1[%c3, %c0_31, %c0_32] : memref<4x32x128xbf16, #tpu.memory_space<vmem>>, vector<1x32x128xbf16>
    %58 = vector.shape_cast %57 : vector<1x32x128xbf16> to vector<32x128xbf16>
    %cst_33 = arith.constant dense<0.000000e+00> : vector<8x128xf32>
    %59 = tpu.matmul %32, %58, %cst_33 {dimension_numbers = #tpu.dot_dimension_numbers<[1], [0], [0], [1], [0, 0, 1, 1], [], []>} : vector<8x32xbf16>, vector<32x128xbf16>, vector<8x128xf32> -> vector<8x128xf32>
    %c3_34 = arith.constant 3 : index
    %c0_35 = arith.constant 0 : index
    %c0_36 = arith.constant 0 : index
    %60 = vector.load %arg2[%c3_34, %c0_35, %c0_36] : memref<4x32x128xbf16, #tpu.memory_space<vmem>>, vector<1x32x128xbf16>
    %61 = vector.shape_cast %60 : vector<1x32x128xbf16> to vector<32x128xbf16>
    %cst_37 = arith.constant dense<0.000000e+00> : vector<8x128xf32>
    %62 = tpu.matmul %33, %61, %cst_37 {dimension_numbers = #tpu.dot_dimension_numbers<[1], [0], [0], [1], [0, 0, 1, 1], [], []>} : vector<8x32xbf16>, vector<32x128xbf16>, vector<8x128xf32> -> vector<8x128xf32>
    %63 = arith.addf %59, %62 : vector<8x128xf32>
    %64 = arith.select %22, %63, %56 : vector<8x128xi1>, vector<8x128xf32>
    %65 = arith.addf %64, %0 : vector<8x128xf32>
    %66 = math.tanh %65 : vector<8x128xf32>
    %67 = arith.negf %65 : vector<8x128xf32>
    %68 = math.exp %67 : vector<8x128xf32>
    %cst_38 = arith.constant 1.000000e+00 : f32
    %69 = vector.broadcast %cst_38 : f32 to vector<8x128xf32>
    %70 = arith.addf %69, %68 : vector<8x128xf32>
    %71 = arith.divf %69, %70 : vector<8x128xf32>
    %72 = arith.select %6, %66, %71 : vector<8x128xi1>, vector<8x128xf32>
    %73 = vector.extract_strided_slice %72 {offsets = [0, 0], sizes = [8, 32], strides = [1, 1]} : vector<8x128xf32> to vector<8x32xf32>
    %74 = vector.extract_strided_slice %72 {offsets = [0, 32], sizes = [8, 32], strides = [1, 1]} : vector<8x128xf32> to vector<8x32xf32>
    %75 = vector.extract_strided_slice %72 {offsets = [0, 64], sizes = [8, 32], strides = [1, 1]} : vector<8x128xf32> to vector<8x32xf32>
    %76 = vector.extract_strided_slice %72 {offsets = [0, 96], sizes = [8, 32], strides = [1, 1]} : vector<8x128xf32> to vector<8x32xf32>
    %77 = arith.mulf %74, %27 : vector<8x32xf32>
    %78 = arith.mulf %73, %75 : vector<8x32xf32>
    %79 = arith.addf %77, %78 : vector<8x32xf32>
    %80 = math.tanh %79 : vector<8x32xf32>
    %81 = arith.mulf %76, %80 : vector<8x32xf32>
    %c2_i32_39 = arith.constant 2 : i32
    %82 = vector.broadcast %c2_i32_39 : i32 to vector<8x32xi32>
    %83 = arith.cmpi slt, %23, %82 : vector<8x32xi32>
    %84 = arith.select %83, %81, %26 : vector<8x32xi1>, vector<8x32xf32>
    %85 = arith.select %83, %79, %27 : vector<8x32xi1>, vector<8x32xf32>
    %c1_40 = arith.constant 1 : index
    %c0_41 = arith.constant 0 : index
    %c0_42 = arith.constant 0 : index
    %86 = vector.load %arg0[%c1_40, %c0_41, %c0_42] : memref<11x8x32xf32, #tpu.memory_space<vmem>>, vector<1x8x32xf32>
    %87 = vector.shape_cast %86 : vector<1x8x32xf32> to vector<8x32xf32>
    %c2_i32_43 = arith.constant 2 : i32
    %88 = tpu.dynamic_rotate %84 by %c2_i32_43 dim 0 : vector<8x32xf32>, i32 -> vector<8x32xf32>
    %89 = arith.select %25, %87, %88 : vector<8x32xi1>, vector<8x32xf32>
    %90 = arith.truncf %89 : vector<8x32xf32> to vector<8x32xbf16>
    %91 = arith.truncf %84 : vector<8x32xf32> to vector<8x32xbf16>
    %c0_44 = arith.constant 0 : index
    %c0_45 = arith.constant 0 : index
    %c0_46 = arith.constant 0 : index
    %92 = vector.load %arg1[%c0_44, %c0_45, %c0_46] : memref<4x32x128xbf16, #tpu.memory_space<vmem>>, vector<1x32x128xbf16>
    %93 = vector.shape_cast %92 : vector<1x32x128xbf16> to vector<32x128xbf16>
    %cst_47 = arith.constant dense<0.000000e+00> : vector<8x128xf32>
    %94 = tpu.matmul %90, %93, %cst_47 {dimension_numbers = #tpu.dot_dimension_numbers<[1], [0], [0], [1], [0, 0, 1, 1], [], []>} : vector<8x32xbf16>, vector<32x128xbf16>, vector<8x128xf32> -> vector<8x128xf32>
    %c0_48 = arith.constant 0 : index
    %c0_49 = arith.constant 0 : index
    %c0_50 = arith.constant 0 : index
    %95 = vector.load %arg2[%c0_48, %c0_49, %c0_50] : memref<4x32x128xbf16, #tpu.memory_space<vmem>>, vector<1x32x128xbf16>
    %96 = vector.shape_cast %95 : vector<1x32x128xbf16> to vector<32x128xbf16>
    %cst_51 = arith.constant dense<0.000000e+00> : vector<8x128xf32>
    %97 = tpu.matmul %91, %96, %cst_51 {dimension_numbers = #tpu.dot_dimension_numbers<[1], [0], [0], [1], [0, 0, 1, 1], [], []>} : vector<8x32xbf16>, vector<32x128xbf16>, vector<8x128xf32> -> vector<8x128xf32>
    %98 = arith.addf %94, %97 : vector<8x128xf32>
    %c1_52 = arith.constant 1 : index
    %c0_53 = arith.constant 0 : index
    %c0_54 = arith.constant 0 : index
    %99 = vector.load %arg1[%c1_52, %c0_53, %c0_54] : memref<4x32x128xbf16, #tpu.memory_space<vmem>>, vector<1x32x128xbf16>
    %100 = vector.shape_cast %99 : vector<1x32x128xbf16> to vector<32x128xbf16>
    %cst_55 = arith.constant dense<0.000000e+00> : vector<8x128xf32>
    %101 = tpu.matmul %90, %100, %cst_55 {dimension_numbers = #tpu.dot_dimension_numbers<[1], [0], [0], [1], [0, 0, 1, 1], [], []>} : vector<8x32xbf16>, vector<32x128xbf16>, vector<8x128xf32> -> vector<8x128xf32>
    %c1_56 = arith.constant 1 : index
    %c0_57 = arith.constant 0 : index
    %c0_58 = arith.constant 0 : index
    %102 = vector.load %arg2[%c1_56, %c0_57, %c0_58] : memref<4x32x128xbf16, #tpu.memory_space<vmem>>, vector<1x32x128xbf16>
    %103 = vector.shape_cast %102 : vector<1x32x128xbf16> to vector<32x128xbf16>
    %cst_59 = arith.constant dense<0.000000e+00> : vector<8x128xf32>
    %104 = tpu.matmul %91, %103, %cst_59 {dimension_numbers = #tpu.dot_dimension_numbers<[1], [0], [0], [1], [0, 0, 1, 1], [], []>} : vector<8x32xbf16>, vector<32x128xbf16>, vector<8x128xf32> -> vector<8x128xf32>
    %105 = arith.addf %101, %104 : vector<8x128xf32>
    %106 = arith.select %12, %105, %98 : vector<8x128xi1>, vector<8x128xf32>
    %c2_60 = arith.constant 2 : index
    %c0_61 = arith.constant 0 : index
    %c0_62 = arith.constant 0 : index
    %107 = vector.load %arg1[%c2_60, %c0_61, %c0_62] : memref<4x32x128xbf16, #tpu.memory_space<vmem>>, vector<1x32x128xbf16>
    %108 = vector.shape_cast %107 : vector<1x32x128xbf16> to vector<32x128xbf16>
    %cst_63 = arith.constant dense<0.000000e+00> : vector<8x128xf32>
    %109 = tpu.matmul %90, %108, %cst_63 {dimension_numbers = #tpu.dot_dimension_numbers<[1], [0], [0], [1], [0, 0, 1, 1], [], []>} : vector<8x32xbf16>, vector<32x128xbf16>, vector<8x128xf32> -> vector<8x128xf32>
    %c2_64 = arith.constant 2 : index
    %c0_65 = arith.constant 0 : index
    %c0_66 = arith.constant 0 : index
    %110 = vector.load %arg2[%c2_64, %c0_65, %c0_66] : memref<4x32x128xbf16, #tpu.memory_space<vmem>>, vector<1x32x128xbf16>
    %111 = vector.shape_cast %110 : vector<1x32x128xbf16> to vector<32x128xbf16>
    %cst_67 = arith.constant dense<0.000000e+00> : vector<8x128xf32>
    %112 = tpu.matmul %91, %111, %cst_67 {dimension_numbers = #tpu.dot_dimension_numbers<[1], [0], [0], [1], [0, 0, 1, 1], [], []>} : vector<8x32xbf16>, vector<32x128xbf16>, vector<8x128xf32> -> vector<8x128xf32>
    %113 = arith.addf %109, %112 : vector<8x128xf32>
    %114 = arith.select %17, %113, %106 : vector<8x128xi1>, vector<8x128xf32>
    %c3_68 = arith.constant 3 : index
    %c0_69 = arith.constant 0 : index
    %c0_70 = arith.constant 0 : index
    %115 = vector.load %arg1[%c3_68, %c0_69, %c0_70] : memref<4x32x128xbf16, #tpu.memory_space<vmem>>, vector<1x32x128xbf16>
    %116 = vector.shape_cast %115 : vector<1x32x128xbf16> to vector<32x128xbf16>
    %cst_71 = arith.constant dense<0.000000e+00> : vector<8x128xf32>
    %117 = tpu.matmul %90, %116, %cst_71 {dimension_numbers = #tpu.dot_dimension_numbers<[1], [0], [0], [1], [0, 0, 1, 1], [], []>} : vector<8x32xbf16>, vector<32x128xbf16>, vector<8x128xf32> -> vector<8x128xf32>
    %c3_72 = arith.constant 3 : index
    %c0_73 = arith.constant 0 : index
    %c0_74 = arith.constant 0 : index
    %118 = vector.load %arg2[%c3_72, %c0_73, %c0_74] : memref<4x32x128xbf16, #tpu.memory_space<vmem>>, vector<1x32x128xbf16>
    %119 = vector.shape_cast %118 : vector<1x32x128xbf16> to vector<32x128xbf16>
    %cst_75 = arith.constant dense<0.000000e+00> : vector<8x128xf32>
    %120 = tpu.matmul %91, %119, %cst_75 {dimension_numbers = #tpu.dot_dimension_numbers<[1], [0], [0], [1], [0, 0, 1, 1], [], []>} : vector<8x32xbf16>, vector<32x128xbf16>, vector<8x128xf32> -> vector<8x128xf32>
    %121 = arith.addf %117, %120 : vector<8x128xf32>
    %122 = arith.select %22, %121, %114 : vector<8x128xi1>, vector<8x128xf32>
    %123 = arith.addf %122, %0 : vector<8x128xf32>
    %124 = math.tanh %123 : vector<8x128xf32>
    %125 = arith.negf %123 : vector<8x128xf32>
    %126 = math.exp %125 : vector<8x128xf32>
    %cst_76 = arith.constant 1.000000e+00 : f32
    %127 = vector.broadcast %cst_76 : f32 to vector<8x128xf32>
    %128 = arith.addf %127, %126 : vector<8x128xf32>
    %129 = arith.divf %127, %128 : vector<8x128xf32>
    %130 = arith.select %6, %124, %129 : vector<8x128xi1>, vector<8x128xf32>
    %131 = vector.extract_strided_slice %130 {offsets = [0, 0], sizes = [8, 32], strides = [1, 1]} : vector<8x128xf32> to vector<8x32xf32>
    %132 = vector.extract_strided_slice %130 {offsets = [0, 32], sizes = [8, 32], strides = [1, 1]} : vector<8x128xf32> to vector<8x32xf32>
    %133 = vector.extract_strided_slice %130 {offsets = [0, 64], sizes = [8, 32], strides = [1, 1]} : vector<8x128xf32> to vector<8x32xf32>
    %134 = vector.extract_strided_slice %130 {offsets = [0, 96], sizes = [8, 32], strides = [1, 1]} : vector<8x128xf32> to vector<8x32xf32>
    %135 = arith.mulf %132, %85 : vector<8x32xf32>
    %136 = arith.mulf %131, %133 : vector<8x32xf32>
    %137 = arith.addf %135, %136 : vector<8x32xf32>
    %138 = math.tanh %137 : vector<8x32xf32>
    %139 = arith.mulf %134, %138 : vector<8x32xf32>
    %c4_i32_77 = arith.constant 4 : i32
    %140 = vector.broadcast %c4_i32_77 : i32 to vector<8x32xi32>
    %141 = arith.cmpi slt, %23, %140 : vector<8x32xi32>
    %142 = arith.select %141, %139, %84 : vector<8x32xi1>, vector<8x32xf32>
    %143 = arith.select %141, %137, %85 : vector<8x32xi1>, vector<8x32xf32>
    %c2_78 = arith.constant 2 : index
    %c0_79 = arith.constant 0 : index
    %c0_80 = arith.constant 0 : index
    %144 = vector.load %arg0[%c2_78, %c0_79, %c0_80] : memref<11x8x32xf32, #tpu.memory_space<vmem>>, vector<1x8x32xf32>
    %145 = vector.shape_cast %144 : vector<1x8x32xf32> to vector<8x32xf32>
    %c2_i32_81 = arith.constant 2 : i32
    %146 = tpu.dynamic_rotate %142 by %c2_i32_81 dim 0 : vector<8x32xf32>, i32 -> vector<8x32xf32>
    %147 = arith.select %25, %145, %146 : vector<8x32xi1>, vector<8x32xf32>
    %148 = arith.truncf %147 : vector<8x32xf32> to vector<8x32xbf16>
    %149 = arith.truncf %142 : vector<8x32xf32> to vector<8x32xbf16>
    %c0_82 = arith.constant 0 : index
    %c0_83 = arith.constant 0 : index
    %c0_84 = arith.constant 0 : index
    %150 = vector.load %arg1[%c0_82, %c0_83, %c0_84] : memref<4x32x128xbf16, #tpu.memory_space<vmem>>, vector<1x32x128xbf16>
    %151 = vector.shape_cast %150 : vector<1x32x128xbf16> to vector<32x128xbf16>
    %cst_85 = arith.constant dense<0.000000e+00> : vector<8x128xf32>
    %152 = tpu.matmul %148, %151, %cst_85 {dimension_numbers = #tpu.dot_dimension_numbers<[1], [0], [0], [1], [0, 0, 1, 1], [], []>} : vector<8x32xbf16>, vector<32x128xbf16>, vector<8x128xf32> -> vector<8x128xf32>
    %c0_86 = arith.constant 0 : index
    %c0_87 = arith.constant 0 : index
    %c0_88 = arith.constant 0 : index
    %153 = vector.load %arg2[%c0_86, %c0_87, %c0_88] : memref<4x32x128xbf16, #tpu.memory_space<vmem>>, vector<1x32x128xbf16>
    %154 = vector.shape_cast %153 : vector<1x32x128xbf16> to vector<32x128xbf16>
    %cst_89 = arith.constant dense<0.000000e+00> : vector<8x128xf32>
    %155 = tpu.matmul %149, %154, %cst_89 {dimension_numbers = #tpu.dot_dimension_numbers<[1], [0], [0], [1], [0, 0, 1, 1], [], []>} : vector<8x32xbf16>, vector<32x128xbf16>, vector<8x128xf32> -> vector<8x128xf32>
    %156 = arith.addf %152, %155 : vector<8x128xf32>
    %c1_90 = arith.constant 1 : index
    %c0_91 = arith.constant 0 : index
    %c0_92 = arith.constant 0 : index
    %157 = vector.load %arg1[%c1_90, %c0_91, %c0_92] : memref<4x32x128xbf16, #tpu.memory_space<vmem>>, vector<1x32x128xbf16>
    %158 = vector.shape_cast %157 : vector<1x32x128xbf16> to vector<32x128xbf16>
    %cst_93 = arith.constant dense<0.000000e+00> : vector<8x128xf32>
    %159 = tpu.matmul %148, %158, %cst_93 {dimension_numbers = #tpu.dot_dimension_numbers<[1], [0], [0], [1], [0, 0, 1, 1], [], []>} : vector<8x32xbf16>, vector<32x128xbf16>, vector<8x128xf32> -> vector<8x128xf32>
    %c1_94 = arith.constant 1 : index
    %c0_95 = arith.constant 0 : index
    %c0_96 = arith.constant 0 : index
    %160 = vector.load %arg2[%c1_94, %c0_95, %c0_96] : memref<4x32x128xbf16, #tpu.memory_space<vmem>>, vector<1x32x128xbf16>
    %161 = vector.shape_cast %160 : vector<1x32x128xbf16> to vector<32x128xbf16>
    %cst_97 = arith.constant dense<0.000000e+00> : vector<8x128xf32>
    %162 = tpu.matmul %149, %161, %cst_97 {dimension_numbers = #tpu.dot_dimension_numbers<[1], [0], [0], [1], [0, 0, 1, 1], [], []>} : vector<8x32xbf16>, vector<32x128xbf16>, vector<8x128xf32> -> vector<8x128xf32>
    %163 = arith.addf %159, %162 : vector<8x128xf32>
    %164 = arith.select %12, %163, %156 : vector<8x128xi1>, vector<8x128xf32>
    %c2_98 = arith.constant 2 : index
    %c0_99 = arith.constant 0 : index
    %c0_100 = arith.constant 0 : index
    %165 = vector.load %arg1[%c2_98, %c0_99, %c0_100] : memref<4x32x128xbf16, #tpu.memory_space<vmem>>, vector<1x32x128xbf16>
    %166 = vector.shape_cast %165 : vector<1x32x128xbf16> to vector<32x128xbf16>
    %cst_101 = arith.constant dense<0.000000e+00> : vector<8x128xf32>
    %167 = tpu.matmul %148, %166, %cst_101 {dimension_numbers = #tpu.dot_dimension_numbers<[1], [0], [0], [1], [0, 0, 1, 1], [], []>} : vector<8x32xbf16>, vector<32x128xbf16>, vector<8x128xf32> -> vector<8x128xf32>
    %c2_102 = arith.constant 2 : index
    %c0_103 = arith.constant 0 : index
    %c0_104 = arith.constant 0 : index
    %168 = vector.load %arg2[%c2_102, %c0_103, %c0_104] : memref<4x32x128xbf16, #tpu.memory_space<vmem>>, vector<1x32x128xbf16>
    %169 = vector.shape_cast %168 : vector<1x32x128xbf16> to vector<32x128xbf16>
    %cst_105 = arith.constant dense<0.000000e+00> : vector<8x128xf32>
    %170 = tpu.matmul %149, %169, %cst_105 {dimension_numbers = #tpu.dot_dimension_numbers<[1], [0], [0], [1], [0, 0, 1, 1], [], []>} : vector<8x32xbf16>, vector<32x128xbf16>, vector<8x128xf32> -> vector<8x128xf32>
    %171 = arith.addf %167, %170 : vector<8x128xf32>
    %172 = arith.select %17, %171, %164 : vector<8x128xi1>, vector<8x128xf32>
    %c3_106 = arith.constant 3 : index
    %c0_107 = arith.constant 0 : index
    %c0_108 = arith.constant 0 : index
    %173 = vector.load %arg1[%c3_106, %c0_107, %c0_108] : memref<4x32x128xbf16, #tpu.memory_space<vmem>>, vector<1x32x128xbf16>
    %174 = vector.shape_cast %173 : vector<1x32x128xbf16> to vector<32x128xbf16>
    %cst_109 = arith.constant dense<0.000000e+00> : vector<8x128xf32>
    %175 = tpu.matmul %148, %174, %cst_109 {dimension_numbers = #tpu.dot_dimension_numbers<[1], [0], [0], [1], [0, 0, 1, 1], [], []>} : vector<8x32xbf16>, vector<32x128xbf16>, vector<8x128xf32> -> vector<8x128xf32>
    %c3_110 = arith.constant 3 : index
    %c0_111 = arith.constant 0 : index
    %c0_112 = arith.constant 0 : index
    %176 = vector.load %arg2[%c3_110, %c0_111, %c0_112] : memref<4x32x128xbf16, #tpu.memory_space<vmem>>, vector<1x32x128xbf16>
    %177 = vector.shape_cast %176 : vector<1x32x128xbf16> to vector<32x128xbf16>
    %cst_113 = arith.constant dense<0.000000e+00> : vector<8x128xf32>
    %178 = tpu.matmul %149, %177, %cst_113 {dimension_numbers = #tpu.dot_dimension_numbers<[1], [0], [0], [1], [0, 0, 1, 1], [], []>} : vector<8x32xbf16>, vector<32x128xbf16>, vector<8x128xf32> -> vector<8x128xf32>
    %179 = arith.addf %175, %178 : vector<8x128xf32>
    %180 = arith.select %22, %179, %172 : vector<8x128xi1>, vector<8x128xf32>
    %181 = arith.addf %180, %0 : vector<8x128xf32>
    %182 = math.tanh %181 : vector<8x128xf32>
    %183 = arith.negf %181 : vector<8x128xf32>
    %184 = math.exp %183 : vector<8x128xf32>
    %cst_114 = arith.constant 1.000000e+00 : f32
    %185 = vector.broadcast %cst_114 : f32 to vector<8x128xf32>
    %186 = arith.addf %185, %184 : vector<8x128xf32>
    %187 = arith.divf %185, %186 : vector<8x128xf32>
    %188 = arith.select %6, %182, %187 : vector<8x128xi1>, vector<8x128xf32>
    %189 = vector.extract_strided_slice %188 {offsets = [0, 0], sizes = [8, 32], strides = [1, 1]} : vector<8x128xf32> to vector<8x32xf32>
    %190 = vector.extract_strided_slice %188 {offsets = [0, 32], sizes = [8, 32], strides = [1, 1]} : vector<8x128xf32> to vector<8x32xf32>
    %191 = vector.extract_strided_slice %188 {offsets = [0, 64], sizes = [8, 32], strides = [1, 1]} : vector<8x128xf32> to vector<8x32xf32>
    %192 = vector.extract_strided_slice %188 {offsets = [0, 96], sizes = [8, 32], strides = [1, 1]} : vector<8x128xf32> to vector<8x32xf32>
    %193 = arith.mulf %190, %143 : vector<8x32xf32>
    %194 = arith.mulf %189, %191 : vector<8x32xf32>
    %195 = arith.addf %193, %194 : vector<8x32xf32>
    %196 = math.tanh %195 : vector<8x32xf32>
    %197 = arith.mulf %192, %196 : vector<8x32xf32>
    %c6_i32_115 = arith.constant 6 : i32
    %198 = vector.broadcast %c6_i32_115 : i32 to vector<8x32xi32>
    %199 = arith.cmpi slt, %23, %198 : vector<8x32xi32>
    %200 = arith.select %199, %197, %142 : vector<8x32xi1>, vector<8x32xf32>
    %201 = arith.select %199, %195, %143 : vector<8x32xi1>, vector<8x32xf32>
    %c3_116 = arith.constant 3 : index
    %c0_117 = arith.constant 0 : index
    %c0_118 = arith.constant 0 : index
    %202 = vector.load %arg0[%c3_116, %c0_117, %c0_118] : memref<11x8x32xf32, #tpu.memory_space<vmem>>, vector<1x8x32xf32>
    %203 = vector.shape_cast %202 : vector<1x8x32xf32> to vector<8x32xf32>
    %c2_i32_119 = arith.constant 2 : i32
    %204 = tpu.dynamic_rotate %200 by %c2_i32_119 dim 0 : vector<8x32xf32>, i32 -> vector<8x32xf32>
    %205 = arith.select %25, %203, %204 : vector<8x32xi1>, vector<8x32xf32>
    %206 = arith.truncf %205 : vector<8x32xf32> to vector<8x32xbf16>
    %207 = arith.truncf %200 : vector<8x32xf32> to vector<8x32xbf16>
    %c0_120 = arith.constant 0 : index
    %c0_121 = arith.constant 0 : index
    %c0_122 = arith.constant 0 : index
    %208 = vector.load %arg1[%c0_120, %c0_121, %c0_122] : memref<4x32x128xbf16, #tpu.memory_space<vmem>>, vector<1x32x128xbf16>
    %209 = vector.shape_cast %208 : vector<1x32x128xbf16> to vector<32x128xbf16>
    %cst_123 = arith.constant dense<0.000000e+00> : vector<8x128xf32>
    %210 = tpu.matmul %206, %209, %cst_123 {dimension_numbers = #tpu.dot_dimension_numbers<[1], [0], [0], [1], [0, 0, 1, 1], [], []>} : vector<8x32xbf16>, vector<32x128xbf16>, vector<8x128xf32> -> vector<8x128xf32>
    %c0_124 = arith.constant 0 : index
    %c0_125 = arith.constant 0 : index
    %c0_126 = arith.constant 0 : index
    %211 = vector.load %arg2[%c0_124, %c0_125, %c0_126] : memref<4x32x128xbf16, #tpu.memory_space<vmem>>, vector<1x32x128xbf16>
    %212 = vector.shape_cast %211 : vector<1x32x128xbf16> to vector<32x128xbf16>
    %cst_127 = arith.constant dense<0.000000e+00> : vector<8x128xf32>
    %213 = tpu.matmul %207, %212, %cst_127 {dimension_numbers = #tpu.dot_dimension_numbers<[1], [0], [0], [1], [0, 0, 1, 1], [], []>} : vector<8x32xbf16>, vector<32x128xbf16>, vector<8x128xf32> -> vector<8x128xf32>
    %214 = arith.addf %210, %213 : vector<8x128xf32>
    %c1_128 = arith.constant 1 : index
    %c0_129 = arith.constant 0 : index
    %c0_130 = arith.constant 0 : index
    %215 = vector.load %arg1[%c1_128, %c0_129, %c0_130] : memref<4x32x128xbf16, #tpu.memory_space<vmem>>, vector<1x32x128xbf16>
    %216 = vector.shape_cast %215 : vector<1x32x128xbf16> to vector<32x128xbf16>
    %cst_131 = arith.constant dense<0.000000e+00> : vector<8x128xf32>
    %217 = tpu.matmul %206, %216, %cst_131 {dimension_numbers = #tpu.dot_dimension_numbers<[1], [0], [0], [1], [0, 0, 1, 1], [], []>} : vector<8x32xbf16>, vector<32x128xbf16>, vector<8x128xf32> -> vector<8x128xf32>
    %c1_132 = arith.constant 1 : index
    %c0_133 = arith.constant 0 : index
    %c0_134 = arith.constant 0 : index
    %218 = vector.load %arg2[%c1_132, %c0_133, %c0_134] : memref<4x32x128xbf16, #tpu.memory_space<vmem>>, vector<1x32x128xbf16>
    %219 = vector.shape_cast %218 : vector<1x32x128xbf16> to vector<32x128xbf16>
    %cst_135 = arith.constant dense<0.000000e+00> : vector<8x128xf32>
    %220 = tpu.matmul %207, %219, %cst_135 {dimension_numbers = #tpu.dot_dimension_numbers<[1], [0], [0], [1], [0, 0, 1, 1], [], []>} : vector<8x32xbf16>, vector<32x128xbf16>, vector<8x128xf32> -> vector<8x128xf32>
    %221 = arith.addf %217, %220 : vector<8x128xf32>
    %222 = arith.select %12, %221, %214 : vector<8x128xi1>, vector<8x128xf32>
    %c2_136 = arith.constant 2 : index
    %c0_137 = arith.constant 0 : index
    %c0_138 = arith.constant 0 : index
    %223 = vector.load %arg1[%c2_136, %c0_137, %c0_138] : memref<4x32x128xbf16, #tpu.memory_space<vmem>>, vector<1x32x128xbf16>
    %224 = vector.shape_cast %223 : vector<1x32x128xbf16> to vector<32x128xbf16>
    %cst_139 = arith.constant dense<0.000000e+00> : vector<8x128xf32>
    %225 = tpu.matmul %206, %224, %cst_139 {dimension_numbers = #tpu.dot_dimension_numbers<[1], [0], [0], [1], [0, 0, 1, 1], [], []>} : vector<8x32xbf16>, vector<32x128xbf16>, vector<8x128xf32> -> vector<8x128xf32>
    %c2_140 = arith.constant 2 : index
    %c0_141 = arith.constant 0 : index
    %c0_142 = arith.constant 0 : index
    %226 = vector.load %arg2[%c2_140, %c0_141, %c0_142] : memref<4x32x128xbf16, #tpu.memory_space<vmem>>, vector<1x32x128xbf16>
    %227 = vector.shape_cast %226 : vector<1x32x128xbf16> to vector<32x128xbf16>
    %cst_143 = arith.constant dense<0.000000e+00> : vector<8x128xf32>
    %228 = tpu.matmul %207, %227, %cst_143 {dimension_numbers = #tpu.dot_dimension_numbers<[1], [0], [0], [1], [0, 0, 1, 1], [], []>} : vector<8x32xbf16>, vector<32x128xbf16>, vector<8x128xf32> -> vector<8x128xf32>
    %229 = arith.addf %225, %228 : vector<8x128xf32>
    %230 = arith.select %17, %229, %222 : vector<8x128xi1>, vector<8x128xf32>
    %c3_144 = arith.constant 3 : index
    %c0_145 = arith.constant 0 : index
    %c0_146 = arith.constant 0 : index
    %231 = vector.load %arg1[%c3_144, %c0_145, %c0_146] : memref<4x32x128xbf16, #tpu.memory_space<vmem>>, vector<1x32x128xbf16>
    %232 = vector.shape_cast %231 : vector<1x32x128xbf16> to vector<32x128xbf16>
    %cst_147 = arith.constant dense<0.000000e+00> : vector<8x128xf32>
    %233 = tpu.matmul %206, %232, %cst_147 {dimension_numbers = #tpu.dot_dimension_numbers<[1], [0], [0], [1], [0, 0, 1, 1], [], []>} : vector<8x32xbf16>, vector<32x128xbf16>, vector<8x128xf32> -> vector<8x128xf32>
    %c3_148 = arith.constant 3 : index
    %c0_149 = arith.constant 0 : index
    %c0_150 = arith.constant 0 : index
    %234 = vector.load %arg2[%c3_148, %c0_149, %c0_150] : memref<4x32x128xbf16, #tpu.memory_space<vmem>>, vector<1x32x128xbf16>
    %235 = vector.shape_cast %234 : vector<1x32x128xbf16> to vector<32x128xbf16>
    %cst_151 = arith.constant dense<0.000000e+00> : vector<8x128xf32>
    %236 = tpu.matmul %207, %235, %cst_151 {dimension_numbers = #tpu.dot_dimension_numbers<[1], [0], [0], [1], [0, 0, 1, 1], [], []>} : vector<8x32xbf16>, vector<32x128xbf16>, vector<8x128xf32> -> vector<8x128xf32>
    %237 = arith.addf %233, %236 : vector<8x128xf32>
    %238 = arith.select %22, %237, %230 : vector<8x128xi1>, vector<8x128xf32>
    %239 = arith.addf %238, %0 : vector<8x128xf32>
    %240 = math.tanh %239 : vector<8x128xf32>
    %241 = arith.negf %239 : vector<8x128xf32>
    %242 = math.exp %241 : vector<8x128xf32>
    %cst_152 = arith.constant 1.000000e+00 : f32
    %243 = vector.broadcast %cst_152 : f32 to vector<8x128xf32>
    %244 = arith.addf %243, %242 : vector<8x128xf32>
    %245 = arith.divf %243, %244 : vector<8x128xf32>
    %246 = arith.select %6, %240, %245 : vector<8x128xi1>, vector<8x128xf32>
    %247 = vector.extract_strided_slice %246 {offsets = [0, 0], sizes = [8, 32], strides = [1, 1]} : vector<8x128xf32> to vector<8x32xf32>
    %248 = vector.extract_strided_slice %246 {offsets = [0, 32], sizes = [8, 32], strides = [1, 1]} : vector<8x128xf32> to vector<8x32xf32>
    %249 = vector.extract_strided_slice %246 {offsets = [0, 64], sizes = [8, 32], strides = [1, 1]} : vector<8x128xf32> to vector<8x32xf32>
    %250 = vector.extract_strided_slice %246 {offsets = [0, 96], sizes = [8, 32], strides = [1, 1]} : vector<8x128xf32> to vector<8x32xf32>
    %251 = arith.mulf %248, %201 : vector<8x32xf32>
    %252 = arith.mulf %247, %249 : vector<8x32xf32>
    %253 = arith.addf %251, %252 : vector<8x32xf32>
    %254 = math.tanh %253 : vector<8x32xf32>
    %255 = arith.mulf %250, %254 : vector<8x32xf32>
    %c4 = arith.constant 4 : index
    %c0_153 = arith.constant 0 : index
    %c0_154 = arith.constant 0 : index
    %256 = vector.load %arg0[%c4, %c0_153, %c0_154] : memref<11x8x32xf32, #tpu.memory_space<vmem>>, vector<1x8x32xf32>
    %257 = vector.shape_cast %256 : vector<1x8x32xf32> to vector<8x32xf32>
    %c2_i32_155 = arith.constant 2 : i32
    %258 = tpu.dynamic_rotate %255 by %c2_i32_155 dim 0 : vector<8x32xf32>, i32 -> vector<8x32xf32>
    %259 = arith.select %25, %257, %258 : vector<8x32xi1>, vector<8x32xf32>
    %260 = arith.truncf %259 : vector<8x32xf32> to vector<8x32xbf16>
    %261 = arith.truncf %255 : vector<8x32xf32> to vector<8x32xbf16>
    %c0_156 = arith.constant 0 : index
    %c0_157 = arith.constant 0 : index
    %c0_158 = arith.constant 0 : index
    %262 = vector.load %arg1[%c0_156, %c0_157, %c0_158] : memref<4x32x128xbf16, #tpu.memory_space<vmem>>, vector<1x32x128xbf16>
    %263 = vector.shape_cast %262 : vector<1x32x128xbf16> to vector<32x128xbf16>
    %cst_159 = arith.constant dense<0.000000e+00> : vector<8x128xf32>
    %264 = tpu.matmul %260, %263, %cst_159 {dimension_numbers = #tpu.dot_dimension_numbers<[1], [0], [0], [1], [0, 0, 1, 1], [], []>} : vector<8x32xbf16>, vector<32x128xbf16>, vector<8x128xf32> -> vector<8x128xf32>
    %c0_160 = arith.constant 0 : index
    %c0_161 = arith.constant 0 : index
    %c0_162 = arith.constant 0 : index
    %265 = vector.load %arg2[%c0_160, %c0_161, %c0_162] : memref<4x32x128xbf16, #tpu.memory_space<vmem>>, vector<1x32x128xbf16>
    %266 = vector.shape_cast %265 : vector<1x32x128xbf16> to vector<32x128xbf16>
    %cst_163 = arith.constant dense<0.000000e+00> : vector<8x128xf32>
    %267 = tpu.matmul %261, %266, %cst_163 {dimension_numbers = #tpu.dot_dimension_numbers<[1], [0], [0], [1], [0, 0, 1, 1], [], []>} : vector<8x32xbf16>, vector<32x128xbf16>, vector<8x128xf32> -> vector<8x128xf32>
    %268 = arith.addf %264, %267 : vector<8x128xf32>
    %c1_164 = arith.constant 1 : index
    %c0_165 = arith.constant 0 : index
    %c0_166 = arith.constant 0 : index
    %269 = vector.load %arg1[%c1_164, %c0_165, %c0_166] : memref<4x32x128xbf16, #tpu.memory_space<vmem>>, vector<1x32x128xbf16>
    %270 = vector.shape_cast %269 : vector<1x32x128xbf16> to vector<32x128xbf16>
    %cst_167 = arith.constant dense<0.000000e+00> : vector<8x128xf32>
    %271 = tpu.matmul %260, %270, %cst_167 {dimension_numbers = #tpu.dot_dimension_numbers<[1], [0], [0], [1], [0, 0, 1, 1], [], []>} : vector<8x32xbf16>, vector<32x128xbf16>, vector<8x128xf32> -> vector<8x128xf32>
    %c1_168 = arith.constant 1 : index
    %c0_169 = arith.constant 0 : index
    %c0_170 = arith.constant 0 : index
    %272 = vector.load %arg2[%c1_168, %c0_169, %c0_170] : memref<4x32x128xbf16, #tpu.memory_space<vmem>>, vector<1x32x128xbf16>
    %273 = vector.shape_cast %272 : vector<1x32x128xbf16> to vector<32x128xbf16>
    %cst_171 = arith.constant dense<0.000000e+00> : vector<8x128xf32>
    %274 = tpu.matmul %261, %273, %cst_171 {dimension_numbers = #tpu.dot_dimension_numbers<[1], [0], [0], [1], [0, 0, 1, 1], [], []>} : vector<8x32xbf16>, vector<32x128xbf16>, vector<8x128xf32> -> vector<8x128xf32>
    %275 = arith.addf %271, %274 : vector<8x128xf32>
    %276 = arith.select %12, %275, %268 : vector<8x128xi1>, vector<8x128xf32>
    %c2_172 = arith.constant 2 : index
    %c0_173 = arith.constant 0 : index
    %c0_174 = arith.constant 0 : index
    %277 = vector.load %arg1[%c2_172, %c0_173, %c0_174] : memref<4x32x128xbf16, #tpu.memory_space<vmem>>, vector<1x32x128xbf16>
    %278 = vector.shape_cast %277 : vector<1x32x128xbf16> to vector<32x128xbf16>
    %cst_175 = arith.constant dense<0.000000e+00> : vector<8x128xf32>
    %279 = tpu.matmul %260, %278, %cst_175 {dimension_numbers = #tpu.dot_dimension_numbers<[1], [0], [0], [1], [0, 0, 1, 1], [], []>} : vector<8x32xbf16>, vector<32x128xbf16>, vector<8x128xf32> -> vector<8x128xf32>
    %c2_176 = arith.constant 2 : index
    %c0_177 = arith.constant 0 : index
    %c0_178 = arith.constant 0 : index
    %280 = vector.load %arg2[%c2_176, %c0_177, %c0_178] : memref<4x32x128xbf16, #tpu.memory_space<vmem>>, vector<1x32x128xbf16>
    %281 = vector.shape_cast %280 : vector<1x32x128xbf16> to vector<32x128xbf16>
    %cst_179 = arith.constant dense<0.000000e+00> : vector<8x128xf32>
    %282 = tpu.matmul %261, %281, %cst_179 {dimension_numbers = #tpu.dot_dimension_numbers<[1], [0], [0], [1], [0, 0, 1, 1], [], []>} : vector<8x32xbf16>, vector<32x128xbf16>, vector<8x128xf32> -> vector<8x128xf32>
    %283 = arith.addf %279, %282 : vector<8x128xf32>
    %284 = arith.select %17, %283, %276 : vector<8x128xi1>, vector<8x128xf32>
    %c3_180 = arith.constant 3 : index
    %c0_181 = arith.constant 0 : index
    %c0_182 = arith.constant 0 : index
    %285 = vector.load %arg1[%c3_180, %c0_181, %c0_182] : memref<4x32x128xbf16, #tpu.memory_space<vmem>>, vector<1x32x128xbf16>
    %286 = vector.shape_cast %285 : vector<1x32x128xbf16> to vector<32x128xbf16>
    %cst_183 = arith.constant dense<0.000000e+00> : vector<8x128xf32>
    %287 = tpu.matmul %260, %286, %cst_183 {dimension_numbers = #tpu.dot_dimension_numbers<[1], [0], [0], [1], [0, 0, 1, 1], [], []>} : vector<8x32xbf16>, vector<32x128xbf16>, vector<8x128xf32> -> vector<8x128xf32>
    %c3_184 = arith.constant 3 : index
    %c0_185 = arith.constant 0 : index
    %c0_186 = arith.constant 0 : index
    %288 = vector.load %arg2[%c3_184, %c0_185, %c0_186] : memref<4x32x128xbf16, #tpu.memory_space<vmem>>, vector<1x32x128xbf16>
    %289 = vector.shape_cast %288 : vector<1x32x128xbf16> to vector<32x128xbf16>
    %cst_187 = arith.constant dense<0.000000e+00> : vector<8x128xf32>
    %290 = tpu.matmul %261, %289, %cst_187 {dimension_numbers = #tpu.dot_dimension_numbers<[1], [0], [0], [1], [0, 0, 1, 1], [], []>} : vector<8x32xbf16>, vector<32x128xbf16>, vector<8x128xf32> -> vector<8x128xf32>
    %291 = arith.addf %287, %290 : vector<8x128xf32>
    %292 = arith.select %22, %291, %284 : vector<8x128xi1>, vector<8x128xf32>
    %293 = arith.addf %292, %0 : vector<8x128xf32>
    %294 = math.tanh %293 : vector<8x128xf32>
    %295 = arith.negf %293 : vector<8x128xf32>
    %296 = math.exp %295 : vector<8x128xf32>
    %cst_188 = arith.constant 1.000000e+00 : f32
    %297 = vector.broadcast %cst_188 : f32 to vector<8x128xf32>
    %298 = arith.addf %297, %296 : vector<8x128xf32>
    %299 = arith.divf %297, %298 : vector<8x128xf32>
    %300 = arith.select %6, %294, %299 : vector<8x128xi1>, vector<8x128xf32>
    %301 = vector.extract_strided_slice %300 {offsets = [0, 0], sizes = [8, 32], strides = [1, 1]} : vector<8x128xf32> to vector<8x32xf32>
    %302 = vector.extract_strided_slice %300 {offsets = [0, 32], sizes = [8, 32], strides = [1, 1]} : vector<8x128xf32> to vector<8x32xf32>
    %303 = vector.extract_strided_slice %300 {offsets = [0, 64], sizes = [8, 32], strides = [1, 1]} : vector<8x128xf32> to vector<8x32xf32>
    %304 = vector.extract_strided_slice %300 {offsets = [0, 96], sizes = [8, 32], strides = [1, 1]} : vector<8x128xf32> to vector<8x32xf32>
    %305 = arith.mulf %302, %253 : vector<8x32xf32>
    %306 = arith.mulf %301, %303 : vector<8x32xf32>
    %307 = arith.addf %305, %306 : vector<8x32xf32>
    %308 = math.tanh %307 : vector<8x32xf32>
    %309 = arith.mulf %304, %308 : vector<8x32xf32>
    %c5 = arith.constant 5 : index
    %c0_189 = arith.constant 0 : index
    %c0_190 = arith.constant 0 : index
    %310 = vector.load %arg0[%c5, %c0_189, %c0_190] : memref<11x8x32xf32, #tpu.memory_space<vmem>>, vector<1x8x32xf32>
    %311 = vector.shape_cast %310 : vector<1x8x32xf32> to vector<8x32xf32>
    %c2_i32_191 = arith.constant 2 : i32
    %312 = tpu.dynamic_rotate %309 by %c2_i32_191 dim 0 : vector<8x32xf32>, i32 -> vector<8x32xf32>
    %313 = arith.select %25, %311, %312 : vector<8x32xi1>, vector<8x32xf32>
    %314 = arith.truncf %313 : vector<8x32xf32> to vector<8x32xbf16>
    %315 = arith.truncf %309 : vector<8x32xf32> to vector<8x32xbf16>
    %c0_192 = arith.constant 0 : index
    %c0_193 = arith.constant 0 : index
    %c0_194 = arith.constant 0 : index
    %316 = vector.load %arg1[%c0_192, %c0_193, %c0_194] : memref<4x32x128xbf16, #tpu.memory_space<vmem>>, vector<1x32x128xbf16>
    %317 = vector.shape_cast %316 : vector<1x32x128xbf16> to vector<32x128xbf16>
    %cst_195 = arith.constant dense<0.000000e+00> : vector<8x128xf32>
    %318 = tpu.matmul %314, %317, %cst_195 {dimension_numbers = #tpu.dot_dimension_numbers<[1], [0], [0], [1], [0, 0, 1, 1], [], []>} : vector<8x32xbf16>, vector<32x128xbf16>, vector<8x128xf32> -> vector<8x128xf32>
    %c0_196 = arith.constant 0 : index
    %c0_197 = arith.constant 0 : index
    %c0_198 = arith.constant 0 : index
    %319 = vector.load %arg2[%c0_196, %c0_197, %c0_198] : memref<4x32x128xbf16, #tpu.memory_space<vmem>>, vector<1x32x128xbf16>
    %320 = vector.shape_cast %319 : vector<1x32x128xbf16> to vector<32x128xbf16>
    %cst_199 = arith.constant dense<0.000000e+00> : vector<8x128xf32>
    %321 = tpu.matmul %315, %320, %cst_199 {dimension_numbers = #tpu.dot_dimension_numbers<[1], [0], [0], [1], [0, 0, 1, 1], [], []>} : vector<8x32xbf16>, vector<32x128xbf16>, vector<8x128xf32> -> vector<8x128xf32>
    %322 = arith.addf %318, %321 : vector<8x128xf32>
    %c1_200 = arith.constant 1 : index
    %c0_201 = arith.constant 0 : index
    %c0_202 = arith.constant 0 : index
    %323 = vector.load %arg1[%c1_200, %c0_201, %c0_202] : memref<4x32x128xbf16, #tpu.memory_space<vmem>>, vector<1x32x128xbf16>
    %324 = vector.shape_cast %323 : vector<1x32x128xbf16> to vector<32x128xbf16>
    %cst_203 = arith.constant dense<0.000000e+00> : vector<8x128xf32>
    %325 = tpu.matmul %314, %324, %cst_203 {dimension_numbers = #tpu.dot_dimension_numbers<[1], [0], [0], [1], [0, 0, 1, 1], [], []>} : vector<8x32xbf16>, vector<32x128xbf16>, vector<8x128xf32> -> vector<8x128xf32>
    %c1_204 = arith.constant 1 : index
    %c0_205 = arith.constant 0 : index
    %c0_206 = arith.constant 0 : index
    %326 = vector.load %arg2[%c1_204, %c0_205, %c0_206] : memref<4x32x128xbf16, #tpu.memory_space<vmem>>, vector<1x32x128xbf16>
    %327 = vector.shape_cast %326 : vector<1x32x128xbf16> to vector<32x128xbf16>
    %cst_207 = arith.constant dense<0.000000e+00> : vector<8x128xf32>
    %328 = tpu.matmul %315, %327, %cst_207 {dimension_numbers = #tpu.dot_dimension_numbers<[1], [0], [0], [1], [0, 0, 1, 1], [], []>} : vector<8x32xbf16>, vector<32x128xbf16>, vector<8x128xf32> -> vector<8x128xf32>
    %329 = arith.addf %325, %328 : vector<8x128xf32>
    %330 = arith.select %12, %329, %322 : vector<8x128xi1>, vector<8x128xf32>
    %c2_208 = arith.constant 2 : index
    %c0_209 = arith.constant 0 : index
    %c0_210 = arith.constant 0 : index
    %331 = vector.load %arg1[%c2_208, %c0_209, %c0_210] : memref<4x32x128xbf16, #tpu.memory_space<vmem>>, vector<1x32x128xbf16>
    %332 = vector.shape_cast %331 : vector<1x32x128xbf16> to vector<32x128xbf16>
    %cst_211 = arith.constant dense<0.000000e+00> : vector<8x128xf32>
    %333 = tpu.matmul %314, %332, %cst_211 {dimension_numbers = #tpu.dot_dimension_numbers<[1], [0], [0], [1], [0, 0, 1, 1], [], []>} : vector<8x32xbf16>, vector<32x128xbf16>, vector<8x128xf32> -> vector<8x128xf32>
    %c2_212 = arith.constant 2 : index
    %c0_213 = arith.constant 0 : index
    %c0_214 = arith.constant 0 : index
    %334 = vector.load %arg2[%c2_212, %c0_213, %c0_214] : memref<4x32x128xbf16, #tpu.memory_space<vmem>>, vector<1x32x128xbf16>
    %335 = vector.shape_cast %334 : vector<1x32x128xbf16> to vector<32x128xbf16>
    %cst_215 = arith.constant dense<0.000000e+00> : vector<8x128xf32>
    %336 = tpu.matmul %315, %335, %cst_215 {dimension_numbers = #tpu.dot_dimension_numbers<[1], [0], [0], [1], [0, 0, 1, 1], [], []>} : vector<8x32xbf16>, vector<32x128xbf16>, vector<8x128xf32> -> vector<8x128xf32>
    %337 = arith.addf %333, %336 : vector<8x128xf32>
    %338 = arith.select %17, %337, %330 : vector<8x128xi1>, vector<8x128xf32>
    %c3_216 = arith.constant 3 : index
    %c0_217 = arith.constant 0 : index
    %c0_218 = arith.constant 0 : index
    %339 = vector.load %arg1[%c3_216, %c0_217, %c0_218] : memref<4x32x128xbf16, #tpu.memory_space<vmem>>, vector<1x32x128xbf16>
    %340 = vector.shape_cast %339 : vector<1x32x128xbf16> to vector<32x128xbf16>
    %cst_219 = arith.constant dense<0.000000e+00> : vector<8x128xf32>
    %341 = tpu.matmul %314, %340, %cst_219 {dimension_numbers = #tpu.dot_dimension_numbers<[1], [0], [0], [1], [0, 0, 1, 1], [], []>} : vector<8x32xbf16>, vector<32x128xbf16>, vector<8x128xf32> -> vector<8x128xf32>
    %c3_220 = arith.constant 3 : index
    %c0_221 = arith.constant 0 : index
    %c0_222 = arith.constant 0 : index
    %342 = vector.load %arg2[%c3_220, %c0_221, %c0_222] : memref<4x32x128xbf16, #tpu.memory_space<vmem>>, vector<1x32x128xbf16>
    %343 = vector.shape_cast %342 : vector<1x32x128xbf16> to vector<32x128xbf16>
    %cst_223 = arith.constant dense<0.000000e+00> : vector<8x128xf32>
    %344 = tpu.matmul %315, %343, %cst_223 {dimension_numbers = #tpu.dot_dimension_numbers<[1], [0], [0], [1], [0, 0, 1, 1], [], []>} : vector<8x32xbf16>, vector<32x128xbf16>, vector<8x128xf32> -> vector<8x128xf32>
    %345 = arith.addf %341, %344 : vector<8x128xf32>
    %346 = arith.select %22, %345, %338 : vector<8x128xi1>, vector<8x128xf32>
    %347 = arith.addf %346, %0 : vector<8x128xf32>
    %348 = math.tanh %347 : vector<8x128xf32>
    %349 = arith.negf %347 : vector<8x128xf32>
    %350 = math.exp %349 : vector<8x128xf32>
    %cst_224 = arith.constant 1.000000e+00 : f32
    %351 = vector.broadcast %cst_224 : f32 to vector<8x128xf32>
    %352 = arith.addf %351, %350 : vector<8x128xf32>
    %353 = arith.divf %351, %352 : vector<8x128xf32>
    %354 = arith.select %6, %348, %353 : vector<8x128xi1>, vector<8x128xf32>
    %355 = vector.extract_strided_slice %354 {offsets = [0, 0], sizes = [8, 32], strides = [1, 1]} : vector<8x128xf32> to vector<8x32xf32>
    %356 = vector.extract_strided_slice %354 {offsets = [0, 32], sizes = [8, 32], strides = [1, 1]} : vector<8x128xf32> to vector<8x32xf32>
    %357 = vector.extract_strided_slice %354 {offsets = [0, 64], sizes = [8, 32], strides = [1, 1]} : vector<8x128xf32> to vector<8x32xf32>
    %358 = vector.extract_strided_slice %354 {offsets = [0, 96], sizes = [8, 32], strides = [1, 1]} : vector<8x128xf32> to vector<8x32xf32>
    %359 = arith.mulf %356, %307 : vector<8x32xf32>
    %360 = arith.mulf %355, %357 : vector<8x32xf32>
    %361 = arith.addf %359, %360 : vector<8x32xf32>
    %362 = math.tanh %361 : vector<8x32xf32>
    %363 = arith.mulf %358, %362 : vector<8x32xf32>
    %c6 = arith.constant 6 : index
    %c0_225 = arith.constant 0 : index
    %c0_226 = arith.constant 0 : index
    %364 = vector.load %arg0[%c6, %c0_225, %c0_226] : memref<11x8x32xf32, #tpu.memory_space<vmem>>, vector<1x8x32xf32>
    %365 = vector.shape_cast %364 : vector<1x8x32xf32> to vector<8x32xf32>
    %c2_i32_227 = arith.constant 2 : i32
    %366 = tpu.dynamic_rotate %363 by %c2_i32_227 dim 0 : vector<8x32xf32>, i32 -> vector<8x32xf32>
    %367 = arith.select %25, %365, %366 : vector<8x32xi1>, vector<8x32xf32>
    %368 = arith.truncf %367 : vector<8x32xf32> to vector<8x32xbf16>
    %369 = arith.truncf %363 : vector<8x32xf32> to vector<8x32xbf16>
    %c0_228 = arith.constant 0 : index
    %c0_229 = arith.constant 0 : index
    %c0_230 = arith.constant 0 : index
    %370 = vector.load %arg1[%c0_228, %c0_229, %c0_230] : memref<4x32x128xbf16, #tpu.memory_space<vmem>>, vector<1x32x128xbf16>
    %371 = vector.shape_cast %370 : vector<1x32x128xbf16> to vector<32x128xbf16>
    %cst_231 = arith.constant dense<0.000000e+00> : vector<8x128xf32>
    %372 = tpu.matmul %368, %371, %cst_231 {dimension_numbers = #tpu.dot_dimension_numbers<[1], [0], [0], [1], [0, 0, 1, 1], [], []>} : vector<8x32xbf16>, vector<32x128xbf16>, vector<8x128xf32> -> vector<8x128xf32>
    %c0_232 = arith.constant 0 : index
    %c0_233 = arith.constant 0 : index
    %c0_234 = arith.constant 0 : index
    %373 = vector.load %arg2[%c0_232, %c0_233, %c0_234] : memref<4x32x128xbf16, #tpu.memory_space<vmem>>, vector<1x32x128xbf16>
    %374 = vector.shape_cast %373 : vector<1x32x128xbf16> to vector<32x128xbf16>
    %cst_235 = arith.constant dense<0.000000e+00> : vector<8x128xf32>
    %375 = tpu.matmul %369, %374, %cst_235 {dimension_numbers = #tpu.dot_dimension_numbers<[1], [0], [0], [1], [0, 0, 1, 1], [], []>} : vector<8x32xbf16>, vector<32x128xbf16>, vector<8x128xf32> -> vector<8x128xf32>
    %376 = arith.addf %372, %375 : vector<8x128xf32>
    %c1_236 = arith.constant 1 : index
    %c0_237 = arith.constant 0 : index
    %c0_238 = arith.constant 0 : index
    %377 = vector.load %arg1[%c1_236, %c0_237, %c0_238] : memref<4x32x128xbf16, #tpu.memory_space<vmem>>, vector<1x32x128xbf16>
    %378 = vector.shape_cast %377 : vector<1x32x128xbf16> to vector<32x128xbf16>
    %cst_239 = arith.constant dense<0.000000e+00> : vector<8x128xf32>
    %379 = tpu.matmul %368, %378, %cst_239 {dimension_numbers = #tpu.dot_dimension_numbers<[1], [0], [0], [1], [0, 0, 1, 1], [], []>} : vector<8x32xbf16>, vector<32x128xbf16>, vector<8x128xf32> -> vector<8x128xf32>
    %c1_240 = arith.constant 1 : index
    %c0_241 = arith.constant 0 : index
    %c0_242 = arith.constant 0 : index
    %380 = vector.load %arg2[%c1_240, %c0_241, %c0_242] : memref<4x32x128xbf16, #tpu.memory_space<vmem>>, vector<1x32x128xbf16>
    %381 = vector.shape_cast %380 : vector<1x32x128xbf16> to vector<32x128xbf16>
    %cst_243 = arith.constant dense<0.000000e+00> : vector<8x128xf32>
    %382 = tpu.matmul %369, %381, %cst_243 {dimension_numbers = #tpu.dot_dimension_numbers<[1], [0], [0], [1], [0, 0, 1, 1], [], []>} : vector<8x32xbf16>, vector<32x128xbf16>, vector<8x128xf32> -> vector<8x128xf32>
    %383 = arith.addf %379, %382 : vector<8x128xf32>
    %384 = arith.select %12, %383, %376 : vector<8x128xi1>, vector<8x128xf32>
    %c2_244 = arith.constant 2 : index
    %c0_245 = arith.constant 0 : index
    %c0_246 = arith.constant 0 : index
    %385 = vector.load %arg1[%c2_244, %c0_245, %c0_246] : memref<4x32x128xbf16, #tpu.memory_space<vmem>>, vector<1x32x128xbf16>
    %386 = vector.shape_cast %385 : vector<1x32x128xbf16> to vector<32x128xbf16>
    %cst_247 = arith.constant dense<0.000000e+00> : vector<8x128xf32>
    %387 = tpu.matmul %368, %386, %cst_247 {dimension_numbers = #tpu.dot_dimension_numbers<[1], [0], [0], [1], [0, 0, 1, 1], [], []>} : vector<8x32xbf16>, vector<32x128xbf16>, vector<8x128xf32> -> vector<8x128xf32>
    %c2_248 = arith.constant 2 : index
    %c0_249 = arith.constant 0 : index
    %c0_250 = arith.constant 0 : index
    %388 = vector.load %arg2[%c2_248, %c0_249, %c0_250] : memref<4x32x128xbf16, #tpu.memory_space<vmem>>, vector<1x32x128xbf16>
    %389 = vector.shape_cast %388 : vector<1x32x128xbf16> to vector<32x128xbf16>
    %cst_251 = arith.constant dense<0.000000e+00> : vector<8x128xf32>
    %390 = tpu.matmul %369, %389, %cst_251 {dimension_numbers = #tpu.dot_dimension_numbers<[1], [0], [0], [1], [0, 0, 1, 1], [], []>} : vector<8x32xbf16>, vector<32x128xbf16>, vector<8x128xf32> -> vector<8x128xf32>
    %391 = arith.addf %387, %390 : vector<8x128xf32>
    %392 = arith.select %17, %391, %384 : vector<8x128xi1>, vector<8x128xf32>
    %c3_252 = arith.constant 3 : index
    %c0_253 = arith.constant 0 : index
    %c0_254 = arith.constant 0 : index
    %393 = vector.load %arg1[%c3_252, %c0_253, %c0_254] : memref<4x32x128xbf16, #tpu.memory_space<vmem>>, vector<1x32x128xbf16>
    %394 = vector.shape_cast %393 : vector<1x32x128xbf16> to vector<32x128xbf16>
    %cst_255 = arith.constant dense<0.000000e+00> : vector<8x128xf32>
    %395 = tpu.matmul %368, %394, %cst_255 {dimension_numbers = #tpu.dot_dimension_numbers<[1], [0], [0], [1], [0, 0, 1, 1], [], []>} : vector<8x32xbf16>, vector<32x128xbf16>, vector<8x128xf32> -> vector<8x128xf32>
    %c3_256 = arith.constant 3 : index
    %c0_257 = arith.constant 0 : index
    %c0_258 = arith.constant 0 : index
    %396 = vector.load %arg2[%c3_256, %c0_257, %c0_258] : memref<4x32x128xbf16, #tpu.memory_space<vmem>>, vector<1x32x128xbf16>
    %397 = vector.shape_cast %396 : vector<1x32x128xbf16> to vector<32x128xbf16>
    %cst_259 = arith.constant dense<0.000000e+00> : vector<8x128xf32>
    %398 = tpu.matmul %369, %397, %cst_259 {dimension_numbers = #tpu.dot_dimension_numbers<[1], [0], [0], [1], [0, 0, 1, 1], [], []>} : vector<8x32xbf16>, vector<32x128xbf16>, vector<8x128xf32> -> vector<8x128xf32>
    %399 = arith.addf %395, %398 : vector<8x128xf32>
    %400 = arith.select %22, %399, %392 : vector<8x128xi1>, vector<8x128xf32>
    %401 = arith.addf %400, %0 : vector<8x128xf32>
    %402 = math.tanh %401 : vector<8x128xf32>
    %403 = arith.negf %401 : vector<8x128xf32>
    %404 = math.exp %403 : vector<8x128xf32>
    %cst_260 = arith.constant 1.000000e+00 : f32
    %405 = vector.broadcast %cst_260 : f32 to vector<8x128xf32>
    %406 = arith.addf %405, %404 : vector<8x128xf32>
    %407 = arith.divf %405, %406 : vector<8x128xf32>
    %408 = arith.select %6, %402, %407 : vector<8x128xi1>, vector<8x128xf32>
    %409 = vector.extract_strided_slice %408 {offsets = [0, 0], sizes = [8, 32], strides = [1, 1]} : vector<8x128xf32> to vector<8x32xf32>
    %410 = vector.extract_strided_slice %408 {offsets = [0, 32], sizes = [8, 32], strides = [1, 1]} : vector<8x128xf32> to vector<8x32xf32>
    %411 = vector.extract_strided_slice %408 {offsets = [0, 64], sizes = [8, 32], strides = [1, 1]} : vector<8x128xf32> to vector<8x32xf32>
    %412 = vector.extract_strided_slice %408 {offsets = [0, 96], sizes = [8, 32], strides = [1, 1]} : vector<8x128xf32> to vector<8x32xf32>
    %413 = arith.mulf %410, %361 : vector<8x32xf32>
    %414 = arith.mulf %409, %411 : vector<8x32xf32>
    %415 = arith.addf %413, %414 : vector<8x32xf32>
    %416 = math.tanh %415 : vector<8x32xf32>
    %417 = arith.mulf %412, %416 : vector<8x32xf32>
    %c7 = arith.constant 7 : index
    %c0_261 = arith.constant 0 : index
    %c0_262 = arith.constant 0 : index
    %418 = vector.load %arg0[%c7, %c0_261, %c0_262] : memref<11x8x32xf32, #tpu.memory_space<vmem>>, vector<1x8x32xf32>
    %419 = vector.shape_cast %418 : vector<1x8x32xf32> to vector<8x32xf32>
    %c2_i32_263 = arith.constant 2 : i32
    %420 = tpu.dynamic_rotate %417 by %c2_i32_263 dim 0 : vector<8x32xf32>, i32 -> vector<8x32xf32>
    %421 = arith.select %25, %419, %420 : vector<8x32xi1>, vector<8x32xf32>
    %422 = arith.truncf %421 : vector<8x32xf32> to vector<8x32xbf16>
    %423 = arith.truncf %417 : vector<8x32xf32> to vector<8x32xbf16>
    %c0_264 = arith.constant 0 : index
    %c0_265 = arith.constant 0 : index
    %c0_266 = arith.constant 0 : index
    %424 = vector.load %arg1[%c0_264, %c0_265, %c0_266] : memref<4x32x128xbf16, #tpu.memory_space<vmem>>, vector<1x32x128xbf16>
    %425 = vector.shape_cast %424 : vector<1x32x128xbf16> to vector<32x128xbf16>
    %cst_267 = arith.constant dense<0.000000e+00> : vector<8x128xf32>
    %426 = tpu.matmul %422, %425, %cst_267 {dimension_numbers = #tpu.dot_dimension_numbers<[1], [0], [0], [1], [0, 0, 1, 1], [], []>} : vector<8x32xbf16>, vector<32x128xbf16>, vector<8x128xf32> -> vector<8x128xf32>
    %c0_268 = arith.constant 0 : index
    %c0_269 = arith.constant 0 : index
    %c0_270 = arith.constant 0 : index
    %427 = vector.load %arg2[%c0_268, %c0_269, %c0_270] : memref<4x32x128xbf16, #tpu.memory_space<vmem>>, vector<1x32x128xbf16>
    %428 = vector.shape_cast %427 : vector<1x32x128xbf16> to vector<32x128xbf16>
    %cst_271 = arith.constant dense<0.000000e+00> : vector<8x128xf32>
    %429 = tpu.matmul %423, %428, %cst_271 {dimension_numbers = #tpu.dot_dimension_numbers<[1], [0], [0], [1], [0, 0, 1, 1], [], []>} : vector<8x32xbf16>, vector<32x128xbf16>, vector<8x128xf32> -> vector<8x128xf32>
    %430 = arith.addf %426, %429 : vector<8x128xf32>
    %c1_272 = arith.constant 1 : index
    %c0_273 = arith.constant 0 : index
    %c0_274 = arith.constant 0 : index
    %431 = vector.load %arg1[%c1_272, %c0_273, %c0_274] : memref<4x32x128xbf16, #tpu.memory_space<vmem>>, vector<1x32x128xbf16>
    %432 = vector.shape_cast %431 : vector<1x32x128xbf16> to vector<32x128xbf16>
    %cst_275 = arith.constant dense<0.000000e+00> : vector<8x128xf32>
    %433 = tpu.matmul %422, %432, %cst_275 {dimension_numbers = #tpu.dot_dimension_numbers<[1], [0], [0], [1], [0, 0, 1, 1], [], []>} : vector<8x32xbf16>, vector<32x128xbf16>, vector<8x128xf32> -> vector<8x128xf32>
    %c1_276 = arith.constant 1 : index
    %c0_277 = arith.constant 0 : index
    %c0_278 = arith.constant 0 : index
    %434 = vector.load %arg2[%c1_276, %c0_277, %c0_278] : memref<4x32x128xbf16, #tpu.memory_space<vmem>>, vector<1x32x128xbf16>
    %435 = vector.shape_cast %434 : vector<1x32x128xbf16> to vector<32x128xbf16>
    %cst_279 = arith.constant dense<0.000000e+00> : vector<8x128xf32>
    %436 = tpu.matmul %423, %435, %cst_279 {dimension_numbers = #tpu.dot_dimension_numbers<[1], [0], [0], [1], [0, 0, 1, 1], [], []>} : vector<8x32xbf16>, vector<32x128xbf16>, vector<8x128xf32> -> vector<8x128xf32>
    %437 = arith.addf %433, %436 : vector<8x128xf32>
    %438 = arith.select %12, %437, %430 : vector<8x128xi1>, vector<8x128xf32>
    %c2_280 = arith.constant 2 : index
    %c0_281 = arith.constant 0 : index
    %c0_282 = arith.constant 0 : index
    %439 = vector.load %arg1[%c2_280, %c0_281, %c0_282] : memref<4x32x128xbf16, #tpu.memory_space<vmem>>, vector<1x32x128xbf16>
    %440 = vector.shape_cast %439 : vector<1x32x128xbf16> to vector<32x128xbf16>
    %cst_283 = arith.constant dense<0.000000e+00> : vector<8x128xf32>
    %441 = tpu.matmul %422, %440, %cst_283 {dimension_numbers = #tpu.dot_dimension_numbers<[1], [0], [0], [1], [0, 0, 1, 1], [], []>} : vector<8x32xbf16>, vector<32x128xbf16>, vector<8x128xf32> -> vector<8x128xf32>
    %c2_284 = arith.constant 2 : index
    %c0_285 = arith.constant 0 : index
    %c0_286 = arith.constant 0 : index
    %442 = vector.load %arg2[%c2_284, %c0_285, %c0_286] : memref<4x32x128xbf16, #tpu.memory_space<vmem>>, vector<1x32x128xbf16>
    %443 = vector.shape_cast %442 : vector<1x32x128xbf16> to vector<32x128xbf16>
    %cst_287 = arith.constant dense<0.000000e+00> : vector<8x128xf32>
    %444 = tpu.matmul %423, %443, %cst_287 {dimension_numbers = #tpu.dot_dimension_numbers<[1], [0], [0], [1], [0, 0, 1, 1], [], []>} : vector<8x32xbf16>, vector<32x128xbf16>, vector<8x128xf32> -> vector<8x128xf32>
    %445 = arith.addf %441, %444 : vector<8x128xf32>
    %446 = arith.select %17, %445, %438 : vector<8x128xi1>, vector<8x128xf32>
    %c3_288 = arith.constant 3 : index
    %c0_289 = arith.constant 0 : index
    %c0_290 = arith.constant 0 : index
    %447 = vector.load %arg1[%c3_288, %c0_289, %c0_290] : memref<4x32x128xbf16, #tpu.memory_space<vmem>>, vector<1x32x128xbf16>
    %448 = vector.shape_cast %447 : vector<1x32x128xbf16> to vector<32x128xbf16>
    %cst_291 = arith.constant dense<0.000000e+00> : vector<8x128xf32>
    %449 = tpu.matmul %422, %448, %cst_291 {dimension_numbers = #tpu.dot_dimension_numbers<[1], [0], [0], [1], [0, 0, 1, 1], [], []>} : vector<8x32xbf16>, vector<32x128xbf16>, vector<8x128xf32> -> vector<8x128xf32>
    %c3_292 = arith.constant 3 : index
    %c0_293 = arith.constant 0 : index
    %c0_294 = arith.constant 0 : index
    %450 = vector.load %arg2[%c3_292, %c0_293, %c0_294] : memref<4x32x128xbf16, #tpu.memory_space<vmem>>, vector<1x32x128xbf16>
    %451 = vector.shape_cast %450 : vector<1x32x128xbf16> to vector<32x128xbf16>
    %cst_295 = arith.constant dense<0.000000e+00> : vector<8x128xf32>
    %452 = tpu.matmul %423, %451, %cst_295 {dimension_numbers = #tpu.dot_dimension_numbers<[1], [0], [0], [1], [0, 0, 1, 1], [], []>} : vector<8x32xbf16>, vector<32x128xbf16>, vector<8x128xf32> -> vector<8x128xf32>
    %453 = arith.addf %449, %452 : vector<8x128xf32>
    %454 = arith.select %22, %453, %446 : vector<8x128xi1>, vector<8x128xf32>
    %455 = arith.addf %454, %0 : vector<8x128xf32>
    %456 = math.tanh %455 : vector<8x128xf32>
    %457 = arith.negf %455 : vector<8x128xf32>
    %458 = math.exp %457 : vector<8x128xf32>
    %cst_296 = arith.constant 1.000000e+00 : f32
    %459 = vector.broadcast %cst_296 : f32 to vector<8x128xf32>
    %460 = arith.addf %459, %458 : vector<8x128xf32>
    %461 = arith.divf %459, %460 : vector<8x128xf32>
    %462 = arith.select %6, %456, %461 : vector<8x128xi1>, vector<8x128xf32>
    %463 = vector.extract_strided_slice %462 {offsets = [0, 0], sizes = [8, 32], strides = [1, 1]} : vector<8x128xf32> to vector<8x32xf32>
    %464 = vector.extract_strided_slice %462 {offsets = [0, 32], sizes = [8, 32], strides = [1, 1]} : vector<8x128xf32> to vector<8x32xf32>
    %465 = vector.extract_strided_slice %462 {offsets = [0, 64], sizes = [8, 32], strides = [1, 1]} : vector<8x128xf32> to vector<8x32xf32>
    %466 = vector.extract_strided_slice %462 {offsets = [0, 96], sizes = [8, 32], strides = [1, 1]} : vector<8x128xf32> to vector<8x32xf32>
    %467 = arith.mulf %464, %415 : vector<8x32xf32>
    %468 = arith.mulf %463, %465 : vector<8x32xf32>
    %469 = arith.addf %467, %468 : vector<8x32xf32>
    %470 = math.tanh %469 : vector<8x32xf32>
    %471 = arith.mulf %466, %470 : vector<8x32xf32>
    %c8 = arith.constant 8 : index
    %c0_297 = arith.constant 0 : index
    %c0_298 = arith.constant 0 : index
    %472 = vector.load %arg0[%c8, %c0_297, %c0_298] : memref<11x8x32xf32, #tpu.memory_space<vmem>>, vector<1x8x32xf32>
    %473 = vector.shape_cast %472 : vector<1x8x32xf32> to vector<8x32xf32>
    %c2_i32_299 = arith.constant 2 : i32
    %474 = tpu.dynamic_rotate %471 by %c2_i32_299 dim 0 : vector<8x32xf32>, i32 -> vector<8x32xf32>
    %475 = arith.select %25, %473, %474 : vector<8x32xi1>, vector<8x32xf32>
    %476 = arith.truncf %475 : vector<8x32xf32> to vector<8x32xbf16>
    %477 = arith.truncf %471 : vector<8x32xf32> to vector<8x32xbf16>
    %c0_300 = arith.constant 0 : index
    %c0_301 = arith.constant 0 : index
    %c0_302 = arith.constant 0 : index
    %478 = vector.load %arg1[%c0_300, %c0_301, %c0_302] : memref<4x32x128xbf16, #tpu.memory_space<vmem>>, vector<1x32x128xbf16>
    %479 = vector.shape_cast %478 : vector<1x32x128xbf16> to vector<32x128xbf16>
    %cst_303 = arith.constant dense<0.000000e+00> : vector<8x128xf32>
    %480 = tpu.matmul %476, %479, %cst_303 {dimension_numbers = #tpu.dot_dimension_numbers<[1], [0], [0], [1], [0, 0, 1, 1], [], []>} : vector<8x32xbf16>, vector<32x128xbf16>, vector<8x128xf32> -> vector<8x128xf32>
    %c0_304 = arith.constant 0 : index
    %c0_305 = arith.constant 0 : index
    %c0_306 = arith.constant 0 : index
    %481 = vector.load %arg2[%c0_304, %c0_305, %c0_306] : memref<4x32x128xbf16, #tpu.memory_space<vmem>>, vector<1x32x128xbf16>
    %482 = vector.shape_cast %481 : vector<1x32x128xbf16> to vector<32x128xbf16>
    %cst_307 = arith.constant dense<0.000000e+00> : vector<8x128xf32>
    %483 = tpu.matmul %477, %482, %cst_307 {dimension_numbers = #tpu.dot_dimension_numbers<[1], [0], [0], [1], [0, 0, 1, 1], [], []>} : vector<8x32xbf16>, vector<32x128xbf16>, vector<8x128xf32> -> vector<8x128xf32>
    %484 = arith.addf %480, %483 : vector<8x128xf32>
    %c1_308 = arith.constant 1 : index
    %c0_309 = arith.constant 0 : index
    %c0_310 = arith.constant 0 : index
    %485 = vector.load %arg1[%c1_308, %c0_309, %c0_310] : memref<4x32x128xbf16, #tpu.memory_space<vmem>>, vector<1x32x128xbf16>
    %486 = vector.shape_cast %485 : vector<1x32x128xbf16> to vector<32x128xbf16>
    %cst_311 = arith.constant dense<0.000000e+00> : vector<8x128xf32>
    %487 = tpu.matmul %476, %486, %cst_311 {dimension_numbers = #tpu.dot_dimension_numbers<[1], [0], [0], [1], [0, 0, 1, 1], [], []>} : vector<8x32xbf16>, vector<32x128xbf16>, vector<8x128xf32> -> vector<8x128xf32>
    %c1_312 = arith.constant 1 : index
    %c0_313 = arith.constant 0 : index
    %c0_314 = arith.constant 0 : index
    %488 = vector.load %arg2[%c1_312, %c0_313, %c0_314] : memref<4x32x128xbf16, #tpu.memory_space<vmem>>, vector<1x32x128xbf16>
    %489 = vector.shape_cast %488 : vector<1x32x128xbf16> to vector<32x128xbf16>
    %cst_315 = arith.constant dense<0.000000e+00> : vector<8x128xf32>
    %490 = tpu.matmul %477, %489, %cst_315 {dimension_numbers = #tpu.dot_dimension_numbers<[1], [0], [0], [1], [0, 0, 1, 1], [], []>} : vector<8x32xbf16>, vector<32x128xbf16>, vector<8x128xf32> -> vector<8x128xf32>
    %491 = arith.addf %487, %490 : vector<8x128xf32>
    %492 = arith.select %12, %491, %484 : vector<8x128xi1>, vector<8x128xf32>
    %c2_316 = arith.constant 2 : index
    %c0_317 = arith.constant 0 : index
    %c0_318 = arith.constant 0 : index
    %493 = vector.load %arg1[%c2_316, %c0_317, %c0_318] : memref<4x32x128xbf16, #tpu.memory_space<vmem>>, vector<1x32x128xbf16>
    %494 = vector.shape_cast %493 : vector<1x32x128xbf16> to vector<32x128xbf16>
    %cst_319 = arith.constant dense<0.000000e+00> : vector<8x128xf32>
    %495 = tpu.matmul %476, %494, %cst_319 {dimension_numbers = #tpu.dot_dimension_numbers<[1], [0], [0], [1], [0, 0, 1, 1], [], []>} : vector<8x32xbf16>, vector<32x128xbf16>, vector<8x128xf32> -> vector<8x128xf32>
    %c2_320 = arith.constant 2 : index
    %c0_321 = arith.constant 0 : index
    %c0_322 = arith.constant 0 : index
    %496 = vector.load %arg2[%c2_320, %c0_321, %c0_322] : memref<4x32x128xbf16, #tpu.memory_space<vmem>>, vector<1x32x128xbf16>
    %497 = vector.shape_cast %496 : vector<1x32x128xbf16> to vector<32x128xbf16>
    %cst_323 = arith.constant dense<0.000000e+00> : vector<8x128xf32>
    %498 = tpu.matmul %477, %497, %cst_323 {dimension_numbers = #tpu.dot_dimension_numbers<[1], [0], [0], [1], [0, 0, 1, 1], [], []>} : vector<8x32xbf16>, vector<32x128xbf16>, vector<8x128xf32> -> vector<8x128xf32>
    %499 = arith.addf %495, %498 : vector<8x128xf32>
    %500 = arith.select %17, %499, %492 : vector<8x128xi1>, vector<8x128xf32>
    %c3_324 = arith.constant 3 : index
    %c0_325 = arith.constant 0 : index
    %c0_326 = arith.constant 0 : index
    %501 = vector.load %arg1[%c3_324, %c0_325, %c0_326] : memref<4x32x128xbf16, #tpu.memory_space<vmem>>, vector<1x32x128xbf16>
    %502 = vector.shape_cast %501 : vector<1x32x128xbf16> to vector<32x128xbf16>
    %cst_327 = arith.constant dense<0.000000e+00> : vector<8x128xf32>
    %503 = tpu.matmul %476, %502, %cst_327 {dimension_numbers = #tpu.dot_dimension_numbers<[1], [0], [0], [1], [0, 0, 1, 1], [], []>} : vector<8x32xbf16>, vector<32x128xbf16>, vector<8x128xf32> -> vector<8x128xf32>
    %c3_328 = arith.constant 3 : index
    %c0_329 = arith.constant 0 : index
    %c0_330 = arith.constant 0 : index
    %504 = vector.load %arg2[%c3_328, %c0_329, %c0_330] : memref<4x32x128xbf16, #tpu.memory_space<vmem>>, vector<1x32x128xbf16>
    %505 = vector.shape_cast %504 : vector<1x32x128xbf16> to vector<32x128xbf16>
    %cst_331 = arith.constant dense<0.000000e+00> : vector<8x128xf32>
    %506 = tpu.matmul %477, %505, %cst_331 {dimension_numbers = #tpu.dot_dimension_numbers<[1], [0], [0], [1], [0, 0, 1, 1], [], []>} : vector<8x32xbf16>, vector<32x128xbf16>, vector<8x128xf32> -> vector<8x128xf32>
    %507 = arith.addf %503, %506 : vector<8x128xf32>
    %508 = arith.select %22, %507, %500 : vector<8x128xi1>, vector<8x128xf32>
    %509 = arith.addf %508, %0 : vector<8x128xf32>
    %510 = math.tanh %509 : vector<8x128xf32>
    %511 = arith.negf %509 : vector<8x128xf32>
    %512 = math.exp %511 : vector<8x128xf32>
    %cst_332 = arith.constant 1.000000e+00 : f32
    %513 = vector.broadcast %cst_332 : f32 to vector<8x128xf32>
    %514 = arith.addf %513, %512 : vector<8x128xf32>
    %515 = arith.divf %513, %514 : vector<8x128xf32>
    %516 = arith.select %6, %510, %515 : vector<8x128xi1>, vector<8x128xf32>
    %517 = vector.extract_strided_slice %516 {offsets = [0, 0], sizes = [8, 32], strides = [1, 1]} : vector<8x128xf32> to vector<8x32xf32>
    %518 = vector.extract_strided_slice %516 {offsets = [0, 32], sizes = [8, 32], strides = [1, 1]} : vector<8x128xf32> to vector<8x32xf32>
    %519 = vector.extract_strided_slice %516 {offsets = [0, 64], sizes = [8, 32], strides = [1, 1]} : vector<8x128xf32> to vector<8x32xf32>
    %520 = vector.extract_strided_slice %516 {offsets = [0, 96], sizes = [8, 32], strides = [1, 1]} : vector<8x128xf32> to vector<8x32xf32>
    %521 = arith.mulf %518, %469 : vector<8x32xf32>
    %522 = arith.mulf %517, %519 : vector<8x32xf32>
    %523 = arith.addf %521, %522 : vector<8x32xf32>
    %524 = math.tanh %523 : vector<8x32xf32>
    %525 = arith.mulf %520, %524 : vector<8x32xf32>
    %c9 = arith.constant 9 : index
    %c0_333 = arith.constant 0 : index
    %c0_334 = arith.constant 0 : index
    %526 = vector.load %arg0[%c9, %c0_333, %c0_334] : memref<11x8x32xf32, #tpu.memory_space<vmem>>, vector<1x8x32xf32>
    %527 = vector.shape_cast %526 : vector<1x8x32xf32> to vector<8x32xf32>
    %c2_i32_335 = arith.constant 2 : i32
    %528 = tpu.dynamic_rotate %525 by %c2_i32_335 dim 0 : vector<8x32xf32>, i32 -> vector<8x32xf32>
    %529 = arith.select %25, %527, %528 : vector<8x32xi1>, vector<8x32xf32>
    %530 = arith.truncf %529 : vector<8x32xf32> to vector<8x32xbf16>
    %531 = arith.truncf %525 : vector<8x32xf32> to vector<8x32xbf16>
    %c0_336 = arith.constant 0 : index
    %c0_337 = arith.constant 0 : index
    %c0_338 = arith.constant 0 : index
    %532 = vector.load %arg1[%c0_336, %c0_337, %c0_338] : memref<4x32x128xbf16, #tpu.memory_space<vmem>>, vector<1x32x128xbf16>
    %533 = vector.shape_cast %532 : vector<1x32x128xbf16> to vector<32x128xbf16>
    %cst_339 = arith.constant dense<0.000000e+00> : vector<8x128xf32>
    %534 = tpu.matmul %530, %533, %cst_339 {dimension_numbers = #tpu.dot_dimension_numbers<[1], [0], [0], [1], [0, 0, 1, 1], [], []>} : vector<8x32xbf16>, vector<32x128xbf16>, vector<8x128xf32> -> vector<8x128xf32>
    %c0_340 = arith.constant 0 : index
    %c0_341 = arith.constant 0 : index
    %c0_342 = arith.constant 0 : index
    %535 = vector.load %arg2[%c0_340, %c0_341, %c0_342] : memref<4x32x128xbf16, #tpu.memory_space<vmem>>, vector<1x32x128xbf16>
    %536 = vector.shape_cast %535 : vector<1x32x128xbf16> to vector<32x128xbf16>
    %cst_343 = arith.constant dense<0.000000e+00> : vector<8x128xf32>
    %537 = tpu.matmul %531, %536, %cst_343 {dimension_numbers = #tpu.dot_dimension_numbers<[1], [0], [0], [1], [0, 0, 1, 1], [], []>} : vector<8x32xbf16>, vector<32x128xbf16>, vector<8x128xf32> -> vector<8x128xf32>
    %538 = arith.addf %534, %537 : vector<8x128xf32>
    %c1_344 = arith.constant 1 : index
    %c0_345 = arith.constant 0 : index
    %c0_346 = arith.constant 0 : index
    %539 = vector.load %arg1[%c1_344, %c0_345, %c0_346] : memref<4x32x128xbf16, #tpu.memory_space<vmem>>, vector<1x32x128xbf16>
    %540 = vector.shape_cast %539 : vector<1x32x128xbf16> to vector<32x128xbf16>
    %cst_347 = arith.constant dense<0.000000e+00> : vector<8x128xf32>
    %541 = tpu.matmul %530, %540, %cst_347 {dimension_numbers = #tpu.dot_dimension_numbers<[1], [0], [0], [1], [0, 0, 1, 1], [], []>} : vector<8x32xbf16>, vector<32x128xbf16>, vector<8x128xf32> -> vector<8x128xf32>
    %c1_348 = arith.constant 1 : index
    %c0_349 = arith.constant 0 : index
    %c0_350 = arith.constant 0 : index
    %542 = vector.load %arg2[%c1_348, %c0_349, %c0_350] : memref<4x32x128xbf16, #tpu.memory_space<vmem>>, vector<1x32x128xbf16>
    %543 = vector.shape_cast %542 : vector<1x32x128xbf16> to vector<32x128xbf16>
    %cst_351 = arith.constant dense<0.000000e+00> : vector<8x128xf32>
    %544 = tpu.matmul %531, %543, %cst_351 {dimension_numbers = #tpu.dot_dimension_numbers<[1], [0], [0], [1], [0, 0, 1, 1], [], []>} : vector<8x32xbf16>, vector<32x128xbf16>, vector<8x128xf32> -> vector<8x128xf32>
    %545 = arith.addf %541, %544 : vector<8x128xf32>
    %546 = arith.select %12, %545, %538 : vector<8x128xi1>, vector<8x128xf32>
    %c2_352 = arith.constant 2 : index
    %c0_353 = arith.constant 0 : index
    %c0_354 = arith.constant 0 : index
    %547 = vector.load %arg1[%c2_352, %c0_353, %c0_354] : memref<4x32x128xbf16, #tpu.memory_space<vmem>>, vector<1x32x128xbf16>
    %548 = vector.shape_cast %547 : vector<1x32x128xbf16> to vector<32x128xbf16>
    %cst_355 = arith.constant dense<0.000000e+00> : vector<8x128xf32>
    %549 = tpu.matmul %530, %548, %cst_355 {dimension_numbers = #tpu.dot_dimension_numbers<[1], [0], [0], [1], [0, 0, 1, 1], [], []>} : vector<8x32xbf16>, vector<32x128xbf16>, vector<8x128xf32> -> vector<8x128xf32>
    %c2_356 = arith.constant 2 : index
    %c0_357 = arith.constant 0 : index
    %c0_358 = arith.constant 0 : index
    %550 = vector.load %arg2[%c2_356, %c0_357, %c0_358] : memref<4x32x128xbf16, #tpu.memory_space<vmem>>, vector<1x32x128xbf16>
    %551 = vector.shape_cast %550 : vector<1x32x128xbf16> to vector<32x128xbf16>
    %cst_359 = arith.constant dense<0.000000e+00> : vector<8x128xf32>
    %552 = tpu.matmul %531, %551, %cst_359 {dimension_numbers = #tpu.dot_dimension_numbers<[1], [0], [0], [1], [0, 0, 1, 1], [], []>} : vector<8x32xbf16>, vector<32x128xbf16>, vector<8x128xf32> -> vector<8x128xf32>
    %553 = arith.addf %549, %552 : vector<8x128xf32>
    %554 = arith.select %17, %553, %546 : vector<8x128xi1>, vector<8x128xf32>
    %c3_360 = arith.constant 3 : index
    %c0_361 = arith.constant 0 : index
    %c0_362 = arith.constant 0 : index
    %555 = vector.load %arg1[%c3_360, %c0_361, %c0_362] : memref<4x32x128xbf16, #tpu.memory_space<vmem>>, vector<1x32x128xbf16>
    %556 = vector.shape_cast %555 : vector<1x32x128xbf16> to vector<32x128xbf16>
    %cst_363 = arith.constant dense<0.000000e+00> : vector<8x128xf32>
    %557 = tpu.matmul %530, %556, %cst_363 {dimension_numbers = #tpu.dot_dimension_numbers<[1], [0], [0], [1], [0, 0, 1, 1], [], []>} : vector<8x32xbf16>, vector<32x128xbf16>, vector<8x128xf32> -> vector<8x128xf32>
    %c3_364 = arith.constant 3 : index
    %c0_365 = arith.constant 0 : index
    %c0_366 = arith.constant 0 : index
    %558 = vector.load %arg2[%c3_364, %c0_365, %c0_366] : memref<4x32x128xbf16, #tpu.memory_space<vmem>>, vector<1x32x128xbf16>
    %559 = vector.shape_cast %558 : vector<1x32x128xbf16> to vector<32x128xbf16>
    %cst_367 = arith.constant dense<0.000000e+00> : vector<8x128xf32>
    %560 = tpu.matmul %531, %559, %cst_367 {dimension_numbers = #tpu.dot_dimension_numbers<[1], [0], [0], [1], [0, 0, 1, 1], [], []>} : vector<8x32xbf16>, vector<32x128xbf16>, vector<8x128xf32> -> vector<8x128xf32>
    %561 = arith.addf %557, %560 : vector<8x128xf32>
    %562 = arith.select %22, %561, %554 : vector<8x128xi1>, vector<8x128xf32>
    %563 = arith.addf %562, %0 : vector<8x128xf32>
    %564 = math.tanh %563 : vector<8x128xf32>
    %565 = arith.negf %563 : vector<8x128xf32>
    %566 = math.exp %565 : vector<8x128xf32>
    %cst_368 = arith.constant 1.000000e+00 : f32
    %567 = vector.broadcast %cst_368 : f32 to vector<8x128xf32>
    %568 = arith.addf %567, %566 : vector<8x128xf32>
    %569 = arith.divf %567, %568 : vector<8x128xf32>
    %570 = arith.select %6, %564, %569 : vector<8x128xi1>, vector<8x128xf32>
    %571 = vector.extract_strided_slice %570 {offsets = [0, 0], sizes = [8, 32], strides = [1, 1]} : vector<8x128xf32> to vector<8x32xf32>
    %572 = vector.extract_strided_slice %570 {offsets = [0, 32], sizes = [8, 32], strides = [1, 1]} : vector<8x128xf32> to vector<8x32xf32>
    %573 = vector.extract_strided_slice %570 {offsets = [0, 64], sizes = [8, 32], strides = [1, 1]} : vector<8x128xf32> to vector<8x32xf32>
    %574 = vector.extract_strided_slice %570 {offsets = [0, 96], sizes = [8, 32], strides = [1, 1]} : vector<8x128xf32> to vector<8x32xf32>
    %575 = arith.mulf %572, %523 : vector<8x32xf32>
    %576 = arith.mulf %571, %573 : vector<8x32xf32>
    %577 = arith.addf %575, %576 : vector<8x32xf32>
    %578 = math.tanh %577 : vector<8x32xf32>
    %579 = arith.mulf %574, %578 : vector<8x32xf32>
    %c10 = arith.constant 10 : index
    %c0_369 = arith.constant 0 : index
    %c0_370 = arith.constant 0 : index
    %580 = vector.load %arg0[%c10, %c0_369, %c0_370] : memref<11x8x32xf32, #tpu.memory_space<vmem>>, vector<1x8x32xf32>
    %581 = vector.shape_cast %580 : vector<1x8x32xf32> to vector<8x32xf32>
    %c2_i32_371 = arith.constant 2 : i32
    %582 = tpu.dynamic_rotate %579 by %c2_i32_371 dim 0 : vector<8x32xf32>, i32 -> vector<8x32xf32>
    %583 = arith.select %25, %581, %582 : vector<8x32xi1>, vector<8x32xf32>
    %584 = arith.truncf %583 : vector<8x32xf32> to vector<8x32xbf16>
    %585 = arith.truncf %579 : vector<8x32xf32> to vector<8x32xbf16>
    %c0_372 = arith.constant 0 : index
    %c0_373 = arith.constant 0 : index
    %c0_374 = arith.constant 0 : index
    %586 = vector.load %arg1[%c0_372, %c0_373, %c0_374] : memref<4x32x128xbf16, #tpu.memory_space<vmem>>, vector<1x32x128xbf16>
    %587 = vector.shape_cast %586 : vector<1x32x128xbf16> to vector<32x128xbf16>
    %cst_375 = arith.constant dense<0.000000e+00> : vector<8x128xf32>
    %588 = tpu.matmul %584, %587, %cst_375 {dimension_numbers = #tpu.dot_dimension_numbers<[1], [0], [0], [1], [0, 0, 1, 1], [], []>} : vector<8x32xbf16>, vector<32x128xbf16>, vector<8x128xf32> -> vector<8x128xf32>
    %c0_376 = arith.constant 0 : index
    %c0_377 = arith.constant 0 : index
    %c0_378 = arith.constant 0 : index
    %589 = vector.load %arg2[%c0_376, %c0_377, %c0_378] : memref<4x32x128xbf16, #tpu.memory_space<vmem>>, vector<1x32x128xbf16>
    %590 = vector.shape_cast %589 : vector<1x32x128xbf16> to vector<32x128xbf16>
    %cst_379 = arith.constant dense<0.000000e+00> : vector<8x128xf32>
    %591 = tpu.matmul %585, %590, %cst_379 {dimension_numbers = #tpu.dot_dimension_numbers<[1], [0], [0], [1], [0, 0, 1, 1], [], []>} : vector<8x32xbf16>, vector<32x128xbf16>, vector<8x128xf32> -> vector<8x128xf32>
    %592 = arith.addf %588, %591 : vector<8x128xf32>
    %c1_380 = arith.constant 1 : index
    %c0_381 = arith.constant 0 : index
    %c0_382 = arith.constant 0 : index
    %593 = vector.load %arg1[%c1_380, %c0_381, %c0_382] : memref<4x32x128xbf16, #tpu.memory_space<vmem>>, vector<1x32x128xbf16>
    %594 = vector.shape_cast %593 : vector<1x32x128xbf16> to vector<32x128xbf16>
    %cst_383 = arith.constant dense<0.000000e+00> : vector<8x128xf32>
    %595 = tpu.matmul %584, %594, %cst_383 {dimension_numbers = #tpu.dot_dimension_numbers<[1], [0], [0], [1], [0, 0, 1, 1], [], []>} : vector<8x32xbf16>, vector<32x128xbf16>, vector<8x128xf32> -> vector<8x128xf32>
    %c1_384 = arith.constant 1 : index
    %c0_385 = arith.constant 0 : index
    %c0_386 = arith.constant 0 : index
    %596 = vector.load %arg2[%c1_384, %c0_385, %c0_386] : memref<4x32x128xbf16, #tpu.memory_space<vmem>>, vector<1x32x128xbf16>
    %597 = vector.shape_cast %596 : vector<1x32x128xbf16> to vector<32x128xbf16>
    %cst_387 = arith.constant dense<0.000000e+00> : vector<8x128xf32>
    %598 = tpu.matmul %585, %597, %cst_387 {dimension_numbers = #tpu.dot_dimension_numbers<[1], [0], [0], [1], [0, 0, 1, 1], [], []>} : vector<8x32xbf16>, vector<32x128xbf16>, vector<8x128xf32> -> vector<8x128xf32>
    %599 = arith.addf %595, %598 : vector<8x128xf32>
    %600 = arith.select %12, %599, %592 : vector<8x128xi1>, vector<8x128xf32>
    %c2_388 = arith.constant 2 : index
    %c0_389 = arith.constant 0 : index
    %c0_390 = arith.constant 0 : index
    %601 = vector.load %arg1[%c2_388, %c0_389, %c0_390] : memref<4x32x128xbf16, #tpu.memory_space<vmem>>, vector<1x32x128xbf16>
    %602 = vector.shape_cast %601 : vector<1x32x128xbf16> to vector<32x128xbf16>
    %cst_391 = arith.constant dense<0.000000e+00> : vector<8x128xf32>
    %603 = tpu.matmul %584, %602, %cst_391 {dimension_numbers = #tpu.dot_dimension_numbers<[1], [0], [0], [1], [0, 0, 1, 1], [], []>} : vector<8x32xbf16>, vector<32x128xbf16>, vector<8x128xf32> -> vector<8x128xf32>
    %c2_392 = arith.constant 2 : index
    %c0_393 = arith.constant 0 : index
    %c0_394 = arith.constant 0 : index
    %604 = vector.load %arg2[%c2_392, %c0_393, %c0_394] : memref<4x32x128xbf16, #tpu.memory_space<vmem>>, vector<1x32x128xbf16>
    %605 = vector.shape_cast %604 : vector<1x32x128xbf16> to vector<32x128xbf16>
    %cst_395 = arith.constant dense<0.000000e+00> : vector<8x128xf32>
    %606 = tpu.matmul %585, %605, %cst_395 {dimension_numbers = #tpu.dot_dimension_numbers<[1], [0], [0], [1], [0, 0, 1, 1], [], []>} : vector<8x32xbf16>, vector<32x128xbf16>, vector<8x128xf32> -> vector<8x128xf32>
    %607 = arith.addf %603, %606 : vector<8x128xf32>
    %608 = arith.select %17, %607, %600 : vector<8x128xi1>, vector<8x128xf32>
    %c3_396 = arith.constant 3 : index
    %c0_397 = arith.constant 0 : index
    %c0_398 = arith.constant 0 : index
    %609 = vector.load %arg1[%c3_396, %c0_397, %c0_398] : memref<4x32x128xbf16, #tpu.memory_space<vmem>>, vector<1x32x128xbf16>
    %610 = vector.shape_cast %609 : vector<1x32x128xbf16> to vector<32x128xbf16>
    %cst_399 = arith.constant dense<0.000000e+00> : vector<8x128xf32>
    %611 = tpu.matmul %584, %610, %cst_399 {dimension_numbers = #tpu.dot_dimension_numbers<[1], [0], [0], [1], [0, 0, 1, 1], [], []>} : vector<8x32xbf16>, vector<32x128xbf16>, vector<8x128xf32> -> vector<8x128xf32>
    %c3_400 = arith.constant 3 : index
    %c0_401 = arith.constant 0 : index
    %c0_402 = arith.constant 0 : index
    %612 = vector.load %arg2[%c3_400, %c0_401, %c0_402] : memref<4x32x128xbf16, #tpu.memory_space<vmem>>, vector<1x32x128xbf16>
    %613 = vector.shape_cast %612 : vector<1x32x128xbf16> to vector<32x128xbf16>
    %cst_403 = arith.constant dense<0.000000e+00> : vector<8x128xf32>
    %614 = tpu.matmul %585, %613, %cst_403 {dimension_numbers = #tpu.dot_dimension_numbers<[1], [0], [0], [1], [0, 0, 1, 1], [], []>} : vector<8x32xbf16>, vector<32x128xbf16>, vector<8x128xf32> -> vector<8x128xf32>
    %615 = arith.addf %611, %614 : vector<8x128xf32>
    %616 = arith.select %22, %615, %608 : vector<8x128xi1>, vector<8x128xf32>
    %617 = arith.addf %616, %0 : vector<8x128xf32>
    %618 = math.tanh %617 : vector<8x128xf32>
    %619 = arith.negf %617 : vector<8x128xf32>
    %620 = math.exp %619 : vector<8x128xf32>
    %cst_404 = arith.constant 1.000000e+00 : f32
    %621 = vector.broadcast %cst_404 : f32 to vector<8x128xf32>
    %622 = arith.addf %621, %620 : vector<8x128xf32>
    %623 = arith.divf %621, %622 : vector<8x128xf32>
    %624 = arith.select %6, %618, %623 : vector<8x128xi1>, vector<8x128xf32>
    %625 = vector.extract_strided_slice %624 {offsets = [0, 0], sizes = [8, 32], strides = [1, 1]} : vector<8x128xf32> to vector<8x32xf32>
    %626 = vector.extract_strided_slice %624 {offsets = [0, 32], sizes = [8, 32], strides = [1, 1]} : vector<8x128xf32> to vector<8x32xf32>
    %627 = vector.extract_strided_slice %624 {offsets = [0, 64], sizes = [8, 32], strides = [1, 1]} : vector<8x128xf32> to vector<8x32xf32>
    %628 = vector.extract_strided_slice %624 {offsets = [0, 96], sizes = [8, 32], strides = [1, 1]} : vector<8x128xf32> to vector<8x32xf32>
    %629 = arith.mulf %626, %577 : vector<8x32xf32>
    %630 = arith.mulf %625, %627 : vector<8x32xf32>
    %631 = arith.addf %629, %630 : vector<8x32xf32>
    %632 = math.tanh %631 : vector<8x32xf32>
    %633 = arith.mulf %628, %632 : vector<8x32xf32>
    %634 = vector.extract_strided_slice %633 {offsets = [6, 0], sizes = [2, 32], strides = [1, 1]} : vector<8x32xf32> to vector<2x32xf32>
    %c0_405 = arith.constant 0 : index
    %c0_406 = arith.constant 0 : index
    %635 = vector.load %arg4[%c0_405, %c0_406] : memref<1x32xf32, #tpu.memory_space<vmem>>, vector<1x32xf32>
    %636 = vector.broadcast %635 : vector<1x32xf32> to vector<2x32xf32>
    %637 = arith.mulf %634, %636 : vector<2x32xf32>
    %cst_407 = arith.constant dense<0.000000e+00> : vector<2xf32>
    %638 = vector.multi_reduction <add>, %637, %cst_407 [1] : vector<2x32xf32> to vector<2xf32>
    %639 = vector.shape_cast %638 : vector<2xf32> to vector<2x1xf32>
    %c0_408 = arith.constant 0 : index
    %c0_409 = arith.constant 0 : index
    %640 = vector.load %arg5[%c0_408, %c0_409] : memref<1x1xf32, #tpu.memory_space<vmem>>, vector<1x1xf32>
    %641 = vector.broadcast %640 : vector<1x1xf32> to vector<2x1xf32>
    %642 = arith.addf %639, %641 : vector<2x1xf32>
    %c0_410 = arith.constant 0 : index
    %c0_411 = arith.constant 0 : index
    %643 = vector.load %arg6[%c0_410, %c0_411] : memref<2x1xf32, #tpu.memory_space<vmem>>, vector<2x1xf32>
    tpu.vector_store %arg6[%c0_410, %c0_411], %642 {strides = array<i32>} : memref<2x1xf32, #tpu.memory_space<vmem>>, vector<2x1xf32>,
    return
  }
}

</mosaic_0001>

<llo_original>
// kernel: lstm_forward.1
$region0: #{lstm_forward.1}
  #allocation0 [shape = 'u32[]', space=smem, size = 0x4, offset = 0x4, fixed_abs, tag = 'smem constant byte address 0x4 - core index']
  #allocation1 [shape = 'u32[144,128]{1,0:T(1,128)}', space=vmem, size = 0x12000, scoped, tag = 'internal scratch']
  #allocation2 [shape = 'f32[1,1]{1,0:T(1,128)S(1)}', space=vmem, size = 0x200, scoped, tag = 'scoped memory for lstm_forward.1']
  %s0 = inlined_call_operand.vmem [shape: f32[11,8,32], index: 0, kind: input, shape index: {}]
  %s1 = inlined_call_operand.vmem [shape: bf16[4,32,128], index: 1, kind: input, shape index: {}]
  %s2 = inlined_call_operand.hbm [shape: bf16[4,32,128], index: 2, kind: input, shape index: {}]
  %s3 = inlined_call_operand.vmem [shape: f32[8,128], index: 3, kind: input, shape index: {}]
  %s4 = inlined_call_operand.vmem [shape: f32[1,32], index: 4, kind: input, shape index: {}]
  %s5 = inlined_call_operand.<no memory space> [shape: f32[1,1], index: 5, kind: input, shape index: {}]
  %s6 = inlined_call_operand.vmem [shape: f32[2,1], index: 6, kind: output, shape index: {}]
  %s7 = sld [smem:[#allocation0]]
  $region38: #{lstm_forward.1} parent=0
    _
  %s9 = ssub.s32 1, %s7
  %s10 = scalar_select 0, %s9, %s7
  %v11 = vstv %s5
  %12 = vst [vmem:[#allocation2] sm:$0x1] %v11
  $region1: #{lstm_forward.1} parent=0
    #allocation3 [shape = 'u8[32768]{0}', space=vmem, size = 0x8000, scoped, tag = 'input window, operand 2, single buffered']
    #allocation4 [shape = 's32[1]{0}', space=sflag, size = 0x4, scoped, tag = 'scoped memory for lstm_forward.1']
    %13 = vsyncpa [#allocation4], 0
    // Predicated region
    $region2: #{lstm_forward.1} parent=1 // pred_check
      _
    $region3: #{lstm_forward.1} parent=1 // pred_check_branch
      %15 = sbr.rel (0) target = $region5
    $region4: #{lstm_forward.1} parent=1 // pred_region
      _
    $region5: #{lstm_forward.1} parent=1 // pred_fallthru
      _
    // Predicated region
    $region6: #{lstm_forward.1} parent=1 // pred_check
      _
    $region7: #{lstm_forward.1} parent=1 // pred_check_branch
      %17 = sbr.rel (0) target = $region9
    $region8: #{lstm_forward.1} parent=1 // pred_region
      _
    $region9: #{lstm_forward.1} parent=1 // pred_fallthru
      _
    // Predicated region
    $region10: #{lstm_forward.1} parent=1 // pred_check
      _
    $region11: #{lstm_forward.1} parent=1 // pred_check_branch
      %19 = sbr.rel (0) target = $region13
    $region12: #{lstm_forward.1} parent=1 // pred_region
      %s21 = ssub.s32 1024, 1024
      %22 = vsyncadd [#allocation4], %s21
      %s23 = sshll.u32 [#allocation3], 4
      %s24 = int_to_ptr.vmem [resolvable:$true] %s23
      %29 = dma.hbm_to_vmem [thread:$0]  %s2, 1024, %s24, [#allocation4], 64, 64, 4
    $region13: #{lstm_forward.1} parent=1 // pred_fallthru
      _
    // Predicated region
    $region14: #{lstm_forward.1} parent=1 // pred_check
      _
    $region15: #{lstm_forward.1} parent=1 // pred_check_branch
      %31 = sbr.rel (0) target = $region17
    $region16: #{lstm_forward.1} parent=1 // pred_region
      _
    $region17: #{lstm_forward.1} parent=1 // pred_fallthru
      _
    // Predicated region
    $region18: #{lstm_forward.1} parent=1 // pred_check
      _
    $region19: #{lstm_forward.1} parent=1 // pred_check_branch
      %33 = sbr.rel (0) target = $region21
    $region20: #{lstm_forward.1} parent=1 // pred_region
      _
    $region21: #{lstm_forward.1} parent=1 // pred_fallthru
      _
    // Predicated region
    $region22: #{lstm_forward.1} parent=1 // pred_check
      _
    $region23: #{lstm_forward.1} parent=1 // pred_check_branch
      %35 = sbr.rel (0) target = $region25
    $region24: #{lstm_forward.1} parent=1 // pred_region
      _
    $region25: #{lstm_forward.1} parent=1 // pred_fallthru
      _
    // Predicated region
    $region26: #{lstm_forward.1} parent=1 // pred_check
      _
    $region27: #{lstm_forward.1} parent=1 // pred_check_branch
      %37 = sbr.rel (0) target = $region29
    $region28: #{lstm_forward.1} parent=1 // pred_region
      %38 = dma.done [#allocation4], 1024
    $region29: #{lstm_forward.1} parent=1 // pred_fallthru
      _
    %v40 = vld [vmem:[%s3] sm:$0xff]
    %v41 = vlaneseq
    %v42 = vand.u32 %v41, 127
    %vm43 = vcmp.ge.s32.totalorder %v42, 64
    %vm44 = vcmp.lt.s32.totalorder %v42, 96
    %vm45 = vmand %vm43, %vm44
    %v46 = vlaneseq
    %v47 = vshrl.u32 %v46, 7
    %vm48 = vcmp.ge.s32.totalorder %v47, 2
    %vm49 = vcmp.lt.s32.totalorder %v47, 4
    %vm50 = vmand %vm48, %vm49
    %vm51 = vcmp.ge.s32.totalorder %v47, 4
    %vm52 = vcmp.lt.s32.totalorder %v47, 6
    %vm53 = vmand %vm51, %vm52
    %vm54 = vcmp.ge.s32.totalorder %v47, 6
    %vm55 = vcmp.lt.s32.totalorder %v47, 8
    %vm56 = vmand %vm54, %vm55
    %vm57 = vcmp.lt.s32.totalorder %v47, 2
    %v58 = vld [vmem:[%s0] sm:$0xff]
    %v59 = vsel %vm57, %v58, 0.0
    %v60 = vpack.c.bf16 %v59, %v59
    %v61 = vld [vmem:[%s1] sm:$0xf]
    %v62 = vld [vmem:[%s1 + $0x4] sm:$0xf]
    %v63 = vld [vmem:[%s1 + $0x8] sm:$0xf]
    %v64 = vld [vmem:[%s1 + $0xc] sm:$0xf]
    %v65 = vld [vmem:[#allocation3] sm:$0xf]
    %v66 = vld [vmem:[#allocation3 + $0x4] sm:$0xf]
    %v67 = vld [vmem:[#allocation3 + $0x8] sm:$0xf]
    %v68 = vld [vmem:[#allocation3 + $0xc] sm:$0xf]
    %v73 = vunpack.c.l.b16 %v65
    %v74 = vunpack.c.l.b16 %v66
    %v75 = vunpack.c.l.b16 %v67
    %v76 = vunpack.c.l.b16 %v68
    %v77 = vpack.c.b16 %v74, %v73
    %v78 = vpack.c.b16 %v76, %v75
    %vm81 = vcmask 261120
    %v83 = vsel %vm81, 0, 0
    %85 = vmatprep.subr.bf16.mxu0 0
    %86 = vmatpush1.bf16.msra.mxu0 %v77
    %87 = vmatprep.subr.bf16.mxu0 0
    %88 = vmatpush1.bf16.msra.mxu0 %v78
    %89 = vmatprep.subr.bf16.mxu0 0
    %90 = vmatpush1.bf16.msra.mxu0 0
    %91 = vmatprep.subr.bf16.mxu0 0
    %92 = vmatpush1.bf16.msra.mxu0 0
    %93 = vmatprep.subr.bf16.mxu0 0
    %94 = vmatpush1.bf16.msra.mxu0 0
    %95 = vmatprep.subr.bf16.mxu0 0
    %96 = vmatpush1.bf16.msra.mxu0 0
    %97 = vmatprep.subr.bf16.mxu0 0
    %98 = vmatpush1.bf16.msra.mxu0 0
    %99 = vmatprep.subr.bf16.mxu0 0
    %100 = vmatpush1.bf16.msra.mxu0 0
    %101 = vmatprep.subr.bf16.mxu0 0
    %102 = vmatpush1.bf16.msra.mxu0 0
    %103 = vmatprep.subr.bf16.mxu0 0
    %104 = vmatpush1.bf16.msra.mxu0 0
    %105 = vmatprep.subr.bf16.mxu0 0
    %106 = vmatpush1.bf16.msra.mxu0 0
    %107 = vmatprep.subr.bf16.mxu0 0
    %108 = vmatpush1.bf16.msra.mxu0 0
    %109 = vmatprep.subr.bf16.mxu0 0
    %110 = vmatpush1.bf16.msra.mxu0 0
    %111 = vmatprep.subr.bf16.mxu0 0
    %112 = vmatpush1.bf16.msra.mxu0 0
    %113 = vmatprep.subr.bf16.mxu0 0
    %114 = vmatpush1.bf16.msra.mxu0 0
    %115 = vmatprep.subr.bf16.mxu0 0
    %116 = vmatpush1.bf16.msra.mxu0 0
    %117 = vmatprep.mubr.bf16.mxu0 0
    %118 = vmatmul.mubr.bf16.gmra.mrb[0].mxu0 %v83
    %v119 = vpop.f32.mrb[0].mxu0
    %v120 = vadd.f32 0.0, %v119
    %v121 = vpop.f32.mrb[0].mxu0
    %v122 = vpop.f32.mrb[0].mxu0
    %v123 = vpop.f32.mrb[0].mxu0
    %124 = vdwg.mxu0
    %v129 = vunpack.c.l.b16 %v61
    %v130 = vunpack.c.l.b16 %v62
    %v131 = vunpack.c.l.b16 %v63
    %v132 = vunpack.c.l.b16 %v64
    %v133 = vpack.c.b16 %v130, %v129
    %v134 = vpack.c.b16 %v132, %v131
    %v138 = vsel %vm81, %v60, 0
    %140 = vmatprep.subr.bf16.mxu0 0
    %141 = vmatpush1.bf16.msra.mxu0 %v133
    %142 = vmatprep.subr.bf16.mxu0 0
    %143 = vmatpush1.bf16.msra.mxu0 %v134
    %144 = vmatprep.subr.bf16.mxu0 0
    %145 = vmatpush1.bf16.msra.mxu0 0
    %146 = vmatprep.subr.bf16.mxu0 0
    %147 = vmatpush1.bf16.msra.mxu0 0
    %148 = vmatprep.subr.bf16.mxu0 0
    %149 = vmatpush1.bf16.msra.mxu0 0
    %150 = vmatprep.subr.bf16.mxu0 0
    %151 = vmatpush1.bf16.msra.mxu0 0
    %152 = vmatprep.subr.bf16.mxu0 0
    %153 = vmatpush1.bf16.msra.mxu0 0
    %154 = vmatprep.subr.bf16.mxu0 0
    %155 = vmatpush1.bf16.msra.mxu0 0
    %156 = vmatprep.subr.bf16.mxu0 0
    %157 = vmatpush1.bf16.msra.mxu0 0
    %158 = vmatprep.subr.bf16.mxu0 0
    %159 = vmatpush1.bf16.msra.mxu0 0
    %160 = vmatprep.subr.bf16.mxu0 0
    %161 = vmatpush1.bf16.msra.mxu0 0
    %162 = vmatprep.subr.bf16.mxu0 0
    %163 = vmatpush1.bf16.msra.mxu0 0
    %164 = vmatprep.subr.bf16.mxu0 0
    %165 = vmatpush1.bf16.msra.mxu0 0
    %166 = vmatprep.subr.bf16.mxu0 0
    %167 = vmatpush1.bf16.msra.mxu0 0
    %168 = vmatprep.subr.bf16.mxu0 0
    %169 = vmatpush1.bf16.msra.mxu0 0
    %170 = vmatprep.subr.bf16.mxu0 0
    %171 = vmatpush1.bf16.msra.mxu0 0
    %172 = vmatprep.mubr.bf16.mxu0 0
    %173 = vmatmul.mubr.bf16.gmra.mrb[0].mxu0 %v138
    %v174 = vpop.f32.mrb[0].mxu0
    %v175 = vadd.f32 %v120, %v174
    %v176 = vpop.f32.mrb[0].mxu0
    %v177 = vpop.f32.mrb[0].mxu0
    %v178 = vpop.f32.mrb[0].mxu0
    %179 = vdwg.mxu0
    %s180 = scalar_lea.vmem %s1, 16
    %v181 = vld [vmem:[%s180] sm:$0xf]
    %v182 = vld [vmem:[%s180 + $0x4] sm:$0xf]
    %v183 = vld [vmem:[%s180 + $0x8] sm:$0xf]
    %v184 = vld [vmem:[%s180 + $0xc] sm:$0xf]
    %s185 = scalar_lea.vmem [#allocation3], 16
    %v186 = vld [vmem:[%s185] sm:$0xf]
    %v187 = vld [vmem:[%s185 + $0x4] sm:$0xf]
    %v188 = vld [vmem:[%s185 + $0x8] sm:$0xf]
    %v189 = vld [vmem:[%s185 + $0xc] sm:$0xf]
    %v194 = vunpack.c.l.b16 %v186
    %v195 = vunpack.c.l.b16 %v187
    %v196 = vunpack.c.l.b16 %v188
    %v197 = vunpack.c.l.b16 %v189
    %v198 = vpack.c.b16 %v195, %v194
    %v199 = vpack.c.b16 %v197, %v196
    %202 = vmatprep.subr.bf16.mxu0 0
    %203 = vmatpush1.bf16.msra.mxu0 %v198
    %204 = vmatprep.subr.bf16.mxu0 0
    %205 = vmatpush1.bf16.msra.mxu0 %v199
    %206 = vmatprep.subr.bf16.mxu0 0
    %207 = vmatpush1.bf16.msra.mxu0 0
    %208 = vmatprep.subr.bf16.mxu0 0
    %209 = vmatpush1.bf16.msra.mxu0 0
    %210 = vmatprep.subr.bf16.mxu0 0
    %211 = vmatpush1.bf16.msra.mxu0 0
    %212 = vmatprep.subr.bf16.mxu0 0
    %213 = vmatpush1.bf16.msra.mxu0 0
    %214 = vmatprep.subr.bf16.mxu0 0
    %215 = vmatpush1.bf16.msra.mxu0 0
    %216 = vmatprep.subr.bf16.mxu0 0
    %217 = vmatpush1.bf16.msra.mxu0 0
    %218 = vmatprep.subr.bf16.mxu0 0
    %219 = vmatpush1.bf16.msra.mxu0 0
    %220 = vmatprep.subr.bf16.mxu0 0
    %221 = vmatpush1.bf16.msra.mxu0 0
    %222 = vmatprep.subr.bf16.mxu0 0
    %223 = vmatpush1.bf16.msra.mxu0 0
    %224 = vmatprep.subr.bf16.mxu0 0
    %225 = vmatpush1.bf16.msra.mxu0 0
    %226 = vmatprep.subr.bf16.mxu0 0
    %227 = vmatpush1.bf16.msra.mxu0 0
    %228 = vmatprep.subr.bf16.mxu0 0
    %229 = vmatpush1.bf16.msra.mxu0 0
    %230 = vmatprep.subr.bf16.mxu0 0
    %231 = vmatpush1.bf16.msra.mxu0 0
    %232 = vmatprep.subr.bf16.mxu0 0
    %233 = vmatpush1.bf16.msra.mxu0 0
    %234 = vmatprep.mubr.bf16.mxu0 0
    %235 = vmatmul.mubr.bf16.gmra.mrb[0].mxu0 %v83
    %v236 = vpop.f32.mrb[0].mxu0
    %v237 = vadd.f32 0.0, %v236
    %v238 = vpop.f32.mrb[0].mxu0
    %v239 = vpop.f32.mrb[0].mxu0
    %v240 = vpop.f32.mrb[0].mxu0
    %241 = vdwg.mxu0
    %v246 = vunpack.c.l.b16 %v181
    %v247 = vunpack.c.l.b16 %v182
    %v248 = vunpack.c.l.b16 %v183
    %v249 = vunpack.c.l.b16 %v184
    %v250 = vpack.c.b16 %v247, %v246
    %v251 = vpack.c.b16 %v249, %v248
    %254 = vmatprep.subr.bf16.mxu0 0
    %255 = vmatpush1.bf16.msra.mxu0 %v250
    %256 = vmatprep.subr.bf16.mxu0 0
    %257 = vmatpush1.bf16.msra.mxu0 %v251
    %258 = vmatprep.subr.bf16.mxu0 0
    %259 = vmatpush1.bf16.msra.mxu0 0
    %260 = vmatprep.subr.bf16.mxu0 0
    %261 = vmatpush1.bf16.msra.mxu0 0
    %262 = vmatprep.subr.bf16.mxu0 0
    %263 = vmatpush1.bf16.msra.mxu0 0
    %264 = vmatprep.subr.bf16.mxu0 0
    %265 = vmatpush1.bf16.msra.mxu0 0
    %266 = vmatprep.subr.bf16.mxu0 0
    %267 = vmatpush1.bf16.msra.mxu0 0
    %268 = vmatprep.subr.bf16.mxu0 0
    %269 = vmatpush1.bf16.msra.mxu0 0
    %270 = vmatprep.subr.bf16.mxu0 0
    %271 = vmatpush1.bf16.msra.mxu0 0
    %272 = vmatprep.subr.bf16.mxu0 0
    %273 = vmatpush1.bf16.msra.mxu0 0
    %274 = vmatprep.subr.bf16.mxu0 0
    %275 = vmatpush1.bf16.msra.mxu0 0
    %276 = vmatprep.subr.bf16.mxu0 0
    %277 = vmatpush1.bf16.msra.mxu0 0
    %278 = vmatprep.subr.bf16.mxu0 0
    %279 = vmatpush1.bf16.msra.mxu0 0
    %280 = vmatprep.subr.bf16.mxu0 0
    %281 = vmatpush1.bf16.msra.mxu0 0
    %282 = vmatprep.subr.bf16.mxu0 0
    %283 = vmatpush1.bf16.msra.mxu0 0
    %284 = vmatprep.subr.bf16.mxu0 0
    %285 = vmatpush1.bf16.msra.mxu0 0
    %286 = vmatprep.mubr.bf16.mxu0 0
    %287 = vmatmul.mubr.bf16.gmra.mrb[0].mxu0 %v138
    %v288 = vpop.f32.mrb[0].mxu0
    %v289 = vadd.f32 %v237, %v288
    %v290 = vpop.f32.mrb[0].mxu0
    %v291 = vpop.f32.mrb[0].mxu0
    %v292 = vpop.f32.mrb[0].mxu0
    %293 = vdwg.mxu0
    %v294 = vsel %vm50, %v289, %v175
    %s295 = scalar_lea.vmem %s1, 32
    %v296 = vld [vmem:[%s295] sm:$0xf]
    %v297 = vld [vmem:[%s295 + $0x4] sm:$0xf]
    %v298 = vld [vmem:[%s295 + $0x8] sm:$0xf]
    %v299 = vld [vmem:[%s295 + $0xc] sm:$0xf]
    %s300 = scalar_lea.vmem [#allocation3], 32
    %v301 = vld [vmem:[%s300] sm:$0xf]
    %v302 = vld [vmem:[%s300 + $0x4] sm:$0xf]
    %v303 = vld [vmem:[%s300 + $0x8] sm:$0xf]
    %v304 = vld [vmem:[%s300 + $0xc] sm:$0xf]
    %v309 = vunpack.c.l.b16 %v301
    %v310 = vunpack.c.l.b16 %v302
    %v311 = vunpack.c.l.b16 %v303
    %v312 = vunpack.c.l.b16 %v304
    %v313 = vpack.c.b16 %v310, %v309
    %v314 = vpack.c.b16 %v312, %v311
    %317 = vmatprep.subr.bf16.mxu0 0
    %318 = vmatpush1.bf16.msra.mxu0 %v313
    %319 = vmatprep.subr.bf16.mxu0 0
    %320 = vmatpush1.bf16.msra.mxu0 %v314
    %321 = vmatprep.subr.bf16.mxu0 0
    %322 = vmatpush1.bf16.msra.mxu0 0
    %323 = vmatprep.subr.bf16.mxu0 0
    %324 = vmatpush1.bf16.msra.mxu0 0
    %325 = vmatprep.subr.bf16.mxu0 0
    %326 = vmatpush1.bf16.msra.mxu0 0
    %327 = vmatprep.subr.bf16.mxu0 0
    %328 = vmatpush1.bf16.msra.mxu0 0
    %329 = vmatprep.subr.bf16.mxu0 0
    %330 = vmatpush1.bf16.msra.mxu0 0
    %331 = vmatprep.subr.bf16.mxu0 0
    %332 = vmatpush1.bf16.msra.mxu0 0
    %333 = vmatprep.subr.bf16.mxu0 0
    %334 = vmatpush1.bf16.msra.mxu0 0
    %335 = vmatprep.subr.bf16.mxu0 0
    %336 = vmatpush1.bf16.msra.mxu0 0
    %337 = vmatprep.subr.bf16.mxu0 0
    %338 = vmatpush1.bf16.msra.mxu0 0
    %339 = vmatprep.subr.bf16.mxu0 0
    %340 = vmatpush1.bf16.msra.mxu0 0
    %341 = vmatprep.subr.bf16.mxu0 0
    %342 = vmatpush1.bf16.msra.mxu0 0
    %343 = vmatprep.subr.bf16.mxu0 0
    %344 = vmatpush1.bf16.msra.mxu0 0
    %345 = vmatprep.subr.bf16.mxu0 0
    %346 = vmatpush1.bf16.msra.mxu0 0
    %347 = vmatprep.subr.bf16.mxu0 0
    %348 = vmatpush1.bf16.msra.mxu0 0
    %349 = vmatprep.mubr.bf16.mxu0 0
    %350 = vmatmul.mubr.bf16.gmra.mrb[0].mxu0 %v83
    %v351 = vpop.f32.mrb[0].mxu0
    %v352 = vadd.f32 0.0, %v351
    %v353 = vpop.f32.mrb[0].mxu0
    %v354 = vpop.f32.mrb[0].mxu0
    %v355 = vpop.f32.mrb[0].mxu0
    %356 = vdwg.mxu0
    %v361 = vunpack.c.l.b16 %v296
    %v362 = vunpack.c.l.b16 %v297
    %v363 = vunpack.c.l.b16 %v298
    %v364 = vunpack.c.l.b16 %v299
    %v365 = vpack.c.b16 %v362, %v361
    %v366 = vpack.c.b16 %v364, %v363
    %369 = vmatprep.subr.bf16.mxu0 0
    %370 = vmatpush1.bf16.msra.mxu0 %v365
    %371 = vmatprep.subr.bf16.mxu0 0
    %372 = vmatpush1.bf16.msra.mxu0 %v366
    %373 = vmatprep.subr.bf16.mxu0 0
    %374 = vmatpush1.bf16.msra.mxu0 0
    %375 = vmatprep.subr.bf16.mxu0 0
    %376 = vmatpush1.bf16.msra.mxu0 0
    %377 = vmatprep.subr.bf16.mxu0 0
    %378 = vmatpush1.bf16.msra.mxu0 0
    %379 = vmatprep.subr.bf16.mxu0 0
    %380 = vmatpush1.bf16.msra.mxu0 0
    %381 = vmatprep.subr.bf16.mxu0 0
    %382 = vmatpush1.bf16.msra.mxu0 0
    %383 = vmatprep.subr.bf16.mxu0 0
    %384 = vmatpush1.bf16.msra.mxu0 0
    %385 = vmatprep.subr.bf16.mxu0 0
    %386 = vmatpush1.bf16.msra.mxu0 0
    %387 = vmatprep.subr.bf16.mxu0 0
    %388 = vmatpush1.bf16.msra.mxu0 0
    %389 = vmatprep.subr.bf16.mxu0 0
    %390 = vmatpush1.bf16.msra.mxu0 0
    %391 = vmatprep.subr.bf16.mxu0 0
    %392 = vmatpush1.bf16.msra.mxu0 0
    %393 = vmatprep.subr.bf16.mxu0 0
    %394 = vmatpush1.bf16.msra.mxu0 0
    %395 = vmatprep.subr.bf16.mxu0 0
    %396 = vmatpush1.bf16.msra.mxu0 0
    %397 = vmatprep.subr.bf16.mxu0 0
    %398 = vmatpush1.bf16.msra.mxu0 0
    %399 = vmatprep.subr.bf16.mxu0 0
    %400 = vmatpush1.bf16.msra.mxu0 0
    %401 = vmatprep.mubr.bf16.mxu0 0
    %402 = vmatmul.mubr.bf16.gmra.mrb[0].mxu0 %v138
    %v403 = vpop.f32.mrb[0].mxu0
    %v404 = vadd.f32 %v352, %v403
    %v405 = vpop.f32.mrb[0].mxu0
    %v406 = vpop.f32.mrb[0].mxu0
    %v407 = vpop.f32.mrb[0].mxu0
    %408 = vdwg.mxu0
    %v409 = vsel %vm53, %v404, %v294
    %s410 = scalar_lea.vmem %s1, 48
    %v411 = vld [vmem:[%s410] sm:$0xf]
    %v412 = vld [vmem:[%s410 + $0x4] sm:$0xf]
    %v413 = vld [vmem:[%s410 + $0x8] sm:$0xf]
    %v414 = vld [vmem:[%s410 + $0xc] sm:$0xf]
    %s415 = scalar_lea.vmem [#allocation3], 48
    %v416 = vld [vmem:[%s415] sm:$0xf]
    %v417 = vld [vmem:[%s415 + $0x4] sm:$0xf]
    %v418 = vld [vmem:[%s415 + $0x8] sm:$0xf]
    %v419 = vld [vmem:[%s415 + $0xc] sm:$0xf]
    %v424 = vunpack.c.l.b16 %v416
    %v425 = vunpack.c.l.b16 %v417
    %v426 = vunpack.c.l.b16 %v418
    %v427 = vunpack.c.l.b16 %v419
    %v428 = vpack.c.b16 %v425, %v424
    %v429 = vpack.c.b16 %v427, %v426
    %432 = vmatprep.subr.bf16.mxu0 0
    %433 = vmatpush1.bf16.msra.mxu0 %v428
    %434 = vmatprep.subr.bf16.mxu0 0
    %435 = vmatpush1.bf16.msra.mxu0 %v429
    %436 = vmatprep.subr.bf16.mxu0 0
    %437 = vmatpush1.bf16.msra.mxu0 0
    %438 = vmatprep.subr.bf16.mxu0 0
    %439 = vmatpush1.bf16.msra.mxu0 0
    %440 = vmatprep.subr.bf16.mxu0 0
    %441 = vmatpush1.bf16.msra.mxu0 0
    %442 = vmatprep.subr.bf16.mxu0 0
    %443 = vmatpush1.bf16.msra.mxu0 0
    %444 = vmatprep.subr.bf16.mxu0 0
    %445 = vmatpush1.bf16.msra.mxu0 0
    %446 = vmatprep.subr.bf16.mxu0 0
    %447 = vmatpush1.bf16.msra.mxu0 0
    %448 = vmatprep.subr.bf16.mxu0 0
    %449 = vmatpush1.bf16.msra.mxu0 0
    %450 = vmatprep.subr.bf16.mxu0 0
    %451 = vmatpush1.bf16.msra.mxu0 0
    %452 = vmatprep.subr.bf16.mxu0 0
    %453 = vmatpush1.bf16.msra.mxu0 0
    %454 = vmatprep.subr.bf16.mxu0 0
    %455 = vmatpush1.bf16.msra.mxu0 0
    %456 = vmatprep.subr.bf16.mxu0 0
    %457 = vmatpush1.bf16.msra.mxu0 0
    %458 = vmatprep.subr.bf16.mxu0 0
    %459 = vmatpush1.bf16.msra.mxu0 0
    %460 = vmatprep.subr.bf16.mxu0 0
    %461 = vmatpush1.bf16.msra.mxu0 0
    %462 = vmatprep.subr.bf16.mxu0 0
    %463 = vmatpush1.bf16.msra.mxu0 0
    %464 = vmatprep.mubr.bf16.mxu0 0
    %465 = vmatmul.mubr.bf16.gmra.mrb[0].mxu0 %v83
    %v466 = vpop.f32.mrb[0].mxu0
    %v467 = vadd.f32 0.0, %v466
    %v468 = vpop.f32.mrb[0].mxu0
    %v469 = vpop.f32.mrb[0].mxu0
    %v470 = vpop.f32.mrb[0].mxu0
    %471 = vdwg.mxu0
    %v476 = vunpack.c.l.b16 %v411
    %v477 = vunpack.c.l.b16 %v412
    %v478 = vunpack.c.l.b16 %v413
    %v479 = vunpack.c.l.b16 %v414
    %v480 = vpack.c.b16 %v477, %v476
    %v481 = vpack.c.b16 %v479, %v478
    %484 = vmatprep.subr.bf16.mxu0 0
    %485 = vmatpush1.bf16.msra.mxu0 %v480
    %486 = vmatprep.subr.bf16.mxu0 0
    %487 = vmatpush1.bf16.msra.mxu0 %v481
    %488 = vmatprep.subr.bf16.mxu0 0
    %489 = vmatpush1.bf16.msra.mxu0 0
    %490 = vmatprep.subr.bf16.mxu0 0
    %491 = vmatpush1.bf16.msra.mxu0 0
    %492 = vmatprep.subr.bf16.mxu0 0
    %493 = vmatpush1.bf16.msra.mxu0 0
    %494 = vmatprep.subr.bf16.mxu0 0
    %495 = vmatpush1.bf16.msra.mxu0 0
    %496 = vmatprep.subr.bf16.mxu0 0
    %497 = vmatpush1.bf16.msra.mxu0 0
    %498 = vmatprep.subr.bf16.mxu0 0
    %499 = vmatpush1.bf16.msra.mxu0 0
    %500 = vmatprep.subr.bf16.mxu0 0
    %501 = vmatpush1.bf16.msra.mxu0 0
    %502 = vmatprep.subr.bf16.mxu0 0
    %503 = vmatpush1.bf16.msra.mxu0 0
    %504 = vmatprep.subr.bf16.mxu0 0
    %505 = vmatpush1.bf16.msra.mxu0 0
    %506 = vmatprep.subr.bf16.mxu0 0
    %507 = vmatpush1.bf16.msra.mxu0 0
    %508 = vmatprep.subr.bf16.mxu0 0
    %509 = vmatpush1.bf16.msra.mxu0 0
    %510 = vmatprep.subr.bf16.mxu0 0
    %511 = vmatpush1.bf16.msra.mxu0 0
    %512 = vmatprep.subr.bf16.mxu0 0
    %513 = vmatpush1.bf16.msra.mxu0 0
    %514 = vmatprep.subr.bf16.mxu0 0
    %515 = vmatpush1.bf16.msra.mxu0 0
    %516 = vmatprep.mubr.bf16.mxu0 0
    %517 = vmatmul.mubr.bf16.gmra.mrb[0].mxu0 %v138
    %v518 = vpop.f32.mrb[0].mxu0
    %v519 = vadd.f32 %v467, %v518
    %v520 = vpop.f32.mrb[0].mxu0
    %v521 = vpop.f32.mrb[0].mxu0
    %v522 = vpop.f32.mrb[0].mxu0
    %523 = vdwg.mxu0
    %v524 = vsel %vm56, %v519, %v409
    %v525 = vadd.f32 %v524, %v40
    %v526 = vtanh.pop %v525
    %v527 = vxor.u32 %v525, 2147483648
    %v528 = vmul.f32 %v527, 1.442695
    %v529 = vpow.pop %v528
    %v530 = vadd.f32 %v529, 1.0
    %v531 = vrcp.pop %v530
    %v532 = vmul.f32 1.0, %v531
    %v533 = vsel %vm45, %v526, %v532
    %v534 = vmul.f32 %v533, 0.0
    %536 = vrot.lane.b32.xlu0 %v533, 64
    %v537 = vpop.permute.xlu0 %536
    %v539 = vmul.f32 %v533, %v537
    %541 = vrot.lane.b32.xlu0 %v539, 32
    %v542 = vpop.permute.xlu0 %541
    %v544 = vadd.f32 %v534, %v542
    %v545 = vtanh.pop %v544
    %547 = vrot.lane.b32.xlu0 %v545, 64
    %v548 = vpop.permute.xlu0 %547
    %v550 = vmul.f32 %v533, %v548
    %v551 = vsel %vm57, %v550, 0.0
    %v552 = vsel %vm57, %v544, 0.0
    %s553 = scalar_lea.vmem %s0, 8
    %v554 = vld [vmem:[%s553] sm:$0xff]
    %556 = vrot.lane.b32.xlu0 %v551, 32
    %v557 = vpop.permute.xlu0 %556
    %v559 = vrot.slane %v557, 6
    %v560 = vsel %vm57, %v554, %v559
    %v561 = vpack.c.bf16 %v560, %v560
    %v562 = vpack.c.bf16 %v551, %v551
    %564 = vrot.lane.b32.xlu0 %v562, 32
    %v565 = vpop.permute.xlu0 %564
    %v567 = vsel %vm81, %v565, 0
    %569 = vmatprep.subr.bf16.mxu0 0
    %570 = vmatpush1.bf16.msra.mxu0 %v77
    %571 = vmatprep.subr.bf16.mxu0 0
    %572 = vmatpush1.bf16.msra.mxu0 %v78
    %573 = vmatprep.subr.bf16.mxu0 0
    %574 = vmatpush1.bf16.msra.mxu0 0
    %575 = vmatprep.subr.bf16.mxu0 0
    %576 = vmatpush1.bf16.msra.mxu0 0
    %577 = vmatprep.subr.bf16.mxu0 0
    %578 = vmatpush1.bf16.msra.mxu0 0
    %579 = vmatprep.subr.bf16.mxu0 0
    %580 = vmatpush1.bf16.msra.mxu0 0
    %581 = vmatprep.subr.bf16.mxu0 0
    %582 = vmatpush1.bf16.msra.mxu0 0
    %583 = vmatprep.subr.bf16.mxu0 0
    %584 = vmatpush1.bf16.msra.mxu0 0
    %585 = vmatprep.subr.bf16.mxu0 0
    %586 = vmatpush1.bf16.msra.mxu0 0
    %587 = vmatprep.subr.bf16.mxu0 0
    %588 = vmatpush1.bf16.msra.mxu0 0
    %589 = vmatprep.subr.bf16.mxu0 0
    %590 = vmatpush1.bf16.msra.mxu0 0
    %591 = vmatprep.subr.bf16.mxu0 0
    %592 = vmatpush1.bf16.msra.mxu0 0
    %593 = vmatprep.subr.bf16.mxu0 0
    %594 = vmatpush1.bf16.msra.mxu0 0
    %595 = vmatprep.subr.bf16.mxu0 0
    %596 = vmatpush1.bf16.msra.mxu0 0
    %597 = vmatprep.subr.bf16.mxu0 0
    %598 = vmatpush1.bf16.msra.mxu0 0
    %599 = vmatprep.subr.bf16.mxu0 0
    %600 = vmatpush1.bf16.msra.mxu0 0
    %601 = vmatprep.mubr.bf16.mxu0 0
    %602 = vmatmul.mubr.bf16.gmra.mrb[0].mxu0 %v567
    %v603 = vpop.f32.mrb[0].mxu0
    %v604 = vadd.f32 0.0, %v603
    %v605 = vpop.f32.mrb[0].mxu0
    %v606 = vpop.f32.mrb[0].mxu0
    %v607 = vpop.f32.mrb[0].mxu0
    %608 = vdwg.mxu0
    %v610 = vsel %vm81, %v561, 0
    %612 = vmatprep.subr.bf16.mxu0 0
    %613 = vmatpush1.bf16.msra.mxu0 %v133
    %614 = vmatprep.subr.bf16.mxu0 0
    %615 = vmatpush1.bf16.msra.mxu0 %v134
    %616 = vmatprep.subr.bf16.mxu0 0
    %617 = vmatpush1.bf16.msra.mxu0 0
    %618 = vmatprep.subr.bf16.mxu0 0
    %619 = vmatpush1.bf16.msra.mxu0 0
    %620 = vmatprep.subr.bf16.mxu0 0
    %621 = vmatpush1.bf16.msra.mxu0 0
    %622 = vmatprep.subr.bf16.mxu0 0
    %623 = vmatpush1.bf16.msra.mxu0 0
    %624 = vmatprep.subr.bf16.mxu0 0
    %625 = vmatpush1.bf16.msra.mxu0 0
    %626 = vmatprep.subr.bf16.mxu0 0
    %627 = vmatpush1.bf16.msra.mxu0 0
    %628 = vmatprep.subr.bf16.mxu0 0
    %629 = vmatpush1.bf16.msra.mxu0 0
    %630 = vmatprep.subr.bf16.mxu0 0
    %631 = vmatpush1.bf16.msra.mxu0 0
    %632 = vmatprep.subr.bf16.mxu0 0
    %633 = vmatpush1.bf16.msra.mxu0 0
    %634 = vmatprep.subr.bf16.mxu0 0
    %635 = vmatpush1.bf16.msra.mxu0 0
    %636 = vmatprep.subr.bf16.mxu0 0
    %637 = vmatpush1.bf16.msra.mxu0 0
    %638 = vmatprep.subr.bf16.mxu0 0
    %639 = vmatpush1.bf16.msra.mxu0 0
    %640 = vmatprep.subr.bf16.mxu0 0
    %641 = vmatpush1.bf16.msra.mxu0 0
    %642 = vmatprep.subr.bf16.mxu0 0
    %643 = vmatpush1.bf16.msra.mxu0 0
    %644 = vmatprep.mubr.bf16.mxu0 0
    %645 = vmatmul.mubr.bf16.gmra.mrb[0].mxu0 %v610
    %v646 = vpop.f32.mrb[0].mxu0
    %v647 = vadd.f32 %v604, %v646
    %v648 = vpop.f32.mrb[0].mxu0
    %v649 = vpop.f32.mrb[0].mxu0
    %v650 = vpop.f32.mrb[0].mxu0
    %651 = vdwg.mxu0
    %652 = vmatprep.subr.bf16.mxu0 0
    %653 = vmatpush1.bf16.msra.mxu0 %v198
    %654 = vmatprep.subr.bf16.mxu0 0
    %655 = vmatpush1.bf16.msra.mxu0 %v199
    %656 = vmatprep.subr.bf16.mxu0 0
    %657 = vmatpush1.bf16.msra.mxu0 0
    %658 = vmatprep.subr.bf16.mxu0 0
    %659 = vmatpush1.bf16.msra.mxu0 0
    %660 = vmatprep.subr.bf16.mxu0 0
    %661 = vmatpush1.bf16.msra.mxu0 0
    %662 = vmatprep.subr.bf16.mxu0 0
    %663 = vmatpush1.bf16.msra.mxu0 0
    %664 = vmatprep.subr.bf16.mxu0 0
    %665 = vmatpush1.bf16.msra.mxu0 0
    %666 = vmatprep.subr.bf16.mxu0 0
    %667 = vmatpush1.bf16.msra.mxu0 0
    %668 = vmatprep.subr.bf16.mxu0 0
    %669 = vmatpush1.bf16.msra.mxu0 0
    %670 = vmatprep.subr.bf16.mxu0 0
    %671 = vmatpush1.bf16.msra.mxu0 0
    %672 = vmatprep.subr.bf16.mxu0 0
    %673 = vmatpush1.bf16.msra.mxu0 0
    %674 = vmatprep.subr.bf16.mxu0 0
    %675 = vmatpush1.bf16.msra.mxu0 0
    %676 = vmatprep.subr.bf16.mxu0 0
    %677 = vmatpush1.bf16.msra.mxu0 0
    %678 = vmatprep.subr.bf16.mxu0 0
    %679 = vmatpush1.bf16.msra.mxu0 0
    %680 = vmatprep.subr.bf16.mxu0 0
    %681 = vmatpush1.bf16.msra.mxu0 0
    %682 = vmatprep.subr.bf16.mxu0 0
    %683 = vmatpush1.bf16.msra.mxu0 0
    %684 = vmatprep.mubr.bf16.mxu0 0
    %685 = vmatmul.mubr.bf16.gmra.mrb[0].mxu0 %v567
    %v686 = vpop.f32.mrb[0].mxu0
    %v687 = vadd.f32 0.0, %v686
    %v688 = vpop.f32.mrb[0].mxu0
    %v689 = vpop.f32.mrb[0].mxu0
    %v690 = vpop.f32.mrb[0].mxu0
    %691 = vdwg.mxu0
    %692 = vmatprep.subr.bf16.mxu0 0
    %693 = vmatpush1.bf16.msra.mxu0 %v250
    %694 = vmatprep.subr.bf16.mxu0 0
    %695 = vmatpush1.bf16.msra.mxu0 %v251
    %696 = vmatprep.subr.bf16.mxu0 0
    %697 = vmatpush1.bf16.msra.mxu0 0
    %698 = vmatprep.subr.bf16.mxu0 0
    %699 = vmatpush1.bf16.msra.mxu0 0
    %700 = vmatprep.subr.bf16.mxu0 0
    %701 = vmatpush1.bf16.msra.mxu0 0
    %702 = vmatprep.subr.bf16.mxu0 0
    %703 = vmatpush1.bf16.msra.mxu0 0
    %704 = vmatprep.subr.bf16.mxu0 0
    %705 = vmatpush1.bf16.msra.mxu0 0
    %706 = vmatprep.subr.bf16.mxu0 0
    %707 = vmatpush1.bf16.msra.mxu0 0
    %708 = vmatprep.subr.bf16.mxu0 0
    %709 = vmatpush1.bf16.msra.mxu0 0
    %710 = vmatprep.subr.bf16.mxu0 0
    %711 = vmatpush1.bf16.msra.mxu0 0
    %712 = vmatprep.subr.bf16.mxu0 0
    %713 = vmatpush1.bf16.msra.mxu0 0
    %714 = vmatprep.subr.bf16.mxu0 0
    %715 = vmatpush1.bf16.msra.mxu0 0
    %716 = vmatprep.subr.bf16.mxu0 0
    %717 = vmatpush1.bf16.msra.mxu0 0
    %718 = vmatprep.subr.bf16.mxu0 0
    %719 = vmatpush1.bf16.msra.mxu0 0
    %720 = vmatprep.subr.bf16.mxu0 0
    %721 = vmatpush1.bf16.msra.mxu0 0
    %722 = vmatprep.subr.bf16.mxu0 0
    %723 = vmatpush1.bf16.msra.mxu0 0
    %724 = vmatprep.mubr.bf16.mxu0 0
    %725 = vmatmul.mubr.bf16.gmra.mrb[0].mxu0 %v610
    %v726 = vpop.f32.mrb[0].mxu0
    %v727 = vadd.f32 %v687, %v726
    %v728 = vpop.f32.mrb[0].mxu0
    %v729 = vpop.f32.mrb[0].mxu0
    %v730 = vpop.f32.mrb[0].mxu0
    %731 = vdwg.mxu0
    %v732 = vsel %vm50, %v727, %v647
    %733 = vmatprep.subr.bf16.mxu0 0
    %734 = vmatpush1.bf16.msra.mxu0 %v313
    %735 = vmatprep.subr.bf16.mxu0 0
    %736 = vmatpush1.bf16.msra.mxu0 %v314
    %737 = vmatprep.subr.bf16.mxu0 0
    %738 = vmatpush1.bf16.msra.mxu0 0
    %739 = vmatprep.subr.bf16.mxu0 0
    %740 = vmatpush1.bf16.msra.mxu0 0
    %741 = vmatprep.subr.bf16.mxu0 0
    %742 = vmatpush1.bf16.msra.mxu0 0
    %743 = vmatprep.subr.bf16.mxu0 0
    %744 = vmatpush1.bf16.msra.mxu0 0
    %745 = vmatprep.subr.bf16.mxu0 0
    %746 = vmatpush1.bf16.msra.mxu0 0
    %747 = vmatprep.subr.bf16.mxu0 0
    %748 = vmatpush1.bf16.msra.mxu0 0
    %749 = vmatprep.subr.bf16.mxu0 0
    %750 = vmatpush1.bf16.msra.mxu0 0
    %751 = vmatprep.subr.bf16.mxu0 0
    %752 = vmatpush1.bf16.msra.mxu0 0
    %753 = vmatprep.subr.bf16.mxu0 0
    %754 = vmatpush1.bf16.msra.mxu0 0
    %755 = vmatprep.subr.bf16.mxu0 0
    %756 = vmatpush1.bf16.msra.mxu0 0
    %757 = vmatprep.subr.bf16.mxu0 0
    %758 = vmatpush1.bf16.msra.mxu0 0
    %759 = vmatprep.subr.bf16.mxu0 0
    %760 = vmatpush1.bf16.msra.mxu0 0
    %761 = vmatprep.subr.bf16.mxu0 0
    %762 = vmatpush1.bf16.msra.mxu0 0
    %763 = vmatprep.subr.bf16.mxu0 0
    %764 = vmatpush1.bf16.msra.mxu0 0
    %765 = vmatprep.mubr.bf16.mxu0 0
    %766 = vmatmul.mubr.bf16.gmra.mrb[0].mxu0 %v567
    %v767 = vpop.f32.mrb[0].mxu0
    %v768 = vadd.f32 0.0, %v767
    %v769 = vpop.f32.mrb[0].mxu0
    %v770 = vpop.f32.mrb[0].mxu0
    %v771 = vpop.f32.mrb[0].mxu0
    %772 = vdwg.mxu0
    %773 = vmatprep.subr.bf16.mxu0 0
    %774 = vmatpush1.bf16.msra.mxu0 %v365
    %775 = vmatprep.subr.bf16.mxu0 0
    %776 = vmatpush1.bf16.msra.mxu0 %v366
    %777 = vmatprep.subr.bf16.mxu0 0
    %778 = vmatpush1.bf16.msra.mxu0 0
    %779 = vmatprep.subr.bf16.mxu0 0
    %780 = vmatpush1.bf16.msra.mxu0 0
    %781 = vmatprep.subr.bf16.mxu0 0
    %782 = vmatpush1.bf16.msra.mxu0 0
    %783 = vmatprep.subr.bf16.mxu0 0
    %784 = vmatpush1.bf16.msra.mxu0 0
    %785 = vmatprep.subr.bf16.mxu0 0
    %786 = vmatpush1.bf16.msra.mxu0 0
    %787 = vmatprep.subr.bf16.mxu0 0
    %788 = vmatpush1.bf16.msra.mxu0 0
    %789 = vmatprep.subr.bf16.mxu0 0
    %790 = vmatpush1.bf16.msra.mxu0 0
    %791 = vmatprep.subr.bf16.mxu0 0
    %792 = vmatpush1.bf16.msra.mxu0 0
    %793 = vmatprep.subr.bf16.mxu0 0
    %794 = vmatpush1.bf16.msra.mxu0 0
    %795 = vmatprep.subr.bf16.mxu0 0
    %796 = vmatpush1.bf16.msra.mxu0 0
    %797 = vmatprep.subr.bf16.mxu0 0
    %798 = vmatpush1.bf16.msra.mxu0 0
    %799 = vmatprep.subr.bf16.mxu0 0
    %800 = vmatpush1.bf16.msra.mxu0 0
    %801 = vmatprep.subr.bf16.mxu0 0
    %802 = vmatpush1.bf16.msra.mxu0 0
    %803 = vmatprep.subr.bf16.mxu0 0
    %804 = vmatpush1.bf16.msra.mxu0 0
    %805 = vmatprep.mubr.bf16.mxu0 0
    %806 = vmatmul.mubr.bf16.gmra.mrb[0].mxu0 %v610
    %v807 = vpop.f32.mrb[0].mxu0
    %v808 = vadd.f32 %v768, %v807
    %v809 = vpop.f32.mrb[0].mxu0
    %v810 = vpop.f32.mrb[0].mxu0
    %v811 = vpop.f32.mrb[0].mxu0
    %812 = vdwg.mxu0
    %v813 = vsel %vm53, %v808, %v732
    %814 = vmatprep.subr.bf16.mxu0 0
    %815 = vmatpush1.bf16.msra.mxu0 %v428
    %816 = vmatprep.subr.bf16.mxu0 0
    %817 = vmatpush1.bf16.msra.mxu0 %v429
    %818 = vmatprep.subr.bf16.mxu0 0
    %819 = vmatpush1.bf16.msra.mxu0 0
    %820 = vmatprep.subr.bf16.mxu0 0
    %821 = vmatpush1.bf16.msra.mxu0 0
    %822 = vmatprep.subr.bf16.mxu0 0
    %823 = vmatpush1.bf16.msra.mxu0 0
    %824 = vmatprep.subr.bf16.mxu0 0
    %825 = vmatpush1.bf16.msra.mxu0 0
    %826 = vmatprep.subr.bf16.mxu0 0
    %827 = vmatpush1.bf16.msra.mxu0 0
    %828 = vmatprep.subr.bf16.mxu0 0
    %829 = vmatpush1.bf16.msra.mxu0 0
    %830 = vmatprep.subr.bf16.mxu0 0
    %831 = vmatpush1.bf16.msra.mxu0 0
    %832 = vmatprep.subr.bf16.mxu0 0
    %833 = vmatpush1.bf16.msra.mxu0 0
    %834 = vmatprep.subr.bf16.mxu0 0
    %835 = vmatpush1.bf16.msra.mxu0 0
    %836 = vmatprep.subr.bf16.mxu0 0
    %837 = vmatpush1.bf16.msra.mxu0 0
    %838 = vmatprep.subr.bf16.mxu0 0
    %839 = vmatpush1.bf16.msra.mxu0 0
    %840 = vmatprep.subr.bf16.mxu0 0
    %841 = vmatpush1.bf16.msra.mxu0 0
    %842 = vmatprep.subr.bf16.mxu0 0
    %843 = vmatpush1.bf16.msra.mxu0 0
    %844 = vmatprep.subr.bf16.mxu0 0
    %845 = vmatpush1.bf16.msra.mxu0 0
    %846 = vmatprep.mubr.bf16.mxu0 0
    %847 = vmatmul.mubr.bf16.gmra.mrb[0].mxu0 %v567
    %v848 = vpop.f32.mrb[0].mxu0
    %v849 = vadd.f32 0.0, %v848
    %v850 = vpop.f32.mrb[0].mxu0
    %v851 = vpop.f32.mrb[0].mxu0
    %v852 = vpop.f32.mrb[0].mxu0
    %853 = vdwg.mxu0
    %854 = vmatprep.subr.bf16.mxu0 0
    %855 = vmatpush1.bf16.msra.mxu0 %v480
    %856 = vmatprep.subr.bf16.mxu0 0
    %857 = vmatpush1.bf16.msra.mxu0 %v481
    %858 = vmatprep.subr.bf16.mxu0 0
    %859 = vmatpush1.bf16.msra.mxu0 0
    %860 = vmatprep.subr.bf16.mxu0 0
    %861 = vmatpush1.bf16.msra.mxu0 0
    %862 = vmatprep.subr.bf16.mxu0 0
    %863 = vmatpush1.bf16.msra.mxu0 0
    %864 = vmatprep.subr.bf16.mxu0 0
    %865 = vmatpush1.bf16.msra.mxu0 0
    %866 = vmatprep.subr.bf16.mxu0 0
    %867 = vmatpush1.bf16.msra.mxu0 0
    %868 = vmatprep.subr.bf16.mxu0 0
    %869 = vmatpush1.bf16.msra.mxu0 0
    %870 = vmatprep.subr.bf16.mxu0 0
    %871 = vmatpush1.bf16.msra.mxu0 0
    %872 = vmatprep.subr.bf16.mxu0 0
    %873 = vmatpush1.bf16.msra.mxu0 0
    %874 = vmatprep.subr.bf16.mxu0 0
    %875 = vmatpush1.bf16.msra.mxu0 0
    %876 = vmatprep.subr.bf16.mxu0 0
    %877 = vmatpush1.bf16.msra.mxu0 0
    %878 = vmatprep.subr.bf16.mxu0 0
    %879 = vmatpush1.bf16.msra.mxu0 0
    %880 = vmatprep.subr.bf16.mxu0 0
    %881 = vmatpush1.bf16.msra.mxu0 0
    %882 = vmatprep.subr.bf16.mxu0 0
    %883 = vmatpush1.bf16.msra.mxu0 0
    %884 = vmatprep.subr.bf16.mxu0 0
    %885 = vmatpush1.bf16.msra.mxu0 0
    %886 = vmatprep.mubr.bf16.mxu0 0
    %887 = vmatmul.mubr.bf16.gmra.mrb[0].mxu0 %v610
    %v888 = vpop.f32.mrb[0].mxu0
    %v889 = vadd.f32 %v849, %v888
    %v890 = vpop.f32.mrb[0].mxu0
    %v891 = vpop.f32.mrb[0].mxu0
    %v892 = vpop.f32.mrb[0].mxu0
    %893 = vdwg.mxu0
    %v894 = vsel %vm56, %v889, %v813
    %v895 = vadd.f32 %v894, %v40
    %v896 = vtanh.pop %v895
    %v897 = vxor.u32 %v895, 2147483648
    %v898 = vmul.f32 %v897, 1.442695
    %v899 = vpow.pop %v898
    %v900 = vadd.f32 %v899, 1.0
    %v901 = vrcp.pop %v900
    %v902 = vmul.f32 1.0, %v901
    %v903 = vsel %vm45, %v896, %v902
    %v904 = vmul.f32 %v903, %v552
    %906 = vrot.lane.b32.xlu0 %v903, 64
    %v907 = vpop.permute.xlu0 %906
    %v909 = vmul.f32 %v903, %v907
    %911 = vrot.lane.b32.xlu0 %v909, 32
    %v912 = vpop.permute.xlu0 %911
    %v914 = vadd.f32 %v904, %v912
    %v915 = vtanh.pop %v914
    %917 = vrot.lane.b32.xlu0 %v915, 64
    %v918 = vpop.permute.xlu0 %917
    %v920 = vmul.f32 %v903, %v918
    %v921 = vsel %vm49, %v920, %v551
    %v922 = vsel %vm49, %v914, %v552
    %s923 = scalar_lea.vmem %s0, 16
    %v924 = vld [vmem:[%s923] sm:$0xff]
    %926 = vrot.lane.b32.xlu0 %v921, 32
    %v927 = vpop.permute.xlu0 %926
    %v929 = vrot.slane %v927, 6
    %v930 = vsel %vm57, %v924, %v929
    %v931 = vpack.c.bf16 %v930, %v930
    %v932 = vpack.c.bf16 %v921, %v921
    %934 = vrot.lane.b32.xlu0 %v932, 32
    %v935 = vpop.permute.xlu0 %934
    %v937 = vsel %vm81, %v935, 0
    %939 = vmatprep.subr.bf16.mxu0 0
    %940 = vmatpush1.bf16.msra.mxu0 %v77
    %941 = vmatprep.subr.bf16.mxu0 0
    %942 = vmatpush1.bf16.msra.mxu0 %v78
    %943 = vmatprep.subr.bf16.mxu0 0
    %944 = vmatpush1.bf16.msra.mxu0 0
    %945 = vmatprep.subr.bf16.mxu0 0
    %946 = vmatpush1.bf16.msra.mxu0 0
    %947 = vmatprep.subr.bf16.mxu0 0
    %948 = vmatpush1.bf16.msra.mxu0 0
    %949 = vmatprep.subr.bf16.mxu0 0
    %950 = vmatpush1.bf16.msra.mxu0 0
    %951 = vmatprep.subr.bf16.mxu0 0
    %952 = vmatpush1.bf16.msra.mxu0 0
    %953 = vmatprep.subr.bf16.mxu0 0
    %954 = vmatpush1.bf16.msra.mxu0 0
    %955 = vmatprep.subr.bf16.mxu0 0
    %956 = vmatpush1.bf16.msra.mxu0 0
    %957 = vmatprep.subr.bf16.mxu0 0
    %958 = vmatpush1.bf16.msra.mxu0 0
    %959 = vmatprep.subr.bf16.mxu0 0
    %960 = vmatpush1.bf16.msra.mxu0 0
    %961 = vmatprep.subr.bf16.mxu0 0
    %962 = vmatpush1.bf16.msra.mxu0 0
    %963 = vmatprep.subr.bf16.mxu0 0
    %964 = vmatpush1.bf16.msra.mxu0 0
    %965 = vmatprep.subr.bf16.mxu0 0
    %966 = vmatpush1.bf16.msra.mxu0 0
    %967 = vmatprep.subr.bf16.mxu0 0
    %968 = vmatpush1.bf16.msra.mxu0 0
    %969 = vmatprep.subr.bf16.mxu0 0
    %970 = vmatpush1.bf16.msra.mxu0 0
    %971 = vmatprep.mubr.bf16.mxu0 0
    %972 = vmatmul.mubr.bf16.gmra.mrb[0].mxu0 %v937
    %v973 = vpop.f32.mrb[0].mxu0
    %v974 = vadd.f32 0.0, %v973
    %v975 = vpop.f32.mrb[0].mxu0
    %v976 = vpop.f32.mrb[0].mxu0
    %v977 = vpop.f32.mrb[0].mxu0
    %978 = vdwg.mxu0
    %v980 = vsel %vm81, %v931, 0
    %982 = vmatprep.subr.bf16.mxu0 0
    %983 = vmatpush1.bf16.msra.mxu0 %v133
    %984 = vmatprep.subr.bf16.mxu0 0
    %985 = vmatpush1.bf16.msra.mxu0 %v134
    %986 = vmatprep.subr.bf16.mxu0 0
    %987 = vmatpush1.bf16.msra.mxu0 0
    %988 = vmatprep.subr.bf16.mxu0 0
    %989 = vmatpush1.bf16.msra.mxu0 0
    %990 = vmatprep.subr.bf16.mxu0 0
    %991 = vmatpush1.bf16.msra.mxu0 0
    %992 = vmatprep.subr.bf16.mxu0 0
    %993 = vmatpush1.bf16.msra.mxu0 0
    %994 = vmatprep.subr.bf16.mxu0 0
    %995 = vmatpush1.bf16.msra.mxu0 0
    %996 = vmatprep.subr.bf16.mxu0 0
    %997 = vmatpush1.bf16.msra.mxu0 0
    %998 = vmatprep.subr.bf16.mxu0 0
    %999 = vmatpush1.bf16.msra.mxu0 0
    %1000 = vmatprep.subr.bf16.mxu0 0
    %1001 = vmatpush1.bf16.msra.mxu0 0
    %1002 = vmatprep.subr.bf16.mxu0 0
    %1003 = vmatpush1.bf16.msra.mxu0 0
    %1004 = vmatprep.subr.bf16.mxu0 0
    %1005 = vmatpush1.bf16.msra.mxu0 0
    %1006 = vmatprep.subr.bf16.mxu0 0
    %1007 = vmatpush1.bf16.msra.mxu0 0
    %1008 = vmatprep.subr.bf16.mxu0 0
    %1009 = vmatpush1.bf16.msra.mxu0 0
    %1010 = vmatprep.subr.bf16.mxu0 0
    %1011 = vmatpush1.bf16.msra.mxu0 0
    %1012 = vmatprep.subr.bf16.mxu0 0
    %1013 = vmatpush1.bf16.msra.mxu0 0
    %1014 = vmatprep.mubr.bf16.mxu0 0
    %1015 = vmatmul.mubr.bf16.gmra.mrb[0].mxu0 %v980
    %v1016 = vpop.f32.mrb[0].mxu0
    %v1017 = vadd.f32 %v974, %v1016
    %v1018 = vpop.f32.mrb[0].mxu0
    %v1019 = vpop.f32.mrb[0].mxu0
    %v1020 = vpop.f32.mrb[0].mxu0
    %1021 = vdwg.mxu0
    %1022 = vmatprep.subr.bf16.mxu0 0
    %1023 = vmatpush1.bf16.msra.mxu0 %v198
    %1024 = vmatprep.subr.bf16.mxu0 0
    %1025 = vmatpush1.bf16.msra.mxu0 %v199
    %1026 = vmatprep.subr.bf16.mxu0 0
    %1027 = vmatpush1.bf16.msra.mxu0 0
    %1028 = vmatprep.subr.bf16.mxu0 0
    %1029 = vmatpush1.bf16.msra.mxu0 0
    %1030 = vmatprep.subr.bf16.mxu0 0
    %1031 = vmatpush1.bf16.msra.mxu0 0
    %1032 = vmatprep.subr.bf16.mxu0 0
    %1033 = vmatpush1.bf16.msra.mxu0 0
    %1034 = vmatprep.subr.bf16.mxu0 0
    %1035 = vmatpush1.bf16.msra.mxu0 0
    %1036 = vmatprep.subr.bf16.mxu0 0
    %1037 = vmatpush1.bf16.msra.mxu0 0
    %1038 = vmatprep.subr.bf16.mxu0 0
    %1039 = vmatpush1.bf16.msra.mxu0 0
    %1040 = vmatprep.subr.bf16.mxu0 0
    %1041 = vmatpush1.bf16.msra.mxu0 0
    %1042 = vmatprep.subr.bf16.mxu0 0
    %1043 = vmatpush1.bf16.msra.mxu0 0
    %1044 = vmatprep.subr.bf16.mxu0 0
    %1045 = vmatpush1.bf16.msra.mxu0 0
    %1046 = vmatprep.subr.bf16.mxu0 0
    %1047 = vmatpush1.bf16.msra.mxu0 0
    %1048 = vmatprep.subr.bf16.mxu0 0
    %1049 = vmatpush1.bf16.msra.mxu0 0
    %1050 = vmatprep.subr.bf16.mxu0 0
    %1051 = vmatpush1.bf16.msra.mxu0 0
    %1052 = vmatprep.subr.bf16.mxu0 0
    %1053 = vmatpush1.bf16.msra.mxu0 0
    %1054 = vmatprep.mubr.bf16.mxu0 0
    %1055 = vmatmul.mubr.bf16.gmra.mrb[0].mxu0 %v937
    %v1056 = vpop.f32.mrb[0].mxu0
    %v1057 = vadd.f32 0.0, %v1056
    %v1058 = vpop.f32.mrb[0].mxu0
    %v1059 = vpop.f32.mrb[0].mxu0
    %v1060 = vpop.f32.mrb[0].mxu0
    %1061 = vdwg.mxu0
    %1062 = vmatprep.subr.bf16.mxu0 0
    %1063 = vmatpush1.bf16.msra.mxu0 %v250
    %1064 = vmatprep.subr.bf16.mxu0 0
    %1065 = vmatpush1.bf16.msra.mxu0 %v251
    %1066 = vmatprep.subr.bf16.mxu0 0
    %1067 = vmatpush1.bf16.msra.mxu0 0
    %1068 = vmatprep.subr.bf16.mxu0 0
    %1069 = vmatpush1.bf16.msra.mxu0 0
    %1070 = vmatprep.subr.bf16.mxu0 0
    %1071 = vmatpush1.bf16.msra.mxu0 0
    %1072 = vmatprep.subr.bf16.mxu0 0
    %1073 = vmatpush1.bf16.msra.mxu0 0
    %1074 = vmatprep.subr.bf16.mxu0 0
    %1075 = vmatpush1.bf16.msra.mxu0 0
    %1076 = vmatprep.subr.bf16.mxu0 0
    %1077 = vmatpush1.bf16.msra.mxu0 0
    %1078 = vmatprep.subr.bf16.mxu0 0
    %1079 = vmatpush1.bf16.msra.mxu0 0
    %1080 = vmatprep.subr.bf16.mxu0 0
    %1081 = vmatpush1.bf16.msra.mxu0 0
    %1082 = vmatprep.subr.bf16.mxu0 0
    %1083 = vmatpush1.bf16.msra.mxu0 0
    %1084 = vmatprep.subr.bf16.mxu0 0
    %1085 = vmatpush1.bf16.msra.mxu0 0
    %1086 = vmatprep.subr.bf16.mxu0 0
    %1087 = vmatpush1.bf16.msra.mxu0 0
    %1088 = vmatprep.subr.bf16.mxu0 0
    %1089 = vmatpush1.bf16.msra.mxu0 0
    %1090 = vmatprep.subr.bf16.mxu0 0
    %1091 = vmatpush1.bf16.msra.mxu0 0
    %1092 = vmatprep.subr.bf16.mxu0 0
    %1093 = vmatpush1.bf16.msra.mxu0 0
    %1094 = vmatprep.mubr.bf16.mxu0 0
    %1095 = vmatmul.mubr.bf16.gmra.mrb[0].mxu0 %v980
    %v1096 = vpop.f32.mrb[0].mxu0
    %v1097 = vadd.f32 %v1057, %v1096
    %v1098 = vpop.f32.mrb[0].mxu0
    %v1099 = vpop.f32.mrb[0].mxu0
    %v1100 = vpop.f32.mrb[0].mxu0
    %1101 = vdwg.mxu0
    %v1102 = vsel %vm50, %v1097, %v1017
    %1103 = vmatprep.subr.bf16.mxu0 0
    %1104 = vmatpush1.bf16.msra.mxu0 %v313
    %1105 = vmatprep.subr.bf16.mxu0 0
    %1106 = vmatpush1.bf16.msra.mxu0 %v314
    %1107 = vmatprep.subr.bf16.mxu0 0
    %1108 = vmatpush1.bf16.msra.mxu0 0
    %1109 = vmatprep.subr.bf16.mxu0 0
    %1110 = vmatpush1.bf16.msra.mxu0 0
    %1111 = vmatprep.subr.bf16.mxu0 0
    %1112 = vmatpush1.bf16.msra.mxu0 0
    %1113 = vmatprep.subr.bf16.mxu0 0
    %1114 = vmatpush1.bf16.msra.mxu0 0
    %1115 = vmatprep.subr.bf16.mxu0 0
    %1116 = vmatpush1.bf16.msra.mxu0 0
    %1117 = vmatprep.subr.bf16.mxu0 0
    %1118 = vmatpush1.bf16.msra.mxu0 0
    %1119 = vmatprep.subr.bf16.mxu0 0
    %1120 = vmatpush1.bf16.msra.mxu0 0
    %1121 = vmatprep.subr.bf16.mxu0 0
    %1122 = vmatpush1.bf16.msra.mxu0 0
    %1123 = vmatprep.subr.bf16.mxu0 0
    %1124 = vmatpush1.bf16.msra.mxu0 0
    %1125 = vmatprep.subr.bf16.mxu0 0
    %1126 = vmatpush1.bf16.msra.mxu0 0
    %1127 = vmatprep.subr.bf16.mxu0 0
    %1128 = vmatpush1.bf16.msra.mxu0 0
    %1129 = vmatprep.subr.bf16.mxu0 0
    %1130 = vmatpush1.bf16.msra.mxu0 0
    %1131 = vmatprep.subr.bf16.mxu0 0
    %1132 = vmatpush1.bf16.msra.mxu0 0
    %1133 = vmatprep.subr.bf16.mxu0 0
    %1134 = vmatpush1.bf16.msra.mxu0 0
    %1135 = vmatprep.mubr.bf16.mxu0 0
    %1136 = vmatmul.mubr.bf16.gmra.mrb[0].mxu0 %v937
    %v1137 = vpop.f32.mrb[0].mxu0
    %v1138 = vadd.f32 0.0, %v1137
    %v1139 = vpop.f32.mrb[0].mxu0
    %v1140 = vpop.f32.mrb[0].mxu0
    %v1141 = vpop.f32.mrb[0].mxu0
    %1142 = vdwg.mxu0
    %1143 = vmatprep.subr.bf16.mxu0 0
    %1144 = vmatpush1.bf16.msra.mxu0 %v365
    %1145 = vmatprep.subr.bf16.mxu0 0
    %1146 = vmatpush1.bf16.msra.mxu0 %v366
    %1147 = vmatprep.subr.bf16.mxu0 0
    %1148 = vmatpush1.bf16.msra.mxu0 0
    %1149 = vmatprep.subr.bf16.mxu0 0
    %1150 = vmatpush1.bf16.msra.mxu0 0
    %1151 = vmatprep.subr.bf16.mxu0 0
    %1152 = vmatpush1.bf16.msra.mxu0 0
    %1153 = vmatprep.subr.bf16.mxu0 0
    %1154 = vmatpush1.bf16.msra.mxu0 0
    %1155 = vmatprep.subr.bf16.mxu0 0
    %1156 = vmatpush1.bf16.msra.mxu0 0
    %1157 = vmatprep.subr.bf16.mxu0 0
    %1158 = vmatpush1.bf16.msra.mxu0 0
    %1159 = vmatprep.subr.bf16.mxu0 0
    %1160 = vmatpush1.bf16.msra.mxu0 0
    %1161 = vmatprep.subr.bf16.mxu0 0
    %1162 = vmatpush1.bf16.msra.mxu0 0
    %1163 = vmatprep.subr.bf16.mxu0 0
    %1164 = vmatpush1.bf16.msra.mxu0 0
    %1165 = vmatprep.subr.bf16.mxu0 0
    %1166 = vmatpush1.bf16.msra.mxu0 0
    %1167 = vmatprep.subr.bf16.mxu0 0
    %1168 = vmatpush1.bf16.msra.mxu0 0
    %1169 = vmatprep.subr.bf16.mxu0 0
    %1170 = vmatpush1.bf16.msra.mxu0 0
    %1171 = vmatprep.subr.bf16.mxu0 0
    %1172 = vmatpush1.bf16.msra.mxu0 0
    %1173 = vmatprep.subr.bf16.mxu0 0
    %1174 = vmatpush1.bf16.msra.mxu0 0
    %1175 = vmatprep.mubr.bf16.mxu0 0
    %1176 = vmatmul.mubr.bf16.gmra.mrb[0].mxu0 %v980
    %v1177 = vpop.f32.mrb[0].mxu0
    %v1178 = vadd.f32 %v1138, %v1177
    %v1179 = vpop.f32.mrb[0].mxu0
    %v1180 = vpop.f32.mrb[0].mxu0
    %v1181 = vpop.f32.mrb[0].mxu0
    %1182 = vdwg.mxu0
    %v1183 = vsel %vm53, %v1178, %v1102
    %1184 = vmatprep.subr.bf16.mxu0 0
    %1185 = vmatpush1.bf16.msra.mxu0 %v428
    %1186 = vmatprep.subr.bf16.mxu0 0
    %1187 = vmatpush1.bf16.msra.mxu0 %v429
    %1188 = vmatprep.subr.bf16.mxu0 0
    %1189 = vmatpush1.bf16.msra.mxu0 0
    %1190 = vmatprep.subr.bf16.mxu0 0
    %1191 = vmatpush1.bf16.msra.mxu0 0
    %1192 = vmatprep.subr.bf16.mxu0 0
    %1193 = vmatpush1.bf16.msra.mxu0 0
    %1194 = vmatprep.subr.bf16.mxu0 0
    %1195 = vmatpush1.bf16.msra.mxu0 0
    %1196 = vmatprep.subr.bf16.mxu0 0
    %1197 = vmatpush1.bf16.msra.mxu0 0
    %1198 = vmatprep.subr.bf16.mxu0 0
    %1199 = vmatpush1.bf16.msra.mxu0 0
    %1200 = vmatprep.subr.bf16.mxu0 0
    %1201 = vmatpush1.bf16.msra.mxu0 0
    %1202 = vmatprep.subr.bf16.mxu0 0
    %1203 = vmatpush1.bf16.msra.mxu0 0
    %1204 = vmatprep.subr.bf16.mxu0 0
    %1205 = vmatpush1.bf16.msra.mxu0 0
    %1206 = vmatprep.subr.bf16.mxu0 0
    %1207 = vmatpush1.bf16.msra.mxu0 0
    %1208 = vmatprep.subr.bf16.mxu0 0
    %1209 = vmatpush1.bf16.msra.mxu0 0
    %1210 = vmatprep.subr.bf16.mxu0 0
    %1211 = vmatpush1.bf16.msra.mxu0 0
    %1212 = vmatprep.subr.bf16.mxu0 0
    %1213 = vmatpush1.bf16.msra.mxu0 0
    %1214 = vmatprep.subr.bf16.mxu0 0
    %1215 = vmatpush1.bf16.msra.mxu0 0
    %1216 = vmatprep.mubr.bf16.mxu0 0
    %1217 = vmatmul.mubr.bf16.gmra.mrb[0].mxu0 %v937
    %v1218 = vpop.f32.mrb[0].mxu0
    %v1219 = vadd.f32 0.0, %v1218
    %v1220 = vpop.f32.mrb[0].mxu0
    %v1221 = vpop.f32.mrb[0].mxu0
    %v1222 = vpop.f32.mrb[0].mxu0
    %1223 = vdwg.mxu0
    %1224 = vmatprep.subr.bf16.mxu0 0
    %1225 = vmatpush1.bf16.msra.mxu0 %v480
    %1226 = vmatprep.subr.bf16.mxu0 0
    %1227 = vmatpush1.bf16.msra.mxu0 %v481
    %1228 = vmatprep.subr.bf16.mxu0 0
    %1229 = vmatpush1.bf16.msra.mxu0 0
    %1230 = vmatprep.subr.bf16.mxu0 0
    %1231 = vmatpush1.bf16.msra.mxu0 0
    %1232 = vmatprep.subr.bf16.mxu0 0
    %1233 = vmatpush1.bf16.msra.mxu0 0
    %1234 = vmatprep.subr.bf16.mxu0 0
    %1235 = vmatpush1.bf16.msra.mxu0 0
    %1236 = vmatprep.subr.bf16.mxu0 0
    %1237 = vmatpush1.bf16.msra.mxu0 0
    %1238 = vmatprep.subr.bf16.mxu0 0
    %1239 = vmatpush1.bf16.msra.mxu0 0
    %1240 = vmatprep.subr.bf16.mxu0 0
    %1241 = vmatpush1.bf16.msra.mxu0 0
    %1242 = vmatprep.subr.bf16.mxu0 0
    %1243 = vmatpush1.bf16.msra.mxu0 0
    %1244 = vmatprep.subr.bf16.mxu0 0
    %1245 = vmatpush1.bf16.msra.mxu0 0
    %1246 = vmatprep.subr.bf16.mxu0 0
    %1247 = vmatpush1.bf16.msra.mxu0 0
    %1248 = vmatprep.subr.bf16.mxu0 0
    %1249 = vmatpush1.bf16.msra.mxu0 0
    %1250 = vmatprep.subr.bf16.mxu0 0
    %1251 = vmatpush1.bf16.msra.mxu0 0
    %1252 = vmatprep.subr.bf16.mxu0 0
    %1253 = vmatpush1.bf16.msra.mxu0 0
    %1254 = vmatprep.subr.bf16.mxu0 0
    %1255 = vmatpush1.bf16.msra.mxu0 0
    %1256 = vmatprep.mubr.bf16.mxu0 0
    %1257 = vmatmul.mubr.bf16.gmra.mrb[0].mxu0 %v980
    %v1258 = vpop.f32.mrb[0].mxu0
    %v1259 = vadd.f32 %v1219, %v1258
    %v1260 = vpop.f32.mrb[0].mxu0
    %v1261 = vpop.f32.mrb[0].mxu0
    %v1262 = vpop.f32.mrb[0].mxu0
    %1263 = vdwg.mxu0
    %v1264 = vsel %vm56, %v1259, %v1183
    %v1265 = vadd.f32 %v1264, %v40
    %v1266 = vtanh.pop %v1265
    %v1267 = vxor.u32 %v1265, 2147483648
    %v1268 = vmul.f32 %v1267, 1.442695
    %v1269 = vpow.pop %v1268
    %v1270 = vadd.f32 %v1269, 1.0
    %v1271 = vrcp.pop %v1270
    %v1272 = vmul.f32 1.0, %v1271
    %v1273 = vsel %vm45, %v1266, %v1272
    %v1274 = vmul.f32 %v1273, %v922
    %1276 = vrot.lane.b32.xlu0 %v1273, 64
    %v1277 = vpop.permute.xlu0 %1276
    %v1279 = vmul.f32 %v1273, %v1277
    %1281 = vrot.lane.b32.xlu0 %v1279, 32
    %v1282 = vpop.permute.xlu0 %1281
    %v1284 = vadd.f32 %v1274, %v1282
    %v1285 = vtanh.pop %v1284
    %1287 = vrot.lane.b32.xlu0 %v1285, 64
    %v1288 = vpop.permute.xlu0 %1287
    %v1290 = vmul.f32 %v1273, %v1288
    %v1291 = vsel %vm52, %v1290, %v921
    %v1292 = vsel %vm52, %v1284, %v922
    %s1293 = scalar_lea.vmem %s0, 24
    %v1294 = vld [vmem:[%s1293] sm:$0xff]
    %1296 = vrot.lane.b32.xlu0 %v1291, 32
    %v1297 = vpop.permute.xlu0 %1296
    %v1299 = vrot.slane %v1297, 6
    %v1300 = vsel %vm57, %v1294, %v1299
    %v1301 = vpack.c.bf16 %v1300, %v1300
    %v1302 = vpack.c.bf16 %v1291, %v1291
    %1304 = vrot.lane.b32.xlu0 %v1302, 32
    %v1305 = vpop.permute.xlu0 %1304
    %v1307 = vsel %vm81, %v1305, 0
    %1309 = vmatprep.subr.bf16.mxu0 0
    %1310 = vmatpush1.bf16.msra.mxu0 %v77
    %1311 = vmatprep.subr.bf16.mxu0 0
    %1312 = vmatpush1.bf16.msra.mxu0 %v78
    %1313 = vmatprep.subr.bf16.mxu0 0
    %1314 = vmatpush1.bf16.msra.mxu0 0
    %1315 = vmatprep.subr.bf16.mxu0 0
    %1316 = vmatpush1.bf16.msra.mxu0 0
    %1317 = vmatprep.subr.bf16.mxu0 0
    %1318 = vmatpush1.bf16.msra.mxu0 0
    %1319 = vmatprep.subr.bf16.mxu0 0
    %1320 = vmatpush1.bf16.msra.mxu0 0
    %1321 = vmatprep.subr.bf16.mxu0 0
    %1322 = vmatpush1.bf16.msra.mxu0 0
    %1323 = vmatprep.subr.bf16.mxu0 0
    %1324 = vmatpush1.bf16.msra.mxu0 0
    %1325 = vmatprep.subr.bf16.mxu0 0
    %1326 = vmatpush1.bf16.msra.mxu0 0
    %1327 = vmatprep.subr.bf16.mxu0 0
    %1328 = vmatpush1.bf16.msra.mxu0 0
    %1329 = vmatprep.subr.bf16.mxu0 0
    %1330 = vmatpush1.bf16.msra.mxu0 0
    %1331 = vmatprep.subr.bf16.mxu0 0
    %1332 = vmatpush1.bf16.msra.mxu0 0
    %1333 = vmatprep.subr.bf16.mxu0 0
    %1334 = vmatpush1.bf16.msra.mxu0 0
    %1335 = vmatprep.subr.bf16.mxu0 0
    %1336 = vmatpush1.bf16.msra.mxu0 0
    %1337 = vmatprep.subr.bf16.mxu0 0
    %1338 = vmatpush1.bf16.msra.mxu0 0
    %1339 = vmatprep.subr.bf16.mxu0 0
    %1340 = vmatpush1.bf16.msra.mxu0 0
    %1341 = vmatprep.mubr.bf16.mxu0 0
    %1342 = vmatmul.mubr.bf16.gmra.mrb[0].mxu0 %v1307
    %v1343 = vpop.f32.mrb[0].mxu0
    %v1344 = vadd.f32 0.0, %v1343
    %v1345 = vpop.f32.mrb[0].mxu0
    %v1346 = vpop.f32.mrb[0].mxu0
    %v1347 = vpop.f32.mrb[0].mxu0
    %1348 = vdwg.mxu0
    %v1350 = vsel %vm81, %v1301, 0
    %1352 = vmatprep.subr.bf16.mxu0 0
    %1353 = vmatpush1.bf16.msra.mxu0 %v133
    %1354 = vmatprep.subr.bf16.mxu0 0
    %1355 = vmatpush1.bf16.msra.mxu0 %v134
    %1356 = vmatprep.subr.bf16.mxu0 0
    %1357 = vmatpush1.bf16.msra.mxu0 0
    %1358 = vmatprep.subr.bf16.mxu0 0
    %1359 = vmatpush1.bf16.msra.mxu0 0
    %1360 = vmatprep.subr.bf16.mxu0 0
    %1361 = vmatpush1.bf16.msra.mxu0 0
    %1362 = vmatprep.subr.bf16.mxu0 0
    %1363 = vmatpush1.bf16.msra.mxu0 0
    %1364 = vmatprep.subr.bf16.mxu0 0
    %1365 = vmatpush1.bf16.msra.mxu0 0
    %1366 = vmatprep.subr.bf16.mxu0 0
    %1367 = vmatpush1.bf16.msra.mxu0 0
    %1368 = vmatprep.subr.bf16.mxu0 0
    %1369 = vmatpush1.bf16.msra.mxu0 0
    %1370 = vmatprep.subr.bf16.mxu0 0
    %1371 = vmatpush1.bf16.msra.mxu0 0
    %1372 = vmatprep.subr.bf16.mxu0 0
    %1373 = vmatpush1.bf16.msra.mxu0 0
    %1374 = vmatprep.subr.bf16.mxu0 0
    %1375 = vmatpush1.bf16.msra.mxu0 0
    %1376 = vmatprep.subr.bf16.mxu0 0
    %1377 = vmatpush1.bf16.msra.mxu0 0
    %1378 = vmatprep.subr.bf16.mxu0 0
    %1379 = vmatpush1.bf16.msra.mxu0 0
    %1380 = vmatprep.subr.bf16.mxu0 0
    %1381 = vmatpush1.bf16.msra.mxu0 0
    %1382 = vmatprep.subr.bf16.mxu0 0
    %1383 = vmatpush1.bf16.msra.mxu0 0
    %1384 = vmatprep.mubr.bf16.mxu0 0
    %1385 = vmatmul.mubr.bf16.gmra.mrb[0].mxu0 %v1350
    %v1386 = vpop.f32.mrb[0].mxu0
    %v1387 = vadd.f32 %v1344, %v1386
    %v1388 = vpop.f32.mrb[0].mxu0
    %v1389 = vpop.f32.mrb[0].mxu0
    %v1390 = vpop.f32.mrb[0].mxu0
    %1391 = vdwg.mxu0
    %1392 = vmatprep.subr.bf16.mxu0 0
    %1393 = vmatpush1.bf16.msra.mxu0 %v198
    %1394 = vmatprep.subr.bf16.mxu0 0
    %1395 = vmatpush1.bf16.msra.mxu0 %v199
    %1396 = vmatprep.subr.bf16.mxu0 0
    %1397 = vmatpush1.bf16.msra.mxu0 0
    %1398 = vmatprep.subr.bf16.mxu0 0
    %1399 = vmatpush1.bf16.msra.mxu0 0
    %1400 = vmatprep.subr.bf16.mxu0 0
    %1401 = vmatpush1.bf16.msra.mxu0 0
    %1402 = vmatprep.subr.bf16.mxu0 0
    %1403 = vmatpush1.bf16.msra.mxu0 0
    %1404 = vmatprep.subr.bf16.mxu0 0
    %1405 = vmatpush1.bf16.msra.mxu0 0
    %1406 = vmatprep.subr.bf16.mxu0 0
    %1407 = vmatpush1.bf16.msra.mxu0 0
    %1408 = vmatprep.subr.bf16.mxu0 0
    %1409 = vmatpush1.bf16.msra.mxu0 0
    %1410 = vmatprep.subr.bf16.mxu0 0
    %1411 = vmatpush1.bf16.msra.mxu0 0
    %1412 = vmatprep.subr.bf16.mxu0 0
    %1413 = vmatpush1.bf16.msra.mxu0 0
    %1414 = vmatprep.subr.bf16.mxu0 0
    %1415 = vmatpush1.bf16.msra.mxu0 0
    %1416 = vmatprep.subr.bf16.mxu0 0
    %1417 = vmatpush1.bf16.msra.mxu0 0
    %1418 = vmatprep.subr.bf16.mxu0 0
    %1419 = vmatpush1.bf16.msra.mxu0 0
    %1420 = vmatprep.subr.bf16.mxu0 0
    %1421 = vmatpush1.bf16.msra.mxu0 0
    %1422 = vmatprep.subr.bf16.mxu0 0
    %1423 = vmatpush1.bf16.msra.mxu0 0
    %1424 = vmatprep.mubr.bf16.mxu0 0
    %1425 = vmatmul.mubr.bf16.gmra.mrb[0].mxu0 %v1307
    %v1426 = vpop.f32.mrb[0].mxu0
    %v1427 = vadd.f32 0.0, %v1426
    %v1428 = vpop.f32.mrb[0].mxu0
    %v1429 = vpop.f32.mrb[0].mxu0
    %v1430 = vpop.f32.mrb[0].mxu0
    %1431 = vdwg.mxu0
    %1432 = vmatprep.subr.bf16.mxu0 0
    %1433 = vmatpush1.bf16.msra.mxu0 %v250
    %1434 = vmatprep.subr.bf16.mxu0 0
    %1435 = vmatpush1.bf16.msra.mxu0 %v251
    %1436 = vmatprep.subr.bf16.mxu0 0
    %1437 = vmatpush1.bf16.msra.mxu0 0
    %1438 = vmatprep.subr.bf16.mxu0 0
    %1439 = vmatpush1.bf16.msra.mxu0 0
    %1440 = vmatprep.subr.bf16.mxu0 0
    %1441 = vmatpush1.bf16.msra.mxu0 0
    %1442 = vmatprep.subr.bf16.mxu0 0
    %1443 = vmatpush1.bf16.msra.mxu0 0
    %1444 = vmatprep.subr.bf16.mxu0 0
    %1445 = vmatpush1.bf16.msra.mxu0 0
    %1446 = vmatprep.subr.bf16.mxu0 0
    %1447 = vmatpush1.bf16.msra.mxu0 0
    %1448 = vmatprep.subr.bf16.mxu0 0
    %1449 = vmatpush1.bf16.msra.mxu0 0
    %1450 = vmatprep.subr.bf16.mxu0 0
    %1451 = vmatpush1.bf16.msra.mxu0 0
    %1452 = vmatprep.subr.bf16.mxu0 0
    %1453 = vmatpush1.bf16.msra.mxu0 0
    %1454 = vmatprep.subr.bf16.mxu0 0
    %1455 = vmatpush1.bf16.msra.mxu0 0
    %1456 = vmatprep.subr.bf16.mxu0 0
    %1457 = vmatpush1.bf16.msra.mxu0 0
    %1458 = vmatprep.subr.bf16.mxu0 0
    %1459 = vmatpush1.bf16.msra.mxu0 0
    %1460 = vmatprep.subr.bf16.mxu0 0
    %1461 = vmatpush1.bf16.msra.mxu0 0
    %1462 = vmatprep.subr.bf16.mxu0 0
    %1463 = vmatpush1.bf16.msra.mxu0 0
    %1464 = vmatprep.mubr.bf16.mxu0 0
    %1465 = vmatmul.mubr.bf16.gmra.mrb[0].mxu0 %v1350
    %v1466 = vpop.f32.mrb[0].mxu0
    %v1467 = vadd.f32 %v1427, %v1466
    %v1468 = vpop.f32.mrb[0].mxu0
    %v1469 = vpop.f32.mrb[0].mxu0
    %v1470 = vpop.f32.mrb[0].mxu0
    %1471 = vdwg.mxu0
    %v1472 = vsel %vm50, %v1467, %v1387
    %1473 = vmatprep.subr.bf16.mxu0 0
    %1474 = vmatpush1.bf16.msra.mxu0 %v313
    %1475 = vmatprep.subr.bf16.mxu0 0
    %1476 = vmatpush1.bf16.msra.mxu0 %v314
    %1477 = vmatprep.subr.bf16.mxu0 0
    %1478 = vmatpush1.bf16.msra.mxu0 0
    %1479 = vmatprep.subr.bf16.mxu0 0
    %1480 = vmatpush1.bf16.msra.mxu0 0
    %1481 = vmatprep.subr.bf16.mxu0 0
    %1482 = vmatpush1.bf16.msra.mxu0 0
    %1483 = vmatprep.subr.bf16.mxu0 0
    %1484 = vmatpush1.bf16.msra.mxu0 0
    %1485 = vmatprep.subr.bf16.mxu0 0
    %1486 = vmatpush1.bf16.msra.mxu0 0
    %1487 = vmatprep.subr.bf16.mxu0 0
    %1488 = vmatpush1.bf16.msra.mxu0 0
    %1489 = vmatprep.subr.bf16.mxu0 0
    %1490 = vmatpush1.bf16.msra.mxu0 0
    %1491 = vmatprep.subr.bf16.mxu0 0
    %1492 = vmatpush1.bf16.msra.mxu0 0
    %1493 = vmatprep.subr.bf16.mxu0 0
    %1494 = vmatpush1.bf16.msra.mxu0 0
    %1495 = vmatprep.subr.bf16.mxu0 0
    %1496 = vmatpush1.bf16.msra.mxu0 0
    %1497 = vmatprep.subr.bf16.mxu0 0
    %1498 = vmatpush1.bf16.msra.mxu0 0
    %1499 = vmatprep.subr.bf16.mxu0 0
    %1500 = vmatpush1.bf16.msra.mxu0 0
    %1501 = vmatprep.subr.bf16.mxu0 0
    %1502 = vmatpush1.bf16.msra.mxu0 0
    %1503 = vmatprep.subr.bf16.mxu0 0
    %1504 = vmatpush1.bf16.msra.mxu0 0
    %1505 = vmatprep.mubr.bf16.mxu0 0
    %1506 = vmatmul.mubr.bf16.gmra.mrb[0].mxu0 %v1307
    %v1507 = vpop.f32.mrb[0].mxu0
    %v1508 = vadd.f32 0.0, %v1507
    %v1509 = vpop.f32.mrb[0].mxu0
    %v1510 = vpop.f32.mrb[0].mxu0
    %v1511 = vpop.f32.mrb[0].mxu0
    %1512 = vdwg.mxu0
    %1513 = vmatprep.subr.bf16.mxu0 0
    %1514 = vmatpush1.bf16.msra.mxu0 %v365
    %1515 = vmatprep.subr.bf16.mxu0 0
    %1516 = vmatpush1.bf16.msra.mxu0 %v366
    %1517 = vmatprep.subr.bf16.mxu0 0
    %1518 = vmatpush1.bf16.msra.mxu0 0
    %1519 = vmatprep.subr.bf16.mxu0 0
    %1520 = vmatpush1.bf16.msra.mxu0 0
    %1521 = vmatprep.subr.bf16.mxu0 0
    %1522 = vmatpush1.bf16.msra.mxu0 0
    %1523 = vmatprep.subr.bf16.mxu0 0
    %1524 = vmatpush1.bf16.msra.mxu0 0
    %1525 = vmatprep.subr.bf16.mxu0 0
    %1526 = vmatpush1.bf16.msra.mxu0 0
    %1527 = vmatprep.subr.bf16.mxu0 0
    %1528 = vmatpush1.bf16.msra.mxu0 0
    %1529 = vmatprep.subr.bf16.mxu0 0
    %1530 = vmatpush1.bf16.msra.mxu0 0
    %1531 = vmatprep.subr.bf16.mxu0 0
    %1532 = vmatpush1.bf16.msra.mxu0 0
    %1533 = vmatprep.subr.bf16.mxu0 0
    %1534 = vmatpush1.bf16.msra.mxu0 0
    %1535 = vmatprep.subr.bf16.mxu0 0
    %1536 = vmatpush1.bf16.msra.mxu0 0
    %1537 = vmatprep.subr.bf16.mxu0 0
    %1538 = vmatpush1.bf16.msra.mxu0 0
    %1539 = vmatprep.subr.bf16.mxu0 0
    %1540 = vmatpush1.bf16.msra.mxu0 0
    %1541 = vmatprep.subr.bf16.mxu0 0
    %1542 = vmatpush1.bf16.msra.mxu0 0
    %1543 = vmatprep.subr.bf16.mxu0 0
    %1544 = vmatpush1.bf16.msra.mxu0 0
    %1545 = vmatprep.mubr.bf16.mxu0 0
    %1546 = vmatmul.mubr.bf16.gmra.mrb[0].mxu0 %v1350
    %v1547 = vpop.f32.mrb[0].mxu0
    %v1548 = vadd.f32 %v1508, %v1547
    %v1549 = vpop.f32.mrb[0].mxu0
    %v1550 = vpop.f32.mrb[0].mxu0
    %v1551 = vpop.f32.mrb[0].mxu0
    %1552 = vdwg.mxu0
    %v1553 = vsel %vm53, %v1548, %v1472
    %1554 = vmatprep.subr.bf16.mxu0 0
    %1555 = vmatpush1.bf16.msra.mxu0 %v428
    %1556 = vmatprep.subr.bf16.mxu0 0
    %1557 = vmatpush1.bf16.msra.mxu0 %v429
    %1558 = vmatprep.subr.bf16.mxu0 0
    %1559 = vmatpush1.bf16.msra.mxu0 0
    %1560 = vmatprep.subr.bf16.mxu0 0
    %1561 = vmatpush1.bf16.msra.mxu0 0
    %1562 = vmatprep.subr.bf16.mxu0 0
    %1563 = vmatpush1.bf16.msra.mxu0 0
    %1564 = vmatprep.subr.bf16.mxu0 0
    %1565 = vmatpush1.bf16.msra.mxu0 0
    %1566 = vmatprep.subr.bf16.mxu0 0
    %1567 = vmatpush1.bf16.msra.mxu0 0
    %1568 = vmatprep.subr.bf16.mxu0 0
    %1569 = vmatpush1.bf16.msra.mxu0 0
    %1570 = vmatprep.subr.bf16.mxu0 0
    %1571 = vmatpush1.bf16.msra.mxu0 0
    %1572 = vmatprep.subr.bf16.mxu0 0
    %1573 = vmatpush1.bf16.msra.mxu0 0
    %1574 = vmatprep.subr.bf16.mxu0 0
    %1575 = vmatpush1.bf16.msra.mxu0 0
    %1576 = vmatprep.subr.bf16.mxu0 0
    %1577 = vmatpush1.bf16.msra.mxu0 0
    %1578 = vmatprep.subr.bf16.mxu0 0
    %1579 = vmatpush1.bf16.msra.mxu0 0
    %1580 = vmatprep.subr.bf16.mxu0 0
    %1581 = vmatpush1.bf16.msra.mxu0 0
    %1582 = vmatprep.subr.bf16.mxu0 0
    %1583 = vmatpush1.bf16.msra.mxu0 0
    %1584 = vmatprep.subr.bf16.mxu0 0
    %1585 = vmatpush1.bf16.msra.mxu0 0
    %1586 = vmatprep.mubr.bf16.mxu0 0
    %1587 = vmatmul.mubr.bf16.gmra.mrb[0].mxu0 %v1307
    %v1588 = vpop.f32.mrb[0].mxu0
    %v1589 = vadd.f32 0.0, %v1588
    %v1590 = vpop.f32.mrb[0].mxu0
    %v1591 = vpop.f32.mrb[0].mxu0
    %v1592 = vpop.f32.mrb[0].mxu0
    %1593 = vdwg.mxu0
    %1594 = vmatprep.subr.bf16.mxu0 0
    %1595 = vmatpush1.bf16.msra.mxu0 %v480
    %1596 = vmatprep.subr.bf16.mxu0 0
    %1597 = vmatpush1.bf16.msra.mxu0 %v481
    %1598 = vmatprep.subr.bf16.mxu0 0
    %1599 = vmatpush1.bf16.msra.mxu0 0
    %1600 = vmatprep.subr.bf16.mxu0 0
    %1601 = vmatpush1.bf16.msra.mxu0 0
    %1602 = vmatprep.subr.bf16.mxu0 0
    %1603 = vmatpush1.bf16.msra.mxu0 0
    %1604 = vmatprep.subr.bf16.mxu0 0
    %1605 = vmatpush1.bf16.msra.mxu0 0
    %1606 = vmatprep.subr.bf16.mxu0 0
    %1607 = vmatpush1.bf16.msra.mxu0 0
    %1608 = vmatprep.subr.bf16.mxu0 0
    %1609 = vmatpush1.bf16.msra.mxu0 0
    %1610 = vmatprep.subr.bf16.mxu0 0
    %1611 = vmatpush1.bf16.msra.mxu0 0
    %1612 = vmatprep.subr.bf16.mxu0 0
    %1613 = vmatpush1.bf16.msra.mxu0 0
    %1614 = vmatprep.subr.bf16.mxu0 0
    %1615 = vmatpush1.bf16.msra.mxu0 0
    %1616 = vmatprep.subr.bf16.mxu0 0
    %1617 = vmatpush1.bf16.msra.mxu0 0
    %1618 = vmatprep.subr.bf16.mxu0 0
    %1619 = vmatpush1.bf16.msra.mxu0 0
    %1620 = vmatprep.subr.bf16.mxu0 0
    %1621 = vmatpush1.bf16.msra.mxu0 0
    %1622 = vmatprep.subr.bf16.mxu0 0
    %1623 = vmatpush1.bf16.msra.mxu0 0
    %1624 = vmatprep.subr.bf16.mxu0 0
    %1625 = vmatpush1.bf16.msra.mxu0 0
    %1626 = vmatprep.mubr.bf16.mxu0 0
    %1627 = vmatmul.mubr.bf16.gmra.mrb[0].mxu0 %v1350
    %v1628 = vpop.f32.mrb[0].mxu0
    %v1629 = vadd.f32 %v1589, %v1628
    %v1630 = vpop.f32.mrb[0].mxu0
    %v1631 = vpop.f32.mrb[0].mxu0
    %v1632 = vpop.f32.mrb[0].mxu0
    %1633 = vdwg.mxu0
    %v1634 = vsel %vm56, %v1629, %v1553
    %v1635 = vadd.f32 %v1634, %v40
    %v1636 = vtanh.pop %v1635
    %v1637 = vxor.u32 %v1635, 2147483648
    %v1638 = vmul.f32 %v1637, 1.442695
    %v1639 = vpow.pop %v1638
    %v1640 = vadd.f32 %v1639, 1.0
    %v1641 = vrcp.pop %v1640
    %v1642 = vmul.f32 1.0, %v1641
    %v1643 = vsel %vm45, %v1636, %v1642
    %v1644 = vmul.f32 %v1643, %v1292
    %1646 = vrot.lane.b32.xlu0 %v1643, 64
    %v1647 = vpop.permute.xlu0 %1646
    %v1649 = vmul.f32 %v1643, %v1647
    %1651 = vrot.lane.b32.xlu0 %v1649, 32
    %v1652 = vpop.permute.xlu0 %1651
    %v1654 = vadd.f32 %v1644, %v1652
    %v1655 = vtanh.pop %v1654
    %1657 = vrot.lane.b32.xlu0 %v1655, 64
    %v1658 = vpop.permute.xlu0 %1657
    %v1660 = vmul.f32 %v1643, %v1658
    %s1661 = scalar_lea.vmem %s0, 32
    %v1662 = vld [vmem:[%s1661] sm:$0xff]
    %1664 = vrot.lane.b32.xlu0 %v1660, 32
    %v1665 = vpop.permute.xlu0 %1664
    %v1667 = vrot.slane %v1665, 6
    %v1668 = vsel %vm57, %v1662, %v1667
    %v1669 = vpack.c.bf16 %v1668, %v1668
    %v1670 = vpack.c.bf16 %v1660, %v1660
    %1672 = vrot.lane.b32.xlu0 %v1670, 32
    %v1673 = vpop.permute.xlu0 %1672
    %v1675 = vsel %vm81, %v1673, 0
    %1677 = vmatprep.subr.bf16.mxu0 0
    %1678 = vmatpush1.bf16.msra.mxu0 %v77
    %1679 = vmatprep.subr.bf16.mxu0 0
    %1680 = vmatpush1.bf16.msra.mxu0 %v78
    %1681 = vmatprep.subr.bf16.mxu0 0
    %1682 = vmatpush1.bf16.msra.mxu0 0
    %1683 = vmatprep.subr.bf16.mxu0 0
    %1684 = vmatpush1.bf16.msra.mxu0 0
    %1685 = vmatprep.subr.bf16.mxu0 0
    %1686 = vmatpush1.bf16.msra.mxu0 0
    %1687 = vmatprep.subr.bf16.mxu0 0
    %1688 = vmatpush1.bf16.msra.mxu0 0
    %1689 = vmatprep.subr.bf16.mxu0 0
    %1690 = vmatpush1.bf16.msra.mxu0 0
    %1691 = vmatprep.subr.bf16.mxu0 0
    %1692 = vmatpush1.bf16.msra.mxu0 0
    %1693 = vmatprep.subr.bf16.mxu0 0
    %1694 = vmatpush1.bf16.msra.mxu0 0
    %1695 = vmatprep.subr.bf16.mxu0 0
    %1696 = vmatpush1.bf16.msra.mxu0 0
    %1697 = vmatprep.subr.bf16.mxu0 0
    %1698 = vmatpush1.bf16.msra.mxu0 0
    %1699 = vmatprep.subr.bf16.mxu0 0
    %1700 = vmatpush1.bf16.msra.mxu0 0
    %1701 = vmatprep.subr.bf16.mxu0 0
    %1702 = vmatpush1.bf16.msra.mxu0 0
    %1703 = vmatprep.subr.bf16.mxu0 0
    %1704 = vmatpush1.bf16.msra.mxu0 0
    %1705 = vmatprep.subr.bf16.mxu0 0
    %1706 = vmatpush1.bf16.msra.mxu0 0
    %1707 = vmatprep.subr.bf16.mxu0 0
    %1708 = vmatpush1.bf16.msra.mxu0 0
    %1709 = vmatprep.mubr.bf16.mxu0 0
    %1710 = vmatmul.mubr.bf16.gmra.mrb[0].mxu0 %v1675
    %v1711 = vpop.f32.mrb[0].mxu0
    %v1712 = vadd.f32 0.0, %v1711
    %v1713 = vpop.f32.mrb[0].mxu0
    %v1714 = vpop.f32.mrb[0].mxu0
    %v1715 = vpop.f32.mrb[0].mxu0
    %1716 = vdwg.mxu0
    %v1718 = vsel %vm81, %v1669, 0
    %1720 = vmatprep.subr.bf16.mxu0 0
    %1721 = vmatpush1.bf16.msra.mxu0 %v133
    %1722 = vmatprep.subr.bf16.mxu0 0
    %1723 = vmatpush1.bf16.msra.mxu0 %v134
    %1724 = vmatprep.subr.bf16.mxu0 0
    %1725 = vmatpush1.bf16.msra.mxu0 0
    %1726 = vmatprep.subr.bf16.mxu0 0
    %1727 = vmatpush1.bf16.msra.mxu0 0
    %1728 = vmatprep.subr.bf16.mxu0 0
    %1729 = vmatpush1.bf16.msra.mxu0 0
    %1730 = vmatprep.subr.bf16.mxu0 0
    %1731 = vmatpush1.bf16.msra.mxu0 0
    %1732 = vmatprep.subr.bf16.mxu0 0
    %1733 = vmatpush1.bf16.msra.mxu0 0
    %1734 = vmatprep.subr.bf16.mxu0 0
    %1735 = vmatpush1.bf16.msra.mxu0 0
    %1736 = vmatprep.subr.bf16.mxu0 0
    %1737 = vmatpush1.bf16.msra.mxu0 0
    %1738 = vmatprep.subr.bf16.mxu0 0
    %1739 = vmatpush1.bf16.msra.mxu0 0
    %1740 = vmatprep.subr.bf16.mxu0 0
    %1741 = vmatpush1.bf16.msra.mxu0 0
    %1742 = vmatprep.subr.bf16.mxu0 0
    %1743 = vmatpush1.bf16.msra.mxu0 0
    %1744 = vmatprep.subr.bf16.mxu0 0
    %1745 = vmatpush1.bf16.msra.mxu0 0
    %1746 = vmatprep.subr.bf16.mxu0 0
    %1747 = vmatpush1.bf16.msra.mxu0 0
    %1748 = vmatprep.subr.bf16.mxu0 0
    %1749 = vmatpush1.bf16.msra.mxu0 0
    %1750 = vmatprep.subr.bf16.mxu0 0
    %1751 = vmatpush1.bf16.msra.mxu0 0
    %1752 = vmatprep.mubr.bf16.mxu0 0
    %1753 = vmatmul.mubr.bf16.gmra.mrb[0].mxu0 %v1718
    %v1754 = vpop.f32.mrb[0].mxu0
    %v1755 = vadd.f32 %v1712, %v1754
    %v1756 = vpop.f32.mrb[0].mxu0
    %v1757 = vpop.f32.mrb[0].mxu0
    %v1758 = vpop.f32.mrb[0].mxu0
    %1759 = vdwg.mxu0
    %1760 = vmatprep.subr.bf16.mxu0 0
    %1761 = vmatpush1.bf16.msra.mxu0 %v198
    %1762 = vmatprep.subr.bf16.mxu0 0
    %1763 = vmatpush1.bf16.msra.mxu0 %v199
    %1764 = vmatprep.subr.bf16.mxu0 0
    %1765 = vmatpush1.bf16.msra.mxu0 0
    %1766 = vmatprep.subr.bf16.mxu0 0
    %1767 = vmatpush1.bf16.msra.mxu0 0
    %1768 = vmatprep.subr.bf16.mxu0 0
    %1769 = vmatpush1.bf16.msra.mxu0 0
    %1770 = vmatprep.subr.bf16.mxu0 0
    %1771 = vmatpush1.bf16.msra.mxu0 0
    %1772 = vmatprep.subr.bf16.mxu0 0
    %1773 = vmatpush1.bf16.msra.mxu0 0
    %1774 = vmatprep.subr.bf16.mxu0 0
    %1775 = vmatpush1.bf16.msra.mxu0 0
    %1776 = vmatprep.subr.bf16.mxu0 0
    %1777 = vmatpush1.bf16.msra.mxu0 0
    %1778 = vmatprep.subr.bf16.mxu0 0
    %1779 = vmatpush1.bf16.msra.mxu0 0
    %1780 = vmatprep.subr.bf16.mxu0 0
    %1781 = vmatpush1.bf16.msra.mxu0 0
    %1782 = vmatprep.subr.bf16.mxu0 0
    %1783 = vmatpush1.bf16.msra.mxu0 0
    %1784 = vmatprep.subr.bf16.mxu0 0
    %1785 = vmatpush1.bf16.msra.mxu0 0
    %1786 = vmatprep.subr.bf16.mxu0 0
    %1787 = vmatpush1.bf16.msra.mxu0 0
    %1788 = vmatprep.subr.bf16.mxu0 0
    %1789 = vmatpush1.bf16.msra.mxu0 0
    %1790 = vmatprep.subr.bf16.mxu0 0
    %1791 = vmatpush1.bf16.msra.mxu0 0
    %1792 = vmatprep.mubr.bf16.mxu0 0
    %1793 = vmatmul.mubr.bf16.gmra.mrb[0].mxu0 %v1675
    %v1794 = vpop.f32.mrb[0].mxu0
    %v1795 = vadd.f32 0.0, %v1794
    %v1796 = vpop.f32.mrb[0].mxu0
    %v1797 = vpop.f32.mrb[0].mxu0
    %v1798 = vpop.f32.mrb[0].mxu0
    %1799 = vdwg.mxu0
    %1800 = vmatprep.subr.bf16.mxu0 0
    %1801 = vmatpush1.bf16.msra.mxu0 %v250
    %1802 = vmatprep.subr.bf16.mxu0 0
    %1803 = vmatpush1.bf16.msra.mxu0 %v251
    %1804 = vmatprep.subr.bf16.mxu0 0
    %1805 = vmatpush1.bf16.msra.mxu0 0
    %1806 = vmatprep.subr.bf16.mxu0 0
    %1807 = vmatpush1.bf16.msra.mxu0 0
    %1808 = vmatprep.subr.bf16.mxu0 0
    %1809 = vmatpush1.bf16.msra.mxu0 0
    %1810 = vmatprep.subr.bf16.mxu0 0
    %1811 = vmatpush1.bf16.msra.mxu0 0
    %1812 = vmatprep.subr.bf16.mxu0 0
    %1813 = vmatpush1.bf16.msra.mxu0 0
    %1814 = vmatprep.subr.bf16.mxu0 0
    %1815 = vmatpush1.bf16.msra.mxu0 0
    %1816 = vmatprep.subr.bf16.mxu0 0
    %1817 = vmatpush1.bf16.msra.mxu0 0
    %1818 = vmatprep.subr.bf16.mxu0 0
    %1819 = vmatpush1.bf16.msra.mxu0 0
    %1820 = vmatprep.subr.bf16.mxu0 0
    %1821 = vmatpush1.bf16.msra.mxu0 0
    %1822 = vmatprep.subr.bf16.mxu0 0
    %1823 = vmatpush1.bf16.msra.mxu0 0
    %1824 = vmatprep.subr.bf16.mxu0 0
    %1825 = vmatpush1.bf16.msra.mxu0 0
    %1826 = vmatprep.subr.bf16.mxu0 0
    %1827 = vmatpush1.bf16.msra.mxu0 0
    %1828 = vmatprep.subr.bf16.mxu0 0
    %1829 = vmatpush1.bf16.msra.mxu0 0
    %1830 = vmatprep.subr.bf16.mxu0 0
    %1831 = vmatpush1.bf16.msra.mxu0 0
    %1832 = vmatprep.mubr.bf16.mxu0 0
    %1833 = vmatmul.mubr.bf16.gmra.mrb[0].mxu0 %v1718
    %v1834 = vpop.f32.mrb[0].mxu0
    %v1835 = vadd.f32 %v1795, %v1834
    %v1836 = vpop.f32.mrb[0].mxu0
    %v1837 = vpop.f32.mrb[0].mxu0
    %v1838 = vpop.f32.mrb[0].mxu0
    %1839 = vdwg.mxu0
    %v1840 = vsel %vm50, %v1835, %v1755
    %1841 = vmatprep.subr.bf16.mxu0 0
    %1842 = vmatpush1.bf16.msra.mxu0 %v313
    %1843 = vmatprep.subr.bf16.mxu0 0
    %1844 = vmatpush1.bf16.msra.mxu0 %v314
    %1845 = vmatprep.subr.bf16.mxu0 0
    %1846 = vmatpush1.bf16.msra.mxu0 0
    %1847 = vmatprep.subr.bf16.mxu0 0
    %1848 = vmatpush1.bf16.msra.mxu0 0
    %1849 = vmatprep.subr.bf16.mxu0 0
    %1850 = vmatpush1.bf16.msra.mxu0 0
    %1851 = vmatprep.subr.bf16.mxu0 0
    %1852 = vmatpush1.bf16.msra.mxu0 0
    %1853 = vmatprep.subr.bf16.mxu0 0
    %1854 = vmatpush1.bf16.msra.mxu0 0
    %1855 = vmatprep.subr.bf16.mxu0 0
    %1856 = vmatpush1.bf16.msra.mxu0 0
    %1857 = vmatprep.subr.bf16.mxu0 0
    %1858 = vmatpush1.bf16.msra.mxu0 0
    %1859 = vmatprep.subr.bf16.mxu0 0
    %1860 = vmatpush1.bf16.msra.mxu0 0
    %1861 = vmatprep.subr.bf16.mxu0 0
    %1862 = vmatpush1.bf16.msra.mxu0 0
    %1863 = vmatprep.subr.bf16.mxu0 0
    %1864 = vmatpush1.bf16.msra.mxu0 0
    %1865 = vmatprep.subr.bf16.mxu0 0
    %1866 = vmatpush1.bf16.msra.mxu0 0
    %1867 = vmatprep.subr.bf16.mxu0 0
    %1868 = vmatpush1.bf16.msra.mxu0 0
    %1869 = vmatprep.subr.bf16.mxu0 0
    %1870 = vmatpush1.bf16.msra.mxu0 0
    %1871 = vmatprep.subr.bf16.mxu0 0
    %1872 = vmatpush1.bf16.msra.mxu0 0
    %1873 = vmatprep.mubr.bf16.mxu0 0
    %1874 = vmatmul.mubr.bf16.gmra.mrb[0].mxu0 %v1675
    %v1875 = vpop.f32.mrb[0].mxu0
    %v1876 = vadd.f32 0.0, %v1875
    %v1877 = vpop.f32.mrb[0].mxu0
    %v1878 = vpop.f32.mrb[0].mxu0
    %v1879 = vpop.f32.mrb[0].mxu0
    %1880 = vdwg.mxu0
    %1881 = vmatprep.subr.bf16.mxu0 0
    %1882 = vmatpush1.bf16.msra.mxu0 %v365
    %1883 = vmatprep.subr.bf16.mxu0 0
    %1884 = vmatpush1.bf16.msra.mxu0 %v366
    %1885 = vmatprep.subr.bf16.mxu0 0
    %1886 = vmatpush1.bf16.msra.mxu0 0
    %1887 = vmatprep.subr.bf16.mxu0 0
    %1888 = vmatpush1.bf16.msra.mxu0 0
    %1889 = vmatprep.subr.bf16.mxu0 0
    %1890 = vmatpush1.bf16.msra.mxu0 0
    %1891 = vmatprep.subr.bf16.mxu0 0
    %1892 = vmatpush1.bf16.msra.mxu0 0
    %1893 = vmatprep.subr.bf16.mxu0 0
    %1894 = vmatpush1.bf16.msra.mxu0 0
    %1895 = vmatprep.subr.bf16.mxu0 0
    %1896 = vmatpush1.bf16.msra.mxu0 0
    %1897 = vmatprep.subr.bf16.mxu0 0
    %1898 = vmatpush1.bf16.msra.mxu0 0
    %1899 = vmatprep.subr.bf16.mxu0 0
    %1900 = vmatpush1.bf16.msra.mxu0 0
    %1901 = vmatprep.subr.bf16.mxu0 0
    %1902 = vmatpush1.bf16.msra.mxu0 0
    %1903 = vmatprep.subr.bf16.mxu0 0
    %1904 = vmatpush1.bf16.msra.mxu0 0
    %1905 = vmatprep.subr.bf16.mxu0 0
    %1906 = vmatpush1.bf16.msra.mxu0 0
    %1907 = vmatprep.subr.bf16.mxu0 0
    %1908 = vmatpush1.bf16.msra.mxu0 0
    %1909 = vmatprep.subr.bf16.mxu0 0
    %1910 = vmatpush1.bf16.msra.mxu0 0
    %1911 = vmatprep.subr.bf16.mxu0 0
    %1912 = vmatpush1.bf16.msra.mxu0 0
    %1913 = vmatprep.mubr.bf16.mxu0 0
    %1914 = vmatmul.mubr.bf16.gmra.mrb[0].mxu0 %v1718
    %v1915 = vpop.f32.mrb[0].mxu0
    %v1916 = vadd.f32 %v1876, %v1915
    %v1917 = vpop.f32.mrb[0].mxu0
    %v1918 = vpop.f32.mrb[0].mxu0
    %v1919 = vpop.f32.mrb[0].mxu0
    %1920 = vdwg.mxu0
    %v1921 = vsel %vm53, %v1916, %v1840
    %1922 = vmatprep.subr.bf16.mxu0 0
    %1923 = vmatpush1.bf16.msra.mxu0 %v428
    %1924 = vmatprep.subr.bf16.mxu0 0
    %1925 = vmatpush1.bf16.msra.mxu0 %v429
    %1926 = vmatprep.subr.bf16.mxu0 0
    %1927 = vmatpush1.bf16.msra.mxu0 0
    %1928 = vmatprep.subr.bf16.mxu0 0
    %1929 = vmatpush1.bf16.msra.mxu0 0
    %1930 = vmatprep.subr.bf16.mxu0 0
    %1931 = vmatpush1.bf16.msra.mxu0 0
    %1932 = vmatprep.subr.bf16.mxu0 0
    %1933 = vmatpush1.bf16.msra.mxu0 0
    %1934 = vmatprep.subr.bf16.mxu0 0
    %1935 = vmatpush1.bf16.msra.mxu0 0
    %1936 = vmatprep.subr.bf16.mxu0 0
    %1937 = vmatpush1.bf16.msra.mxu0 0
    %1938 = vmatprep.subr.bf16.mxu0 0
    %1939 = vmatpush1.bf16.msra.mxu0 0
    %1940 = vmatprep.subr.bf16.mxu0 0
    %1941 = vmatpush1.bf16.msra.mxu0 0
    %1942 = vmatprep.subr.bf16.mxu0 0
    %1943 = vmatpush1.bf16.msra.mxu0 0
    %1944 = vmatprep.subr.bf16.mxu0 0
    %1945 = vmatpush1.bf16.msra.mxu0 0
    %1946 = vmatprep.subr.bf16.mxu0 0
    %1947 = vmatpush1.bf16.msra.mxu0 0
    %1948 = vmatprep.subr.bf16.mxu0 0
    %1949 = vmatpush1.bf16.msra.mxu0 0
    %1950 = vmatprep.subr.bf16.mxu0 0
    %1951 = vmatpush1.bf16.msra.mxu0 0
    %1952 = vmatprep.subr.bf16.mxu0 0
    %1953 = vmatpush1.bf16.msra.mxu0 0
    %1954 = vmatprep.mubr.bf16.mxu0 0
    %1955 = vmatmul.mubr.bf16.gmra.mrb[0].mxu0 %v1675
    %v1956 = vpop.f32.mrb[0].mxu0
    %v1957 = vadd.f32 0.0, %v1956
    %v1958 = vpop.f32.mrb[0].mxu0
    %v1959 = vpop.f32.mrb[0].mxu0
    %v1960 = vpop.f32.mrb[0].mxu0
    %1961 = vdwg.mxu0
    %1962 = vmatprep.subr.bf16.mxu0 0
    %1963 = vmatpush1.bf16.msra.mxu0 %v480
    %1964 = vmatprep.subr.bf16.mxu0 0
    %1965 = vmatpush1.bf16.msra.mxu0 %v481
    %1966 = vmatprep.subr.bf16.mxu0 0
    %1967 = vmatpush1.bf16.msra.mxu0 0
    %1968 = vmatprep.subr.bf16.mxu0 0
    %1969 = vmatpush1.bf16.msra.mxu0 0
    %1970 = vmatprep.subr.bf16.mxu0 0
    %1971 = vmatpush1.bf16.msra.mxu0 0
    %1972 = vmatprep.subr.bf16.mxu0 0
    %1973 = vmatpush1.bf16.msra.mxu0 0
    %1974 = vmatprep.subr.bf16.mxu0 0
    %1975 = vmatpush1.bf16.msra.mxu0 0
    %1976 = vmatprep.subr.bf16.mxu0 0
    %1977 = vmatpush1.bf16.msra.mxu0 0
    %1978 = vmatprep.subr.bf16.mxu0 0
    %1979 = vmatpush1.bf16.msra.mxu0 0
    %1980 = vmatprep.subr.bf16.mxu0 0
    %1981 = vmatpush1.bf16.msra.mxu0 0
    %1982 = vmatprep.subr.bf16.mxu0 0
    %1983 = vmatpush1.bf16.msra.mxu0 0
    %1984 = vmatprep.subr.bf16.mxu0 0
    %1985 = vmatpush1.bf16.msra.mxu0 0
    %1986 = vmatprep.subr.bf16.mxu0 0
    %1987 = vmatpush1.bf16.msra.mxu0 0
    %1988 = vmatprep.subr.bf16.mxu0 0
    %1989 = vmatpush1.bf16.msra.mxu0 0
    %1990 = vmatprep.subr.bf16.mxu0 0
    %1991 = vmatpush1.bf16.msra.mxu0 0
    %1992 = vmatprep.subr.bf16.mxu0 0
    %1993 = vmatpush1.bf16.msra.mxu0 0
    %1994 = vmatprep.mubr.bf16.mxu0 0
    %1995 = vmatmul.mubr.bf16.gmra.mrb[0].mxu0 %v1718
    %v1996 = vpop.f32.mrb[0].mxu0
    %v1997 = vadd.f32 %v1957, %v1996
    %v1998 = vpop.f32.mrb[0].mxu0
    %v1999 = vpop.f32.mrb[0].mxu0
    %v2000 = vpop.f32.mrb[0].mxu0
    %2001 = vdwg.mxu0
    %v2002 = vsel %vm56, %v1997, %v1921
    %v2003 = vadd.f32 %v2002, %v40
    %v2004 = vtanh.pop %v2003
    %v2005 = vxor.u32 %v2003, 2147483648
    %v2006 = vmul.f32 %v2005, 1.442695
    %v2007 = vpow.pop %v2006
    %v2008 = vadd.f32 %v2007, 1.0
    %v2009 = vrcp.pop %v2008
    %v2010 = vmul.f32 1.0, %v2009
    %v2011 = vsel %vm45, %v2004, %v2010
    %v2012 = vmul.f32 %v2011, %v1654
    %2014 = vrot.lane.b32.xlu0 %v2011, 64
    %v2015 = vpop.permute.xlu0 %2014
    %v2017 = vmul.f32 %v2011, %v2015
    %2019 = vrot.lane.b32.xlu0 %v2017, 32
    %v2020 = vpop.permute.xlu0 %2019
    %v2022 = vadd.f32 %v2012, %v2020
    %v2023 = vtanh.pop %v2022
    %2025 = vrot.lane.b32.xlu0 %v2023, 64
    %v2026 = vpop.permute.xlu0 %2025
    %v2028 = vmul.f32 %v2011, %v2026
    %s2029 = scalar_lea.vmem %s0, 40
    %v2030 = vld [vmem:[%s2029] sm:$0xff]
    %2032 = vrot.lane.b32.xlu0 %v2028, 32
    %v2033 = vpop.permute.xlu0 %2032
    %v2035 = vrot.slane %v2033, 6
    %v2036 = vsel %vm57, %v2030, %v2035
    %v2037 = vpack.c.bf16 %v2036, %v2036
    %v2038 = vpack.c.bf16 %v2028, %v2028
    %2040 = vrot.lane.b32.xlu0 %v2038, 32
    %v2041 = vpop.permute.xlu0 %2040
    %v2043 = vsel %vm81, %v2041, 0
    %2045 = vmatprep.subr.bf16.mxu0 0
    %2046 = vmatpush1.bf16.msra.mxu0 %v77
    %2047 = vmatprep.subr.bf16.mxu0 0
    %2048 = vmatpush1.bf16.msra.mxu0 %v78
    %2049 = vmatprep.subr.bf16.mxu0 0
    %2050 = vmatpush1.bf16.msra.mxu0 0
    %2051 = vmatprep.subr.bf16.mxu0 0
    %2052 = vmatpush1.bf16.msra.mxu0 0
    %2053 = vmatprep.subr.bf16.mxu0 0
    %2054 = vmatpush1.bf16.msra.mxu0 0
    %2055 = vmatprep.subr.bf16.mxu0 0
    %2056 = vmatpush1.bf16.msra.mxu0 0
    %2057 = vmatprep.subr.bf16.mxu0 0
    %2058 = vmatpush1.bf16.msra.mxu0 0
    %2059 = vmatprep.subr.bf16.mxu0 0
    %2060 = vmatpush1.bf16.msra.mxu0 0
    %2061 = vmatprep.subr.bf16.mxu0 0
    %2062 = vmatpush1.bf16.msra.mxu0 0
    %2063 = vmatprep.subr.bf16.mxu0 0
    %2064 = vmatpush1.bf16.msra.mxu0 0
    %2065 = vmatprep.subr.bf16.mxu0 0
    %2066 = vmatpush1.bf16.msra.mxu0 0
    %2067 = vmatprep.subr.bf16.mxu0 0
    %2068 = vmatpush1.bf16.msra.mxu0 0
    %2069 = vmatprep.subr.bf16.mxu0 0
    %2070 = vmatpush1.bf16.msra.mxu0 0
    %2071 = vmatprep.subr.bf16.mxu0 0
    %2072 = vmatpush1.bf16.msra.mxu0 0
    %2073 = vmatprep.subr.bf16.mxu0 0
    %2074 = vmatpush1.bf16.msra.mxu0 0
    %2075 = vmatprep.subr.bf16.mxu0 0
    %2076 = vmatpush1.bf16.msra.mxu0 0
    %2077 = vmatprep.mubr.bf16.mxu0 0
    %2078 = vmatmul.mubr.bf16.gmra.mrb[0].mxu0 %v2043
    %v2079 = vpop.f32.mrb[0].mxu0
    %v2080 = vadd.f32 0.0, %v2079
    %v2081 = vpop.f32.mrb[0].mxu0
    %v2082 = vpop.f32.mrb[0].mxu0
    %v2083 = vpop.f32.mrb[0].mxu0
    %2084 = vdwg.mxu0
    %v2086 = vsel %vm81, %v2037, 0
    %2088 = vmatprep.subr.bf16.mxu0 0
    %2089 = vmatpush1.bf16.msra.mxu0 %v133
    %2090 = vmatprep.subr.bf16.mxu0 0
    %2091 = vmatpush1.bf16.msra.mxu0 %v134
    %2092 = vmatprep.subr.bf16.mxu0 0
    %2093 = vmatpush1.bf16.msra.mxu0 0
    %2094 = vmatprep.subr.bf16.mxu0 0
    %2095 = vmatpush1.bf16.msra.mxu0 0
    %2096 = vmatprep.subr.bf16.mxu0 0
    %2097 = vmatpush1.bf16.msra.mxu0 0
    %2098 = vmatprep.subr.bf16.mxu0 0
    %2099 = vmatpush1.bf16.msra.mxu0 0
    %2100 = vmatprep.subr.bf16.mxu0 0
    %2101 = vmatpush1.bf16.msra.mxu0 0
    %2102 = vmatprep.subr.bf16.mxu0 0
    %2103 = vmatpush1.bf16.msra.mxu0 0
    %2104 = vmatprep.subr.bf16.mxu0 0
    %2105 = vmatpush1.bf16.msra.mxu0 0
    %2106 = vmatprep.subr.bf16.mxu0 0
    %2107 = vmatpush1.bf16.msra.mxu0 0
    %2108 = vmatprep.subr.bf16.mxu0 0
    %2109 = vmatpush1.bf16.msra.mxu0 0
    %2110 = vmatprep.subr.bf16.mxu0 0
    %2111 = vmatpush1.bf16.msra.mxu0 0
    %2112 = vmatprep.subr.bf16.mxu0 0
    %2113 = vmatpush1.bf16.msra.mxu0 0
    %2114 = vmatprep.subr.bf16.mxu0 0
    %2115 = vmatpush1.bf16.msra.mxu0 0
    %2116 = vmatprep.subr.bf16.mxu0 0
    %2117 = vmatpush1.bf16.msra.mxu0 0
    %2118 = vmatprep.subr.bf16.mxu0 0
    %2119 = vmatpush1.bf16.msra.mxu0 0
    %2120 = vmatprep.mubr.bf16.mxu0 0
    %2121 = vmatmul.mubr.bf16.gmra.mrb[0].mxu0 %v2086
    %v2122 = vpop.f32.mrb[0].mxu0
    %v2123 = vadd.f32 %v2080, %v2122
    %v2124 = vpop.f32.mrb[0].mxu0
    %v2125 = vpop.f32.mrb[0].mxu0
    %v2126 = vpop.f32.mrb[0].mxu0
    %2127 = vdwg.mxu0
    %2128 = vmatprep.subr.bf16.mxu0 0
    %2129 = vmatpush1.bf16.msra.mxu0 %v198
    %2130 = vmatprep.subr.bf16.mxu0 0
    %2131 = vmatpush1.bf16.msra.mxu0 %v199
    %2132 = vmatprep.subr.bf16.mxu0 0
    %2133 = vmatpush1.bf16.msra.mxu0 0
    %2134 = vmatprep.subr.bf16.mxu0 0
    %2135 = vmatpush1.bf16.msra.mxu0 0
    %2136 = vmatprep.subr.bf16.mxu0 0
    %2137 = vmatpush1.bf16.msra.mxu0 0
    %2138 = vmatprep.subr.bf16.mxu0 0
    %2139 = vmatpush1.bf16.msra.mxu0 0
    %2140 = vmatprep.subr.bf16.mxu0 0
    %2141 = vmatpush1.bf16.msra.mxu0 0
    %2142 = vmatprep.subr.bf16.mxu0 0
    %2143 = vmatpush1.bf16.msra.mxu0 0
    %2144 = vmatprep.subr.bf16.mxu0 0
    %2145 = vmatpush1.bf16.msra.mxu0 0
    %2146 = vmatprep.subr.bf16.mxu0 0
    %2147 = vmatpush1.bf16.msra.mxu0 0
    %2148 = vmatprep.subr.bf16.mxu0 0
    %2149 = vmatpush1.bf16.msra.mxu0 0
    %2150 = vmatprep.subr.bf16.mxu0 0
    %2151 = vmatpush1.bf16.msra.mxu0 0
    %2152 = vmatprep.subr.bf16.mxu0 0
    %2153 = vmatpush1.bf16.msra.mxu0 0
    %2154 = vmatprep.subr.bf16.mxu0 0
    %2155 = vmatpush1.bf16.msra.mxu0 0
    %2156 = vmatprep.subr.bf16.mxu0 0
    %2157 = vmatpush1.bf16.msra.mxu0 0
    %2158 = vmatprep.subr.bf16.mxu0 0
    %2159 = vmatpush1.bf16.msra.mxu0 0
    %2160 = vmatprep.mubr.bf16.mxu0 0
    %2161 = vmatmul.mubr.bf16.gmra.mrb[0].mxu0 %v2043
    %v2162 = vpop.f32.mrb[0].mxu0
    %v2163 = vadd.f32 0.0, %v2162
    %v2164 = vpop.f32.mrb[0].mxu0
    %v2165 = vpop.f32.mrb[0].mxu0
    %v2166 = vpop.f32.mrb[0].mxu0
    %2167 = vdwg.mxu0
    %2168 = vmatprep.subr.bf16.mxu0 0
    %2169 = vmatpush1.bf16.msra.mxu0 %v250
    %2170 = vmatprep.subr.bf16.mxu0 0
    %2171 = vmatpush1.bf16.msra.mxu0 %v251
    %2172 = vmatprep.subr.bf16.mxu0 0
    %2173 = vmatpush1.bf16.msra.mxu0 0
    %2174 = vmatprep.subr.bf16.mxu0 0
    %2175 = vmatpush1.bf16.msra.mxu0 0
    %2176 = vmatprep.subr.bf16.mxu0 0
    %2177 = vmatpush1.bf16.msra.mxu0 0
    %2178 = vmatprep.subr.bf16.mxu0 0
    %2179 = vmatpush1.bf16.msra.mxu0 0
    %2180 = vmatprep.subr.bf16.mxu0 0
    %2181 = vmatpush1.bf16.msra.mxu0 0
    %2182 = vmatprep.subr.bf16.mxu0 0
    %2183 = vmatpush1.bf16.msra.mxu0 0
    %2184 = vmatprep.subr.bf16.mxu0 0
    %2185 = vmatpush1.bf16.msra.mxu0 0
    %2186 = vmatprep.subr.bf16.mxu0 0
    %2187 = vmatpush1.bf16.msra.mxu0 0
    %2188 = vmatprep.subr.bf16.mxu0 0
    %2189 = vmatpush1.bf16.msra.mxu0 0
    %2190 = vmatprep.subr.bf16.mxu0 0
    %2191 = vmatpush1.bf16.msra.mxu0 0
    %2192 = vmatprep.subr.bf16.mxu0 0
    %2193 = vmatpush1.bf16.msra.mxu0 0
    %2194 = vmatprep.subr.bf16.mxu0 0
    %2195 = vmatpush1.bf16.msra.mxu0 0
    %2196 = vmatprep.subr.bf16.mxu0 0
    %2197 = vmatpush1.bf16.msra.mxu0 0
    %2198 = vmatprep.subr.bf16.mxu0 0
    %2199 = vmatpush1.bf16.msra.mxu0 0
    %2200 = vmatprep.mubr.bf16.mxu0 0
    %2201 = vmatmul.mubr.bf16.gmra.mrb[0].mxu0 %v2086
    %v2202 = vpop.f32.mrb[0].mxu0
    %v2203 = vadd.f32 %v2163, %v2202
    %v2204 = vpop.f32.mrb[0].mxu0
    %v2205 = vpop.f32.mrb[0].mxu0
    %v2206 = vpop.f32.mrb[0].mxu0
    %2207 = vdwg.mxu0
    %v2208 = vsel %vm50, %v2203, %v2123
    %2209 = vmatprep.subr.bf16.mxu0 0
    %2210 = vmatpush1.bf16.msra.mxu0 %v313
    %2211 = vmatprep.subr.bf16.mxu0 0
    %2212 = vmatpush1.bf16.msra.mxu0 %v314
    %2213 = vmatprep.subr.bf16.mxu0 0
    %2214 = vmatpush1.bf16.msra.mxu0 0
    %2215 = vmatprep.subr.bf16.mxu0 0
    %2216 = vmatpush1.bf16.msra.mxu0 0
    %2217 = vmatprep.subr.bf16.mxu0 0
    %2218 = vmatpush1.bf16.msra.mxu0 0
    %2219 = vmatprep.subr.bf16.mxu0 0
    %2220 = vmatpush1.bf16.msra.mxu0 0
    %2221 = vmatprep.subr.bf16.mxu0 0
    %2222 = vmatpush1.bf16.msra.mxu0 0
    %2223 = vmatprep.subr.bf16.mxu0 0
    %2224 = vmatpush1.bf16.msra.mxu0 0
    %2225 = vmatprep.subr.bf16.mxu0 0
    %2226 = vmatpush1.bf16.msra.mxu0 0
    %2227 = vmatprep.subr.bf16.mxu0 0
    %2228 = vmatpush1.bf16.msra.mxu0 0
    %2229 = vmatprep.subr.bf16.mxu0 0
    %2230 = vmatpush1.bf16.msra.mxu0 0
    %2231 = vmatprep.subr.bf16.mxu0 0
    %2232 = vmatpush1.bf16.msra.mxu0 0
    %2233 = vmatprep.subr.bf16.mxu0 0
    %2234 = vmatpush1.bf16.msra.mxu0 0
    %2235 = vmatprep.subr.bf16.mxu0 0
    %2236 = vmatpush1.bf16.msra.mxu0 0
    %2237 = vmatprep.subr.bf16.mxu0 0
    %2238 = vmatpush1.bf16.msra.mxu0 0
    %2239 = vmatprep.subr.bf16.mxu0 0
    %2240 = vmatpush1.bf16.msra.mxu0 0
    %2241 = vmatprep.mubr.bf16.mxu0 0
    %2242 = vmatmul.mubr.bf16.gmra.mrb[0].mxu0 %v2043
    %v2243 = vpop.f32.mrb[0].mxu0
    %v2244 = vadd.f32 0.0, %v2243
    %v2245 = vpop.f32.mrb[0].mxu0
    %v2246 = vpop.f32.mrb[0].mxu0
    %v2247 = vpop.f32.mrb[0].mxu0
    %2248 = vdwg.mxu0
    %2249 = vmatprep.subr.bf16.mxu0 0
    %2250 = vmatpush1.bf16.msra.mxu0 %v365
    %2251 = vmatprep.subr.bf16.mxu0 0
    %2252 = vmatpush1.bf16.msra.mxu0 %v366
    %2253 = vmatprep.subr.bf16.mxu0 0
    %2254 = vmatpush1.bf16.msra.mxu0 0
    %2255 = vmatprep.subr.bf16.mxu0 0
    %2256 = vmatpush1.bf16.msra.mxu0 0
    %2257 = vmatprep.subr.bf16.mxu0 0
    %2258 = vmatpush1.bf16.msra.mxu0 0
    %2259 = vmatprep.subr.bf16.mxu0 0
    %2260 = vmatpush1.bf16.msra.mxu0 0
    %2261 = vmatprep.subr.bf16.mxu0 0
    %2262 = vmatpush1.bf16.msra.mxu0 0
    %2263 = vmatprep.subr.bf16.mxu0 0
    %2264 = vmatpush1.bf16.msra.mxu0 0
    %2265 = vmatprep.subr.bf16.mxu0 0
    %2266 = vmatpush1.bf16.msra.mxu0 0
    %2267 = vmatprep.subr.bf16.mxu0 0
    %2268 = vmatpush1.bf16.msra.mxu0 0
    %2269 = vmatprep.subr.bf16.mxu0 0
    %2270 = vmatpush1.bf16.msra.mxu0 0
    %2271 = vmatprep.subr.bf16.mxu0 0
    %2272 = vmatpush1.bf16.msra.mxu0 0
    %2273 = vmatprep.subr.bf16.mxu0 0
    %2274 = vmatpush1.bf16.msra.mxu0 0
    %2275 = vmatprep.subr.bf16.mxu0 0
    %2276 = vmatpush1.bf16.msra.mxu0 0
    %2277 = vmatprep.subr.bf16.mxu0 0
    %2278 = vmatpush1.bf16.msra.mxu0 0
    %2279 = vmatprep.subr.bf16.mxu0 0
    %2280 = vmatpush1.bf16.msra.mxu0 0
    %2281 = vmatprep.mubr.bf16.mxu0 0
    %2282 = vmatmul.mubr.bf16.gmra.mrb[0].mxu0 %v2086
    %v2283 = vpop.f32.mrb[0].mxu0
    %v2284 = vadd.f32 %v2244, %v2283
    %v2285 = vpop.f32.mrb[0].mxu0
    %v2286 = vpop.f32.mrb[0].mxu0
    %v2287 = vpop.f32.mrb[0].mxu0
    %2288 = vdwg.mxu0
    %v2289 = vsel %vm53, %v2284, %v2208
    %2290 = vmatprep.subr.bf16.mxu0 0
    %2291 = vmatpush1.bf16.msra.mxu0 %v428
    %2292 = vmatprep.subr.bf16.mxu0 0
    %2293 = vmatpush1.bf16.msra.mxu0 %v429
    %2294 = vmatprep.subr.bf16.mxu0 0
    %2295 = vmatpush1.bf16.msra.mxu0 0
    %2296 = vmatprep.subr.bf16.mxu0 0
    %2297 = vmatpush1.bf16.msra.mxu0 0
    %2298 = vmatprep.subr.bf16.mxu0 0
    %2299 = vmatpush1.bf16.msra.mxu0 0
    %2300 = vmatprep.subr.bf16.mxu0 0
    %2301 = vmatpush1.bf16.msra.mxu0 0
    %2302 = vmatprep.subr.bf16.mxu0 0
    %2303 = vmatpush1.bf16.msra.mxu0 0
    %2304 = vmatprep.subr.bf16.mxu0 0
    %2305 = vmatpush1.bf16.msra.mxu0 0
    %2306 = vmatprep.subr.bf16.mxu0 0
    %2307 = vmatpush1.bf16.msra.mxu0 0
    %2308 = vmatprep.subr.bf16.mxu0 0
    %2309 = vmatpush1.bf16.msra.mxu0 0
    %2310 = vmatprep.subr.bf16.mxu0 0
    %2311 = vmatpush1.bf16.msra.mxu0 0
    %2312 = vmatprep.subr.bf16.mxu0 0
    %2313 = vmatpush1.bf16.msra.mxu0 0
    %2314 = vmatprep.subr.bf16.mxu0 0
    %2315 = vmatpush1.bf16.msra.mxu0 0
    %2316 = vmatprep.subr.bf16.mxu0 0
    %2317 = vmatpush1.bf16.msra.mxu0 0
    %2318 = vmatprep.subr.bf16.mxu0 0
    %2319 = vmatpush1.bf16.msra.mxu0 0
    %2320 = vmatprep.subr.bf16.mxu0 0
    %2321 = vmatpush1.bf16.msra.mxu0 0
    %2322 = vmatprep.mubr.bf16.mxu0 0
    %2323 = vmatmul.mubr.bf16.gmra.mrb[0].mxu0 %v2043
    %v2324 = vpop.f32.mrb[0].mxu0
    %v2325 = vadd.f32 0.0, %v2324
    %v2326 = vpop.f32.mrb[0].mxu0
    %v2327 = vpop.f32.mrb[0].mxu0
    %v2328 = vpop.f32.mrb[0].mxu0
    %2329 = vdwg.mxu0
    %2330 = vmatprep.subr.bf16.mxu0 0
    %2331 = vmatpush1.bf16.msra.mxu0 %v480
    %2332 = vmatprep.subr.bf16.mxu0 0
    %2333 = vmatpush1.bf16.msra.mxu0 %v481
    %2334 = vmatprep.subr.bf16.mxu0 0
    %2335 = vmatpush1.bf16.msra.mxu0 0
    %2336 = vmatprep.subr.bf16.mxu0 0
    %2337 = vmatpush1.bf16.msra.mxu0 0
    %2338 = vmatprep.subr.bf16.mxu0 0
    %2339 = vmatpush1.bf16.msra.mxu0 0
    %2340 = vmatprep.subr.bf16.mxu0 0
    %2341 = vmatpush1.bf16.msra.mxu0 0
    %2342 = vmatprep.subr.bf16.mxu0 0
    %2343 = vmatpush1.bf16.msra.mxu0 0
    %2344 = vmatprep.subr.bf16.mxu0 0
    %2345 = vmatpush1.bf16.msra.mxu0 0
    %2346 = vmatprep.subr.bf16.mxu0 0
    %2347 = vmatpush1.bf16.msra.mxu0 0
    %2348 = vmatprep.subr.bf16.mxu0 0
    %2349 = vmatpush1.bf16.msra.mxu0 0
    %2350 = vmatprep.subr.bf16.mxu0 0
    %2351 = vmatpush1.bf16.msra.mxu0 0
    %2352 = vmatprep.subr.bf16.mxu0 0
    %2353 = vmatpush1.bf16.msra.mxu0 0
    %2354 = vmatprep.subr.bf16.mxu0 0
    %2355 = vmatpush1.bf16.msra.mxu0 0
    %2356 = vmatprep.subr.bf16.mxu0 0
    %2357 = vmatpush1.bf16.msra.mxu0 0
    %2358 = vmatprep.subr.bf16.mxu0 0
    %2359 = vmatpush1.bf16.msra.mxu0 0
    %2360 = vmatprep.subr.bf16.mxu0 0
    %2361 = vmatpush1.bf16.msra.mxu0 0
    %2362 = vmatprep.mubr.bf16.mxu0 0
    %2363 = vmatmul.mubr.bf16.gmra.mrb[0].mxu0 %v2086
    %v2364 = vpop.f32.mrb[0].mxu0
    %v2365 = vadd.f32 %v2325, %v2364
    %v2366 = vpop.f32.mrb[0].mxu0
    %v2367 = vpop.f32.mrb[0].mxu0
    %v2368 = vpop.f32.mrb[0].mxu0
    %2369 = vdwg.mxu0
    %v2370 = vsel %vm56, %v2365, %v2289
    %v2371 = vadd.f32 %v2370, %v40
    %v2372 = vtanh.pop %v2371
    %v2373 = vxor.u32 %v2371, 2147483648
    %v2374 = vmul.f32 %v2373, 1.442695
    %v2375 = vpow.pop %v2374
    %v2376 = vadd.f32 %v2375, 1.0
    %v2377 = vrcp.pop %v2376
    %v2378 = vmul.f32 1.0, %v2377
    %v2379 = vsel %vm45, %v2372, %v2378
    %v2380 = vmul.f32 %v2379, %v2022
    %2382 = vrot.lane.b32.xlu0 %v2379, 64
    %v2383 = vpop.permute.xlu0 %2382
    %v2385 = vmul.f32 %v2379, %v2383
    %2387 = vrot.lane.b32.xlu0 %v2385, 32
    %v2388 = vpop.permute.xlu0 %2387
    %v2390 = vadd.f32 %v2380, %v2388
    %v2391 = vtanh.pop %v2390
    %2393 = vrot.lane.b32.xlu0 %v2391, 64
    %v2394 = vpop.permute.xlu0 %2393
    %v2396 = vmul.f32 %v2379, %v2394
    %s2397 = scalar_lea.vmem %s0, 48
    %v2398 = vld [vmem:[%s2397] sm:$0xff]
    %2400 = vrot.lane.b32.xlu0 %v2396, 32
    %v2401 = vpop.permute.xlu0 %2400
    %v2403 = vrot.slane %v2401, 6
    %v2404 = vsel %vm57, %v2398, %v2403
    %v2405 = vpack.c.bf16 %v2404, %v2404
    %v2406 = vpack.c.bf16 %v2396, %v2396
    %2408 = vrot.lane.b32.xlu0 %v2406, 32
    %v2409 = vpop.permute.xlu0 %2408
    %v2411 = vsel %vm81, %v2409, 0
    %2413 = vmatprep.subr.bf16.mxu0 0
    %2414 = vmatpush1.bf16.msra.mxu0 %v77
    %2415 = vmatprep.subr.bf16.mxu0 0
    %2416 = vmatpush1.bf16.msra.mxu0 %v78
    %2417 = vmatprep.subr.bf16.mxu0 0
    %2418 = vmatpush1.bf16.msra.mxu0 0
    %2419 = vmatprep.subr.bf16.mxu0 0
    %2420 = vmatpush1.bf16.msra.mxu0 0
    %2421 = vmatprep.subr.bf16.mxu0 0
    %2422 = vmatpush1.bf16.msra.mxu0 0
    %2423 = vmatprep.subr.bf16.mxu0 0
    %2424 = vmatpush1.bf16.msra.mxu0 0
    %2425 = vmatprep.subr.bf16.mxu0 0
    %2426 = vmatpush1.bf16.msra.mxu0 0
    %2427 = vmatprep.subr.bf16.mxu0 0
    %2428 = vmatpush1.bf16.msra.mxu0 0
    %2429 = vmatprep.subr.bf16.mxu0 0
    %2430 = vmatpush1.bf16.msra.mxu0 0
    %2431 = vmatprep.subr.bf16.mxu0 0
    %2432 = vmatpush1.bf16.msra.mxu0 0
    %2433 = vmatprep.subr.bf16.mxu0 0
    %2434 = vmatpush1.bf16.msra.mxu0 0
    %2435 = vmatprep.subr.bf16.mxu0 0
    %2436 = vmatpush1.bf16.msra.mxu0 0
    %2437 = vmatprep.subr.bf16.mxu0 0
    %2438 = vmatpush1.bf16.msra.mxu0 0
    %2439 = vmatprep.subr.bf16.mxu0 0
    %2440 = vmatpush1.bf16.msra.mxu0 0
    %2441 = vmatprep.subr.bf16.mxu0 0
    %2442 = vmatpush1.bf16.msra.mxu0 0
    %2443 = vmatprep.subr.bf16.mxu0 0
    %2444 = vmatpush1.bf16.msra.mxu0 0
    %2445 = vmatprep.mubr.bf16.mxu0 0
    %2446 = vmatmul.mubr.bf16.gmra.mrb[0].mxu0 %v2411
    %v2447 = vpop.f32.mrb[0].mxu0
    %v2448 = vadd.f32 0.0, %v2447
    %v2449 = vpop.f32.mrb[0].mxu0
    %v2450 = vpop.f32.mrb[0].mxu0
    %v2451 = vpop.f32.mrb[0].mxu0
    %2452 = vdwg.mxu0
    %v2454 = vsel %vm81, %v2405, 0
    %2456 = vmatprep.subr.bf16.mxu0 0
    %2457 = vmatpush1.bf16.msra.mxu0 %v133
    %2458 = vmatprep.subr.bf16.mxu0 0
    %2459 = vmatpush1.bf16.msra.mxu0 %v134
    %2460 = vmatprep.subr.bf16.mxu0 0
    %2461 = vmatpush1.bf16.msra.mxu0 0
    %2462 = vmatprep.subr.bf16.mxu0 0
    %2463 = vmatpush1.bf16.msra.mxu0 0
    %2464 = vmatprep.subr.bf16.mxu0 0
    %2465 = vmatpush1.bf16.msra.mxu0 0
    %2466 = vmatprep.subr.bf16.mxu0 0
    %2467 = vmatpush1.bf16.msra.mxu0 0
    %2468 = vmatprep.subr.bf16.mxu0 0
    %2469 = vmatpush1.bf16.msra.mxu0 0
    %2470 = vmatprep.subr.bf16.mxu0 0
    %2471 = vmatpush1.bf16.msra.mxu0 0
    %2472 = vmatprep.subr.bf16.mxu0 0
    %2473 = vmatpush1.bf16.msra.mxu0 0
    %2474 = vmatprep.subr.bf16.mxu0 0
    %2475 = vmatpush1.bf16.msra.mxu0 0
    %2476 = vmatprep.subr.bf16.mxu0 0
    %2477 = vmatpush1.bf16.msra.mxu0 0
    %2478 = vmatprep.subr.bf16.mxu0 0
    %2479 = vmatpush1.bf16.msra.mxu0 0
    %2480 = vmatprep.subr.bf16.mxu0 0
    %2481 = vmatpush1.bf16.msra.mxu0 0
    %2482 = vmatprep.subr.bf16.mxu0 0
    %2483 = vmatpush1.bf16.msra.mxu0 0
    %2484 = vmatprep.subr.bf16.mxu0 0
    %2485 = vmatpush1.bf16.msra.mxu0 0
    %2486 = vmatprep.subr.bf16.mxu0 0
    %2487 = vmatpush1.bf16.msra.mxu0 0
    %2488 = vmatprep.mubr.bf16.mxu0 0
    %2489 = vmatmul.mubr.bf16.gmra.mrb[0].mxu0 %v2454
    %v2490 = vpop.f32.mrb[0].mxu0
    %v2491 = vadd.f32 %v2448, %v2490
    %v2492 = vpop.f32.mrb[0].mxu0
    %v2493 = vpop.f32.mrb[0].mxu0
    %v2494 = vpop.f32.mrb[0].mxu0
    %2495 = vdwg.mxu0
    %2496 = vmatprep.subr.bf16.mxu0 0
    %2497 = vmatpush1.bf16.msra.mxu0 %v198
    %2498 = vmatprep.subr.bf16.mxu0 0
    %2499 = vmatpush1.bf16.msra.mxu0 %v199
    %2500 = vmatprep.subr.bf16.mxu0 0
    %2501 = vmatpush1.bf16.msra.mxu0 0
    %2502 = vmatprep.subr.bf16.mxu0 0
    %2503 = vmatpush1.bf16.msra.mxu0 0
    %2504 = vmatprep.subr.bf16.mxu0 0
    %2505 = vmatpush1.bf16.msra.mxu0 0
    %2506 = vmatprep.subr.bf16.mxu0 0
    %2507 = vmatpush1.bf16.msra.mxu0 0
    %2508 = vmatprep.subr.bf16.mxu0 0
    %2509 = vmatpush1.bf16.msra.mxu0 0
    %2510 = vmatprep.subr.bf16.mxu0 0
    %2511 = vmatpush1.bf16.msra.mxu0 0
    %2512 = vmatprep.subr.bf16.mxu0 0
    %2513 = vmatpush1.bf16.msra.mxu0 0
    %2514 = vmatprep.subr.bf16.mxu0 0
    %2515 = vmatpush1.bf16.msra.mxu0 0
    %2516 = vmatprep.subr.bf16.mxu0 0
    %2517 = vmatpush1.bf16.msra.mxu0 0
    %2518 = vmatprep.subr.bf16.mxu0 0
    %2519 = vmatpush1.bf16.msra.mxu0 0
    %2520 = vmatprep.subr.bf16.mxu0 0
    %2521 = vmatpush1.bf16.msra.mxu0 0
    %2522 = vmatprep.subr.bf16.mxu0 0
    %2523 = vmatpush1.bf16.msra.mxu0 0
    %2524 = vmatprep.subr.bf16.mxu0 0
    %2525 = vmatpush1.bf16.msra.mxu0 0
    %2526 = vmatprep.subr.bf16.mxu0 0
    %2527 = vmatpush1.bf16.msra.mxu0 0
    %2528 = vmatprep.mubr.bf16.mxu0 0
    %2529 = vmatmul.mubr.bf16.gmra.mrb[0].mxu0 %v2411
    %v2530 = vpop.f32.mrb[0].mxu0
    %v2531 = vadd.f32 0.0, %v2530
    %v2532 = vpop.f32.mrb[0].mxu0
    %v2533 = vpop.f32.mrb[0].mxu0
    %v2534 = vpop.f32.mrb[0].mxu0
    %2535 = vdwg.mxu0
    %2536 = vmatprep.subr.bf16.mxu0 0
    %2537 = vmatpush1.bf16.msra.mxu0 %v250
    %2538 = vmatprep.subr.bf16.mxu0 0
    %2539 = vmatpush1.bf16.msra.mxu0 %v251
    %2540 = vmatprep.subr.bf16.mxu0 0
    %2541 = vmatpush1.bf16.msra.mxu0 0
    %2542 = vmatprep.subr.bf16.mxu0 0
    %2543 = vmatpush1.bf16.msra.mxu0 0
    %2544 = vmatprep.subr.bf16.mxu0 0
    %2545 = vmatpush1.bf16.msra.mxu0 0
    %2546 = vmatprep.subr.bf16.mxu0 0
    %2547 = vmatpush1.bf16.msra.mxu0 0
    %2548 = vmatprep.subr.bf16.mxu0 0
    %2549 = vmatpush1.bf16.msra.mxu0 0
    %2550 = vmatprep.subr.bf16.mxu0 0
    %2551 = vmatpush1.bf16.msra.mxu0 0
    %2552 = vmatprep.subr.bf16.mxu0 0
    %2553 = vmatpush1.bf16.msra.mxu0 0
    %2554 = vmatprep.subr.bf16.mxu0 0
    %2555 = vmatpush1.bf16.msra.mxu0 0
    %2556 = vmatprep.subr.bf16.mxu0 0
    %2557 = vmatpush1.bf16.msra.mxu0 0
    %2558 = vmatprep.subr.bf16.mxu0 0
    %2559 = vmatpush1.bf16.msra.mxu0 0
    %2560 = vmatprep.subr.bf16.mxu0 0
    %2561 = vmatpush1.bf16.msra.mxu0 0
    %2562 = vmatprep.subr.bf16.mxu0 0
    %2563 = vmatpush1.bf16.msra.mxu0 0
    %2564 = vmatprep.subr.bf16.mxu0 0
    %2565 = vmatpush1.bf16.msra.mxu0 0
    %2566 = vmatprep.subr.bf16.mxu0 0
    %2567 = vmatpush1.bf16.msra.mxu0 0
    %2568 = vmatprep.mubr.bf16.mxu0 0
    %2569 = vmatmul.mubr.bf16.gmra.mrb[0].mxu0 %v2454
    %v2570 = vpop.f32.mrb[0].mxu0
    %v2571 = vadd.f32 %v2531, %v2570
    %v2572 = vpop.f32.mrb[0].mxu0
    %v2573 = vpop.f32.mrb[0].mxu0
    %v2574 = vpop.f32.mrb[0].mxu0
    %2575 = vdwg.mxu0
    %v2576 = vsel %vm50, %v2571, %v2491
    %2577 = vmatprep.subr.bf16.mxu0 0
    %2578 = vmatpush1.bf16.msra.mxu0 %v313
    %2579 = vmatprep.subr.bf16.mxu0 0
    %2580 = vmatpush1.bf16.msra.mxu0 %v314
    %2581 = vmatprep.subr.bf16.mxu0 0
    %2582 = vmatpush1.bf16.msra.mxu0 0
    %2583 = vmatprep.subr.bf16.mxu0 0
    %2584 = vmatpush1.bf16.msra.mxu0 0
    %2585 = vmatprep.subr.bf16.mxu0 0
    %2586 = vmatpush1.bf16.msra.mxu0 0
    %2587 = vmatprep.subr.bf16.mxu0 0
    %2588 = vmatpush1.bf16.msra.mxu0 0
    %2589 = vmatprep.subr.bf16.mxu0 0
    %2590 = vmatpush1.bf16.msra.mxu0 0
    %2591 = vmatprep.subr.bf16.mxu0 0
    %2592 = vmatpush1.bf16.msra.mxu0 0
    %2593 = vmatprep.subr.bf16.mxu0 0
    %2594 = vmatpush1.bf16.msra.mxu0 0
    %2595 = vmatprep.subr.bf16.mxu0 0
    %2596 = vmatpush1.bf16.msra.mxu0 0
    %2597 = vmatprep.subr.bf16.mxu0 0
    %2598 = vmatpush1.bf16.msra.mxu0 0
    %2599 = vmatprep.subr.bf16.mxu0 0
    %2600 = vmatpush1.bf16.msra.mxu0 0
    %2601 = vmatprep.subr.bf16.mxu0 0
    %2602 = vmatpush1.bf16.msra.mxu0 0
    %2603 = vmatprep.subr.bf16.mxu0 0
    %2604 = vmatpush1.bf16.msra.mxu0 0
    %2605 = vmatprep.subr.bf16.mxu0 0
    %2606 = vmatpush1.bf16.msra.mxu0 0
    %2607 = vmatprep.subr.bf16.mxu0 0
    %2608 = vmatpush1.bf16.msra.mxu0 0
    %2609 = vmatprep.mubr.bf16.mxu0 0
    %2610 = vmatmul.mubr.bf16.gmra.mrb[0].mxu0 %v2411
    %v2611 = vpop.f32.mrb[0].mxu0
    %v2612 = vadd.f32 0.0, %v2611
    %v2613 = vpop.f32.mrb[0].mxu0
    %v2614 = vpop.f32.mrb[0].mxu0
    %v2615 = vpop.f32.mrb[0].mxu0
    %2616 = vdwg.mxu0
    %2617 = vmatprep.subr.bf16.mxu0 0
    %2618 = vmatpush1.bf16.msra.mxu0 %v365
    %2619 = vmatprep.subr.bf16.mxu0 0
    %2620 = vmatpush1.bf16.msra.mxu0 %v366
    %2621 = vmatprep.subr.bf16.mxu0 0
    %2622 = vmatpush1.bf16.msra.mxu0 0
    %2623 = vmatprep.subr.bf16.mxu0 0
    %2624 = vmatpush1.bf16.msra.mxu0 0
    %2625 = vmatprep.subr.bf16.mxu0 0
    %2626 = vmatpush1.bf16.msra.mxu0 0
    %2627 = vmatprep.subr.bf16.mxu0 0
    %2628 = vmatpush1.bf16.msra.mxu0 0
    %2629 = vmatprep.subr.bf16.mxu0 0
    %2630 = vmatpush1.bf16.msra.mxu0 0
    %2631 = vmatprep.subr.bf16.mxu0 0
    %2632 = vmatpush1.bf16.msra.mxu0 0
    %2633 = vmatprep.subr.bf16.mxu0 0
    %2634 = vmatpush1.bf16.msra.mxu0 0
    %2635 = vmatprep.subr.bf16.mxu0 0
    %2636 = vmatpush1.bf16.msra.mxu0 0
    %2637 = vmatprep.subr.bf16.mxu0 0
    %2638 = vmatpush1.bf16.msra.mxu0 0
    %2639 = vmatprep.subr.bf16.mxu0 0
    %2640 = vmatpush1.bf16.msra.mxu0 0
    %2641 = vmatprep.subr.bf16.mxu0 0
    %2642 = vmatpush1.bf16.msra.mxu0 0
    %2643 = vmatprep.subr.bf16.mxu0 0
    %2644 = vmatpush1.bf16.msra.mxu0 0
    %2645 = vmatprep.subr.bf16.mxu0 0
    %2646 = vmatpush1.bf16.msra.mxu0 0
    %2647 = vmatprep.subr.bf16.mxu0 0
    %2648 = vmatpush1.bf16.msra.mxu0 0
    %2649 = vmatprep.mubr.bf16.mxu0 0
    %2650 = vmatmul.mubr.bf16.gmra.mrb[0].mxu0 %v2454
    %v2651 = vpop.f32.mrb[0].mxu0
    %v2652 = vadd.f32 %v2612, %v2651
    %v2653 = vpop.f32.mrb[0].mxu0
    %v2654 = vpop.f32.mrb[0].mxu0
    %v2655 = vpop.f32.mrb[0].mxu0
    %2656 = vdwg.mxu0
    %v2657 = vsel %vm53, %v2652, %v2576
    %2658 = vmatprep.subr.bf16.mxu0 0
    %2659 = vmatpush1.bf16.msra.mxu0 %v428
    %2660 = vmatprep.subr.bf16.mxu0 0
    %2661 = vmatpush1.bf16.msra.mxu0 %v429
    %2662 = vmatprep.subr.bf16.mxu0 0
    %2663 = vmatpush1.bf16.msra.mxu0 0
    %2664 = vmatprep.subr.bf16.mxu0 0
    %2665 = vmatpush1.bf16.msra.mxu0 0
    %2666 = vmatprep.subr.bf16.mxu0 0
    %2667 = vmatpush1.bf16.msra.mxu0 0
    %2668 = vmatprep.subr.bf16.mxu0 0
    %2669 = vmatpush1.bf16.msra.mxu0 0
    %2670 = vmatprep.subr.bf16.mxu0 0
    %2671 = vmatpush1.bf16.msra.mxu0 0
    %2672 = vmatprep.subr.bf16.mxu0 0
    %2673 = vmatpush1.bf16.msra.mxu0 0
    %2674 = vmatprep.subr.bf16.mxu0 0
    %2675 = vmatpush1.bf16.msra.mxu0 0
    %2676 = vmatprep.subr.bf16.mxu0 0
    %2677 = vmatpush1.bf16.msra.mxu0 0
    %2678 = vmatprep.subr.bf16.mxu0 0
    %2679 = vmatpush1.bf16.msra.mxu0 0
    %2680 = vmatprep.subr.bf16.mxu0 0
    %2681 = vmatpush1.bf16.msra.mxu0 0
    %2682 = vmatprep.subr.bf16.mxu0 0
    %2683 = vmatpush1.bf16.msra.mxu0 0
    %2684 = vmatprep.subr.bf16.mxu0 0
    %2685 = vmatpush1.bf16.msra.mxu0 0
    %2686 = vmatprep.subr.bf16.mxu0 0
    %2687 = vmatpush1.bf16.msra.mxu0 0
    %2688 = vmatprep.subr.bf16.mxu0 0
    %2689 = vmatpush1.bf16.msra.mxu0 0
    %2690 = vmatprep.mubr.bf16.mxu0 0
    %2691 = vmatmul.mubr.bf16.gmra.mrb[0].mxu0 %v2411
    %v2692 = vpop.f32.mrb[0].mxu0
    %v2693 = vadd.f32 0.0, %v2692
    %v2694 = vpop.f32.mrb[0].mxu0
    %v2695 = vpop.f32.mrb[0].mxu0
    %v2696 = vpop.f32.mrb[0].mxu0
    %2697 = vdwg.mxu0
    %2698 = vmatprep.subr.bf16.mxu0 0
    %2699 = vmatpush1.bf16.msra.mxu0 %v480
    %2700 = vmatprep.subr.bf16.mxu0 0
    %2701 = vmatpush1.bf16.msra.mxu0 %v481
    %2702 = vmatprep.subr.bf16.mxu0 0
    %2703 = vmatpush1.bf16.msra.mxu0 0
    %2704 = vmatprep.subr.bf16.mxu0 0
    %2705 = vmatpush1.bf16.msra.mxu0 0
    %2706 = vmatprep.subr.bf16.mxu0 0
    %2707 = vmatpush1.bf16.msra.mxu0 0
    %2708 = vmatprep.subr.bf16.mxu0 0
    %2709 = vmatpush1.bf16.msra.mxu0 0
    %2710 = vmatprep.subr.bf16.mxu0 0
    %2711 = vmatpush1.bf16.msra.mxu0 0
    %2712 = vmatprep.subr.bf16.mxu0 0
    %2713 = vmatpush1.bf16.msra.mxu0 0
    %2714 = vmatprep.subr.bf16.mxu0 0
    %2715 = vmatpush1.bf16.msra.mxu0 0
    %2716 = vmatprep.subr.bf16.mxu0 0
    %2717 = vmatpush1.bf16.msra.mxu0 0
    %2718 = vmatprep.subr.bf16.mxu0 0
    %2719 = vmatpush1.bf16.msra.mxu0 0
    %2720 = vmatprep.subr.bf16.mxu0 0
    %2721 = vmatpush1.bf16.msra.mxu0 0
    %2722 = vmatprep.subr.bf16.mxu0 0
    %2723 = vmatpush1.bf16.msra.mxu0 0
    %2724 = vmatprep.subr.bf16.mxu0 0
    %2725 = vmatpush1.bf16.msra.mxu0 0
    %2726 = vmatprep.subr.bf16.mxu0 0
    %2727 = vmatpush1.bf16.msra.mxu0 0
    %2728 = vmatprep.subr.bf16.mxu0 0
    %2729 = vmatpush1.bf16.msra.mxu0 0
    %2730 = vmatprep.mubr.bf16.mxu0 0
    %2731 = vmatmul.mubr.bf16.gmra.mrb[0].mxu0 %v2454
    %v2732 = vpop.f32.mrb[0].mxu0
    %v2733 = vadd.f32 %v2693, %v2732
    %v2734 = vpop.f32.mrb[0].mxu0
    %v2735 = vpop.f32.mrb[0].mxu0
    %v2736 = vpop.f32.mrb[0].mxu0
    %2737 = vdwg.mxu0
    %v2738 = vsel %vm56, %v2733, %v2657
    %v2739 = vadd.f32 %v2738, %v40
    %v2740 = vtanh.pop %v2739
    %v2741 = vxor.u32 %v2739, 2147483648
    %v2742 = vmul.f32 %v2741, 1.442695
    %v2743 = vpow.pop %v2742
    %v2744 = vadd.f32 %v2743, 1.0
    %v2745 = vrcp.pop %v2744
    %v2746 = vmul.f32 1.0, %v2745
    %v2747 = vsel %vm45, %v2740, %v2746
    %v2748 = vmul.f32 %v2747, %v2390
    %2750 = vrot.lane.b32.xlu0 %v2747, 64
    %v2751 = vpop.permute.xlu0 %2750
    %v2753 = vmul.f32 %v2747, %v2751
    %2755 = vrot.lane.b32.xlu0 %v2753, 32
    %v2756 = vpop.permute.xlu0 %2755
    %v2758 = vadd.f32 %v2748, %v2756
    %v2759 = vtanh.pop %v2758
    %2761 = vrot.lane.b32.xlu0 %v2759, 64
    %v2762 = vpop.permute.xlu0 %2761
    %v2764 = vmul.f32 %v2747, %v2762
    %s2765 = scalar_lea.vmem %s0, 56
    %v2766 = vld [vmem:[%s2765] sm:$0xff]
    %2768 = vrot.lane.b32.xlu0 %v2764, 32
    %v2769 = vpop.permute.xlu0 %2768
    %v2771 = vrot.slane %v2769, 6
    %v2772 = vsel %vm57, %v2766, %v2771
    %v2773 = vpack.c.bf16 %v2772, %v2772
    %v2774 = vpack.c.bf16 %v2764, %v2764
    %2776 = vrot.lane.b32.xlu0 %v2774, 32
    %v2777 = vpop.permute.xlu0 %2776
    %v2779 = vsel %vm81, %v2777, 0
    %2781 = vmatprep.subr.bf16.mxu0 0
    %2782 = vmatpush1.bf16.msra.mxu0 %v77
    %2783 = vmatprep.subr.bf16.mxu0 0
    %2784 = vmatpush1.bf16.msra.mxu0 %v78
    %2785 = vmatprep.subr.bf16.mxu0 0
    %2786 = vmatpush1.bf16.msra.mxu0 0
    %2787 = vmatprep.subr.bf16.mxu0 0
    %2788 = vmatpush1.bf16.msra.mxu0 0
    %2789 = vmatprep.subr.bf16.mxu0 0
    %2790 = vmatpush1.bf16.msra.mxu0 0
    %2791 = vmatprep.subr.bf16.mxu0 0
    %2792 = vmatpush1.bf16.msra.mxu0 0
    %2793 = vmatprep.subr.bf16.mxu0 0
    %2794 = vmatpush1.bf16.msra.mxu0 0
    %2795 = vmatprep.subr.bf16.mxu0 0
    %2796 = vmatpush1.bf16.msra.mxu0 0
    %2797 = vmatprep.subr.bf16.mxu0 0
    %2798 = vmatpush1.bf16.msra.mxu0 0
    %2799 = vmatprep.subr.bf16.mxu0 0
    %2800 = vmatpush1.bf16.msra.mxu0 0
    %2801 = vmatprep.subr.bf16.mxu0 0
    %2802 = vmatpush1.bf16.msra.mxu0 0
    %2803 = vmatprep.subr.bf16.mxu0 0
    %2804 = vmatpush1.bf16.msra.mxu0 0
    %2805 = vmatprep.subr.bf16.mxu0 0
    %2806 = vmatpush1.bf16.msra.mxu0 0
    %2807 = vmatprep.subr.bf16.mxu0 0
    %2808 = vmatpush1.bf16.msra.mxu0 0
    %2809 = vmatprep.subr.bf16.mxu0 0
    %2810 = vmatpush1.bf16.msra.mxu0 0
    %2811 = vmatprep.subr.bf16.mxu0 0
    %2812 = vmatpush1.bf16.msra.mxu0 0
    %2813 = vmatprep.mubr.bf16.mxu0 0
    %2814 = vmatmul.mubr.bf16.gmra.mrb[0].mxu0 %v2779
    %v2815 = vpop.f32.mrb[0].mxu0
    %v2816 = vadd.f32 0.0, %v2815
    %v2817 = vpop.f32.mrb[0].mxu0
    %v2818 = vpop.f32.mrb[0].mxu0
    %v2819 = vpop.f32.mrb[0].mxu0
    %2820 = vdwg.mxu0
    %v2822 = vsel %vm81, %v2773, 0
    %2824 = vmatprep.subr.bf16.mxu0 0
    %2825 = vmatpush1.bf16.msra.mxu0 %v133
    %2826 = vmatprep.subr.bf16.mxu0 0
    %2827 = vmatpush1.bf16.msra.mxu0 %v134
    %2828 = vmatprep.subr.bf16.mxu0 0
    %2829 = vmatpush1.bf16.msra.mxu0 0
    %2830 = vmatprep.subr.bf16.mxu0 0
    %2831 = vmatpush1.bf16.msra.mxu0 0
    %2832 = vmatprep.subr.bf16.mxu0 0
    %2833 = vmatpush1.bf16.msra.mxu0 0
    %2834 = vmatprep.subr.bf16.mxu0 0
    %2835 = vmatpush1.bf16.msra.mxu0 0
    %2836 = vmatprep.subr.bf16.mxu0 0
    %2837 = vmatpush1.bf16.msra.mxu0 0
    %2838 = vmatprep.subr.bf16.mxu0 0
    %2839 = vmatpush1.bf16.msra.mxu0 0
    %2840 = vmatprep.subr.bf16.mxu0 0
    %2841 = vmatpush1.bf16.msra.mxu0 0
    %2842 = vmatprep.subr.bf16.mxu0 0
    %2843 = vmatpush1.bf16.msra.mxu0 0
    %2844 = vmatprep.subr.bf16.mxu0 0
    %2845 = vmatpush1.bf16.msra.mxu0 0
    %2846 = vmatprep.subr.bf16.mxu0 0
    %2847 = vmatpush1.bf16.msra.mxu0 0
    %2848 = vmatprep.subr.bf16.mxu0 0
    %2849 = vmatpush1.bf16.msra.mxu0 0
    %2850 = vmatprep.subr.bf16.mxu0 0
    %2851 = vmatpush1.bf16.msra.mxu0 0
    %2852 = vmatprep.subr.bf16.mxu0 0
    %2853 = vmatpush1.bf16.msra.mxu0 0
    %2854 = vmatprep.subr.bf16.mxu0 0
    %2855 = vmatpush1.bf16.msra.mxu0 0
    %2856 = vmatprep.mubr.bf16.mxu0 0
    %2857 = vmatmul.mubr.bf16.gmra.mrb[0].mxu0 %v2822
    %v2858 = vpop.f32.mrb[0].mxu0
    %v2859 = vadd.f32 %v2816, %v2858
    %v2860 = vpop.f32.mrb[0].mxu0
    %v2861 = vpop.f32.mrb[0].mxu0
    %v2862 = vpop.f32.mrb[0].mxu0
    %2863 = vdwg.mxu0
    %2864 = vmatprep.subr.bf16.mxu0 0
    %2865 = vmatpush1.bf16.msra.mxu0 %v198
    %2866 = vmatprep.subr.bf16.mxu0 0
    %2867 = vmatpush1.bf16.msra.mxu0 %v199
    %2868 = vmatprep.subr.bf16.mxu0 0
    %2869 = vmatpush1.bf16.msra.mxu0 0
    %2870 = vmatprep.subr.bf16.mxu0 0
    %2871 = vmatpush1.bf16.msra.mxu0 0
    %2872 = vmatprep.subr.bf16.mxu0 0
    %2873 = vmatpush1.bf16.msra.mxu0 0
    %2874 = vmatprep.subr.bf16.mxu0 0
    %2875 = vmatpush1.bf16.msra.mxu0 0
    %2876 = vmatprep.subr.bf16.mxu0 0
    %2877 = vmatpush1.bf16.msra.mxu0 0
    %2878 = vmatprep.subr.bf16.mxu0 0
    %2879 = vmatpush1.bf16.msra.mxu0 0
    %2880 = vmatprep.subr.bf16.mxu0 0
    %2881 = vmatpush1.bf16.msra.mxu0 0
    %2882 = vmatprep.subr.bf16.mxu0 0
    %2883 = vmatpush1.bf16.msra.mxu0 0
    %2884 = vmatprep.subr.bf16.mxu0 0
    %2885 = vmatpush1.bf16.msra.mxu0 0
    %2886 = vmatprep.subr.bf16.mxu0 0
    %2887 = vmatpush1.bf16.msra.mxu0 0
    %2888 = vmatprep.subr.bf16.mxu0 0
    %2889 = vmatpush1.bf16.msra.mxu0 0
    %2890 = vmatprep.subr.bf16.mxu0 0
    %2891 = vmatpush1.bf16.msra.mxu0 0
    %2892 = vmatprep.subr.bf16.mxu0 0
    %2893 = vmatpush1.bf16.msra.mxu0 0
    %2894 = vmatprep.subr.bf16.mxu0 0
    %2895 = vmatpush1.bf16.msra.mxu0 0
    %2896 = vmatprep.mubr.bf16.mxu0 0
    %2897 = vmatmul.mubr.bf16.gmra.mrb[0].mxu0 %v2779
    %v2898 = vpop.f32.mrb[0].mxu0
    %v2899 = vadd.f32 0.0, %v2898
    %v2900 = vpop.f32.mrb[0].mxu0
    %v2901 = vpop.f32.mrb[0].mxu0
    %v2902 = vpop.f32.mrb[0].mxu0
    %2903 = vdwg.mxu0
    %2904 = vmatprep.subr.bf16.mxu0 0
    %2905 = vmatpush1.bf16.msra.mxu0 %v250
    %2906 = vmatprep.subr.bf16.mxu0 0
    %2907 = vmatpush1.bf16.msra.mxu0 %v251
    %2908 = vmatprep.subr.bf16.mxu0 0
    %2909 = vmatpush1.bf16.msra.mxu0 0
    %2910 = vmatprep.subr.bf16.mxu0 0
    %2911 = vmatpush1.bf16.msra.mxu0 0
    %2912 = vmatprep.subr.bf16.mxu0 0
    %2913 = vmatpush1.bf16.msra.mxu0 0
    %2914 = vmatprep.subr.bf16.mxu0 0
    %2915 = vmatpush1.bf16.msra.mxu0 0
    %2916 = vmatprep.subr.bf16.mxu0 0
    %2917 = vmatpush1.bf16.msra.mxu0 0
    %2918 = vmatprep.subr.bf16.mxu0 0
    %2919 = vmatpush1.bf16.msra.mxu0 0
    %2920 = vmatprep.subr.bf16.mxu0 0
    %2921 = vmatpush1.bf16.msra.mxu0 0
    %2922 = vmatprep.subr.bf16.mxu0 0
    %2923 = vmatpush1.bf16.msra.mxu0 0
    %2924 = vmatprep.subr.bf16.mxu0 0
    %2925 = vmatpush1.bf16.msra.mxu0 0
    %2926 = vmatprep.subr.bf16.mxu0 0
    %2927 = vmatpush1.bf16.msra.mxu0 0
    %2928 = vmatprep.subr.bf16.mxu0 0
    %2929 = vmatpush1.bf16.msra.mxu0 0
    %2930 = vmatprep.subr.bf16.mxu0 0
    %2931 = vmatpush1.bf16.msra.mxu0 0
    %2932 = vmatprep.subr.bf16.mxu0 0
    %2933 = vmatpush1.bf16.msra.mxu0 0
    %2934 = vmatprep.subr.bf16.mxu0 0
    %2935 = vmatpush1.bf16.msra.mxu0 0
    %2936 = vmatprep.mubr.bf16.mxu0 0
    %2937 = vmatmul.mubr.bf16.gmra.mrb[0].mxu0 %v2822
    %v2938 = vpop.f32.mrb[0].mxu0
    %v2939 = vadd.f32 %v2899, %v2938
    %v2940 = vpop.f32.mrb[0].mxu0
    %v2941 = vpop.f32.mrb[0].mxu0
    %v2942 = vpop.f32.mrb[0].mxu0
    %2943 = vdwg.mxu0
    %v2944 = vsel %vm50, %v2939, %v2859
    %2945 = vmatprep.subr.bf16.mxu0 0
    %2946 = vmatpush1.bf16.msra.mxu0 %v313
    %2947 = vmatprep.subr.bf16.mxu0 0
    %2948 = vmatpush1.bf16.msra.mxu0 %v314
    %2949 = vmatprep.subr.bf16.mxu0 0
    %2950 = vmatpush1.bf16.msra.mxu0 0
    %2951 = vmatprep.subr.bf16.mxu0 0
    %2952 = vmatpush1.bf16.msra.mxu0 0
    %2953 = vmatprep.subr.bf16.mxu0 0
    %2954 = vmatpush1.bf16.msra.mxu0 0
    %2955 = vmatprep.subr.bf16.mxu0 0
    %2956 = vmatpush1.bf16.msra.mxu0 0
    %2957 = vmatprep.subr.bf16.mxu0 0
    %2958 = vmatpush1.bf16.msra.mxu0 0
    %2959 = vmatprep.subr.bf16.mxu0 0
    %2960 = vmatpush1.bf16.msra.mxu0 0
    %2961 = vmatprep.subr.bf16.mxu0 0
    %2962 = vmatpush1.bf16.msra.mxu0 0
    %2963 = vmatprep.subr.bf16.mxu0 0
    %2964 = vmatpush1.bf16.msra.mxu0 0
    %2965 = vmatprep.subr.bf16.mxu0 0
    %2966 = vmatpush1.bf16.msra.mxu0 0
    %2967 = vmatprep.subr.bf16.mxu0 0
    %2968 = vmatpush1.bf16.msra.mxu0 0
    %2969 = vmatprep.subr.bf16.mxu0 0
    %2970 = vmatpush1.bf16.msra.mxu0 0
    %2971 = vmatprep.subr.bf16.mxu0 0
    %2972 = vmatpush1.bf16.msra.mxu0 0
    %2973 = vmatprep.subr.bf16.mxu0 0
    %2974 = vmatpush1.bf16.msra.mxu0 0
    %2975 = vmatprep.subr.bf16.mxu0 0
    %2976 = vmatpush1.bf16.msra.mxu0 0
    %2977 = vmatprep.mubr.bf16.mxu0 0
    %2978 = vmatmul.mubr.bf16.gmra.mrb[0].mxu0 %v2779
    %v2979 = vpop.f32.mrb[0].mxu0
    %v2980 = vadd.f32 0.0, %v2979
    %v2981 = vpop.f32.mrb[0].mxu0
    %v2982 = vpop.f32.mrb[0].mxu0
    %v2983 = vpop.f32.mrb[0].mxu0
    %2984 = vdwg.mxu0
    %2985 = vmatprep.subr.bf16.mxu0 0
    %2986 = vmatpush1.bf16.msra.mxu0 %v365
    %2987 = vmatprep.subr.bf16.mxu0 0
    %2988 = vmatpush1.bf16.msra.mxu0 %v366
    %2989 = vmatprep.subr.bf16.mxu0 0
    %2990 = vmatpush1.bf16.msra.mxu0 0
    %2991 = vmatprep.subr.bf16.mxu0 0
    %2992 = vmatpush1.bf16.msra.mxu0 0
    %2993 = vmatprep.subr.bf16.mxu0 0
    %2994 = vmatpush1.bf16.msra.mxu0 0
    %2995 = vmatprep.subr.bf16.mxu0 0
    %2996 = vmatpush1.bf16.msra.mxu0 0
    %2997 = vmatprep.subr.bf16.mxu0 0
    %2998 = vmatpush1.bf16.msra.mxu0 0
    %2999 = vmatprep.subr.bf16.mxu0 0
    %3000 = vmatpush1.bf16.msra.mxu0 0
    %3001 = vmatprep.subr.bf16.mxu0 0
    %3002 = vmatpush1.bf16.msra.mxu0 0
    %3003 = vmatprep.subr.bf16.mxu0 0
    %3004 = vmatpush1.bf16.msra.mxu0 0
    %3005 = vmatprep.subr.bf16.mxu0 0
    %3006 = vmatpush1.bf16.msra.mxu0 0
    %3007 = vmatprep.subr.bf16.mxu0 0
    %3008 = vmatpush1.bf16.msra.mxu0 0
    %3009 = vmatprep.subr.bf16.mxu0 0
    %3010 = vmatpush1.bf16.msra.mxu0 0
    %3011 = vmatprep.subr.bf16.mxu0 0
    %3012 = vmatpush1.bf16.msra.mxu0 0
    %3013 = vmatprep.subr.bf16.mxu0 0
    %3014 = vmatpush1.bf16.msra.mxu0 0
    %3015 = vmatprep.subr.bf16.mxu0 0
    %3016 = vmatpush1.bf16.msra.mxu0 0
    %3017 = vmatprep.mubr.bf16.mxu0 0
    %3018 = vmatmul.mubr.bf16.gmra.mrb[0].mxu0 %v2822
    %v3019 = vpop.f32.mrb[0].mxu0
    %v3020 = vadd.f32 %v2980, %v3019
    %v3021 = vpop.f32.mrb[0].mxu0
    %v3022 = vpop.f32.mrb[0].mxu0
    %v3023 = vpop.f32.mrb[0].mxu0
    %3024 = vdwg.mxu0
    %v3025 = vsel %vm53, %v3020, %v2944
    %3026 = vmatprep.subr.bf16.mxu0 0
    %3027 = vmatpush1.bf16.msra.mxu0 %v428
    %3028 = vmatprep.subr.bf16.mxu0 0
    %3029 = vmatpush1.bf16.msra.mxu0 %v429
    %3030 = vmatprep.subr.bf16.mxu0 0
    %3031 = vmatpush1.bf16.msra.mxu0 0
    %3032 = vmatprep.subr.bf16.mxu0 0
    %3033 = vmatpush1.bf16.msra.mxu0 0
    %3034 = vmatprep.subr.bf16.mxu0 0
    %3035 = vmatpush1.bf16.msra.mxu0 0
    %3036 = vmatprep.subr.bf16.mxu0 0
    %3037 = vmatpush1.bf16.msra.mxu0 0
    %3038 = vmatprep.subr.bf16.mxu0 0
    %3039 = vmatpush1.bf16.msra.mxu0 0
    %3040 = vmatprep.subr.bf16.mxu0 0
    %3041 = vmatpush1.bf16.msra.mxu0 0
    %3042 = vmatprep.subr.bf16.mxu0 0
    %3043 = vmatpush1.bf16.msra.mxu0 0
    %3044 = vmatprep.subr.bf16.mxu0 0
    %3045 = vmatpush1.bf16.msra.mxu0 0
    %3046 = vmatprep.subr.bf16.mxu0 0
    %3047 = vmatpush1.bf16.msra.mxu0 0
    %3048 = vmatprep.subr.bf16.mxu0 0
    %3049 = vmatpush1.bf16.msra.mxu0 0
    %3050 = vmatprep.subr.bf16.mxu0 0
    %3051 = vmatpush1.bf16.msra.mxu0 0
    %3052 = vmatprep.subr.bf16.mxu0 0
    %3053 = vmatpush1.bf16.msra.mxu0 0
    %3054 = vmatprep.subr.bf16.mxu0 0
    %3055 = vmatpush1.bf16.msra.mxu0 0
    %3056 = vmatprep.subr.bf16.mxu0 0
    %3057 = vmatpush1.bf16.msra.mxu0 0
    %3058 = vmatprep.mubr.bf16.mxu0 0
    %3059 = vmatmul.mubr.bf16.gmra.mrb[0].mxu0 %v2779
    %v3060 = vpop.f32.mrb[0].mxu0
    %v3061 = vadd.f32 0.0, %v3060
    %v3062 = vpop.f32.mrb[0].mxu0
    %v3063 = vpop.f32.mrb[0].mxu0
    %v3064 = vpop.f32.mrb[0].mxu0
    %3065 = vdwg.mxu0
    %3066 = vmatprep.subr.bf16.mxu0 0
    %3067 = vmatpush1.bf16.msra.mxu0 %v480
    %3068 = vmatprep.subr.bf16.mxu0 0
    %3069 = vmatpush1.bf16.msra.mxu0 %v481
    %3070 = vmatprep.subr.bf16.mxu0 0
    %3071 = vmatpush1.bf16.msra.mxu0 0
    %3072 = vmatprep.subr.bf16.mxu0 0
    %3073 = vmatpush1.bf16.msra.mxu0 0
    %3074 = vmatprep.subr.bf16.mxu0 0
    %3075 = vmatpush1.bf16.msra.mxu0 0
    %3076 = vmatprep.subr.bf16.mxu0 0
    %3077 = vmatpush1.bf16.msra.mxu0 0
    %3078 = vmatprep.subr.bf16.mxu0 0
    %3079 = vmatpush1.bf16.msra.mxu0 0
    %3080 = vmatprep.subr.bf16.mxu0 0
    %3081 = vmatpush1.bf16.msra.mxu0 0
    %3082 = vmatprep.subr.bf16.mxu0 0
    %3083 = vmatpush1.bf16.msra.mxu0 0
    %3084 = vmatprep.subr.bf16.mxu0 0
    %3085 = vmatpush1.bf16.msra.mxu0 0
    %3086 = vmatprep.subr.bf16.mxu0 0
    %3087 = vmatpush1.bf16.msra.mxu0 0
    %3088 = vmatprep.subr.bf16.mxu0 0
    %3089 = vmatpush1.bf16.msra.mxu0 0
    %3090 = vmatprep.subr.bf16.mxu0 0
    %3091 = vmatpush1.bf16.msra.mxu0 0
    %3092 = vmatprep.subr.bf16.mxu0 0
    %3093 = vmatpush1.bf16.msra.mxu0 0
    %3094 = vmatprep.subr.bf16.mxu0 0
    %3095 = vmatpush1.bf16.msra.mxu0 0
    %3096 = vmatprep.subr.bf16.mxu0 0
    %3097 = vmatpush1.bf16.msra.mxu0 0
    %3098 = vmatprep.mubr.bf16.mxu0 0
    %3099 = vmatmul.mubr.bf16.gmra.mrb[0].mxu0 %v2822
    %v3100 = vpop.f32.mrb[0].mxu0
    %v3101 = vadd.f32 %v3061, %v3100
    %v3102 = vpop.f32.mrb[0].mxu0
    %v3103 = vpop.f32.mrb[0].mxu0
    %v3104 = vpop.f32.mrb[0].mxu0
    %3105 = vdwg.mxu0
    %v3106 = vsel %vm56, %v3101, %v3025
    %v3107 = vadd.f32 %v3106, %v40
    %v3108 = vtanh.pop %v3107
    %v3109 = vxor.u32 %v3107, 2147483648
    %v3110 = vmul.f32 %v3109, 1.442695
    %v3111 = vpow.pop %v3110
    %v3112 = vadd.f32 %v3111, 1.0
    %v3113 = vrcp.pop %v3112
    %v3114 = vmul.f32 1.0, %v3113
    %v3115 = vsel %vm45, %v3108, %v3114
    %v3116 = vmul.f32 %v3115, %v2758
    %3118 = vrot.lane.b32.xlu0 %v3115, 64
    %v3119 = vpop.permute.xlu0 %3118
    %v3121 = vmul.f32 %v3115, %v3119
    %3123 = vrot.lane.b32.xlu0 %v3121, 32
    %v3124 = vpop.permute.xlu0 %3123
    %v3126 = vadd.f32 %v3116, %v3124
    %v3127 = vtanh.pop %v3126
    %3129 = vrot.lane.b32.xlu0 %v3127, 64
    %v3130 = vpop.permute.xlu0 %3129
    %v3132 = vmul.f32 %v3115, %v3130
    %s3133 = scalar_lea.vmem %s0, 64
    %v3134 = vld [vmem:[%s3133] sm:$0xff]
    %3136 = vrot.lane.b32.xlu0 %v3132, 32
    %v3137 = vpop.permute.xlu0 %3136
    %v3139 = vrot.slane %v3137, 6
    %v3140 = vsel %vm57, %v3134, %v3139
    %v3141 = vpack.c.bf16 %v3140, %v3140
    %v3142 = vpack.c.bf16 %v3132, %v3132
    %3144 = vrot.lane.b32.xlu0 %v3142, 32
    %v3145 = vpop.permute.xlu0 %3144
    %v3147 = vsel %vm81, %v3145, 0
    %3149 = vmatprep.subr.bf16.mxu0 0
    %3150 = vmatpush1.bf16.msra.mxu0 %v77
    %3151 = vmatprep.subr.bf16.mxu0 0
    %3152 = vmatpush1.bf16.msra.mxu0 %v78
    %3153 = vmatprep.subr.bf16.mxu0 0
    %3154 = vmatpush1.bf16.msra.mxu0 0
    %3155 = vmatprep.subr.bf16.mxu0 0
    %3156 = vmatpush1.bf16.msra.mxu0 0
    %3157 = vmatprep.subr.bf16.mxu0 0
    %3158 = vmatpush1.bf16.msra.mxu0 0
    %3159 = vmatprep.subr.bf16.mxu0 0
    %3160 = vmatpush1.bf16.msra.mxu0 0
    %3161 = vmatprep.subr.bf16.mxu0 0
    %3162 = vmatpush1.bf16.msra.mxu0 0
    %3163 = vmatprep.subr.bf16.mxu0 0
    %3164 = vmatpush1.bf16.msra.mxu0 0
    %3165 = vmatprep.subr.bf16.mxu0 0
    %3166 = vmatpush1.bf16.msra.mxu0 0
    %3167 = vmatprep.subr.bf16.mxu0 0
    %3168 = vmatpush1.bf16.msra.mxu0 0
    %3169 = vmatprep.subr.bf16.mxu0 0
    %3170 = vmatpush1.bf16.msra.mxu0 0
    %3171 = vmatprep.subr.bf16.mxu0 0
    %3172 = vmatpush1.bf16.msra.mxu0 0
    %3173 = vmatprep.subr.bf16.mxu0 0
    %3174 = vmatpush1.bf16.msra.mxu0 0
    %3175 = vmatprep.subr.bf16.mxu0 0
    %3176 = vmatpush1.bf16.msra.mxu0 0
    %3177 = vmatprep.subr.bf16.mxu0 0
    %3178 = vmatpush1.bf16.msra.mxu0 0
    %3179 = vmatprep.subr.bf16.mxu0 0
    %3180 = vmatpush1.bf16.msra.mxu0 0
    %3181 = vmatprep.mubr.bf16.mxu0 0
    %3182 = vmatmul.mubr.bf16.gmra.mrb[0].mxu0 %v3147
    %v3183 = vpop.f32.mrb[0].mxu0
    %v3184 = vadd.f32 0.0, %v3183
    %v3185 = vpop.f32.mrb[0].mxu0
    %v3186 = vpop.f32.mrb[0].mxu0
    %v3187 = vpop.f32.mrb[0].mxu0
    %3188 = vdwg.mxu0
    %v3190 = vsel %vm81, %v3141, 0
    %3192 = vmatprep.subr.bf16.mxu0 0
    %3193 = vmatpush1.bf16.msra.mxu0 %v133
    %3194 = vmatprep.subr.bf16.mxu0 0
    %3195 = vmatpush1.bf16.msra.mxu0 %v134
    %3196 = vmatprep.subr.bf16.mxu0 0
    %3197 = vmatpush1.bf16.msra.mxu0 0
    %3198 = vmatprep.subr.bf16.mxu0 0
    %3199 = vmatpush1.bf16.msra.mxu0 0
    %3200 = vmatprep.subr.bf16.mxu0 0
    %3201 = vmatpush1.bf16.msra.mxu0 0
    %3202 = vmatprep.subr.bf16.mxu0 0
    %3203 = vmatpush1.bf16.msra.mxu0 0
    %3204 = vmatprep.subr.bf16.mxu0 0
    %3205 = vmatpush1.bf16.msra.mxu0 0
    %3206 = vmatprep.subr.bf16.mxu0 0
    %3207 = vmatpush1.bf16.msra.mxu0 0
    %3208 = vmatprep.subr.bf16.mxu0 0
    %3209 = vmatpush1.bf16.msra.mxu0 0
    %3210 = vmatprep.subr.bf16.mxu0 0
    %3211 = vmatpush1.bf16.msra.mxu0 0
    %3212 = vmatprep.subr.bf16.mxu0 0
    %3213 = vmatpush1.bf16.msra.mxu0 0
    %3214 = vmatprep.subr.bf16.mxu0 0
    %3215 = vmatpush1.bf16.msra.mxu0 0
    %3216 = vmatprep.subr.bf16.mxu0 0
    %3217 = vmatpush1.bf16.msra.mxu0 0
    %3218 = vmatprep.subr.bf16.mxu0 0
    %3219 = vmatpush1.bf16.msra.mxu0 0
    %3220 = vmatprep.subr.bf16.mxu0 0
    %3221 = vmatpush1.bf16.msra.mxu0 0
    %3222 = vmatprep.subr.bf16.mxu0 0
    %3223 = vmatpush1.bf16.msra.mxu0 0
    %3224 = vmatprep.mubr.bf16.mxu0 0
    %3225 = vmatmul.mubr.bf16.gmra.mrb[0].mxu0 %v3190
    %v3226 = vpop.f32.mrb[0].mxu0
    %v3227 = vadd.f32 %v3184, %v3226
    %v3228 = vpop.f32.mrb[0].mxu0
    %v3229 = vpop.f32.mrb[0].mxu0
    %v3230 = vpop.f32.mrb[0].mxu0
    %3231 = vdwg.mxu0
    %3232 = vmatprep.subr.bf16.mxu0 0
    %3233 = vmatpush1.bf16.msra.mxu0 %v198
    %3234 = vmatprep.subr.bf16.mxu0 0
    %3235 = vmatpush1.bf16.msra.mxu0 %v199
    %3236 = vmatprep.subr.bf16.mxu0 0
    %3237 = vmatpush1.bf16.msra.mxu0 0
    %3238 = vmatprep.subr.bf16.mxu0 0
    %3239 = vmatpush1.bf16.msra.mxu0 0
    %3240 = vmatprep.subr.bf16.mxu0 0
    %3241 = vmatpush1.bf16.msra.mxu0 0
    %3242 = vmatprep.subr.bf16.mxu0 0
    %3243 = vmatpush1.bf16.msra.mxu0 0
    %3244 = vmatprep.subr.bf16.mxu0 0
    %3245 = vmatpush1.bf16.msra.mxu0 0
    %3246 = vmatprep.subr.bf16.mxu0 0
    %3247 = vmatpush1.bf16.msra.mxu0 0
    %3248 = vmatprep.subr.bf16.mxu0 0
    %3249 = vmatpush1.bf16.msra.mxu0 0
    %3250 = vmatprep.subr.bf16.mxu0 0
    %3251 = vmatpush1.bf16.msra.mxu0 0
    %3252 = vmatprep.subr.bf16.mxu0 0
    %3253 = vmatpush1.bf16.msra.mxu0 0
    %3254 = vmatprep.subr.bf16.mxu0 0
    %3255 = vmatpush1.bf16.msra.mxu0 0
    %3256 = vmatprep.subr.bf16.mxu0 0
    %3257 = vmatpush1.bf16.msra.mxu0 0
    %3258 = vmatprep.subr.bf16.mxu0 0
    %3259 = vmatpush1.bf16.msra.mxu0 0
    %3260 = vmatprep.subr.bf16.mxu0 0
    %3261 = vmatpush1.bf16.msra.mxu0 0
    %3262 = vmatprep.subr.bf16.mxu0 0
    %3263 = vmatpush1.bf16.msra.mxu0 0
    %3264 = vmatprep.mubr.bf16.mxu0 0
    %3265 = vmatmul.mubr.bf16.gmra.mrb[0].mxu0 %v3147
    %v3266 = vpop.f32.mrb[0].mxu0
    %v3267 = vadd.f32 0.0, %v3266
    %v3268 = vpop.f32.mrb[0].mxu0
    %v3269 = vpop.f32.mrb[0].mxu0
    %v3270 = vpop.f32.mrb[0].mxu0
    %3271 = vdwg.mxu0
    %3272 = vmatprep.subr.bf16.mxu0 0
    %3273 = vmatpush1.bf16.msra.mxu0 %v250
    %3274 = vmatprep.subr.bf16.mxu0 0
    %3275 = vmatpush1.bf16.msra.mxu0 %v251
    %3276 = vmatprep.subr.bf16.mxu0 0
    %3277 = vmatpush1.bf16.msra.mxu0 0
    %3278 = vmatprep.subr.bf16.mxu0 0
    %3279 = vmatpush1.bf16.msra.mxu0 0
    %3280 = vmatprep.subr.bf16.mxu0 0
    %3281 = vmatpush1.bf16.msra.mxu0 0
    %3282 = vmatprep.subr.bf16.mxu0 0
    %3283 = vmatpush1.bf16.msra.mxu0 0
    %3284 = vmatprep.subr.bf16.mxu0 0
    %3285 = vmatpush1.bf16.msra.mxu0 0
    %3286 = vmatprep.subr.bf16.mxu0 0
    %3287 = vmatpush1.bf16.msra.mxu0 0
    %3288 = vmatprep.subr.bf16.mxu0 0
    %3289 = vmatpush1.bf16.msra.mxu0 0
    %3290 = vmatprep.subr.bf16.mxu0 0
    %3291 = vmatpush1.bf16.msra.mxu0 0
    %3292 = vmatprep.subr.bf16.mxu0 0
    %3293 = vmatpush1.bf16.msra.mxu0 0
    %3294 = vmatprep.subr.bf16.mxu0 0
    %3295 = vmatpush1.bf16.msra.mxu0 0
    %3296 = vmatprep.subr.bf16.mxu0 0
    %3297 = vmatpush1.bf16.msra.mxu0 0
    %3298 = vmatprep.subr.bf16.mxu0 0
    %3299 = vmatpush1.bf16.msra.mxu0 0
    %3300 = vmatprep.subr.bf16.mxu0 0
    %3301 = vmatpush1.bf16.msra.mxu0 0
    %3302 = vmatprep.subr.bf16.mxu0 0
    %3303 = vmatpush1.bf16.msra.mxu0 0
    %3304 = vmatprep.mubr.bf16.mxu0 0
    %3305 = vmatmul.mubr.bf16.gmra.mrb[0].mxu0 %v3190
    %v3306 = vpop.f32.mrb[0].mxu0
    %v3307 = vadd.f32 %v3267, %v3306
    %v3308 = vpop.f32.mrb[0].mxu0
    %v3309 = vpop.f32.mrb[0].mxu0
    %v3310 = vpop.f32.mrb[0].mxu0
    %3311 = vdwg.mxu0
    %v3312 = vsel %vm50, %v3307, %v3227
    %3313 = vmatprep.subr.bf16.mxu0 0
    %3314 = vmatpush1.bf16.msra.mxu0 %v313
    %3315 = vmatprep.subr.bf16.mxu0 0
    %3316 = vmatpush1.bf16.msra.mxu0 %v314
    %3317 = vmatprep.subr.bf16.mxu0 0
    %3318 = vmatpush1.bf16.msra.mxu0 0
    %3319 = vmatprep.subr.bf16.mxu0 0
    %3320 = vmatpush1.bf16.msra.mxu0 0
    %3321 = vmatprep.subr.bf16.mxu0 0
    %3322 = vmatpush1.bf16.msra.mxu0 0
    %3323 = vmatprep.subr.bf16.mxu0 0
    %3324 = vmatpush1.bf16.msra.mxu0 0
    %3325 = vmatprep.subr.bf16.mxu0 0
    %3326 = vmatpush1.bf16.msra.mxu0 0
    %3327 = vmatprep.subr.bf16.mxu0 0
    %3328 = vmatpush1.bf16.msra.mxu0 0
    %3329 = vmatprep.subr.bf16.mxu0 0
    %3330 = vmatpush1.bf16.msra.mxu0 0
    %3331 = vmatprep.subr.bf16.mxu0 0
    %3332 = vmatpush1.bf16.msra.mxu0 0
    %3333 = vmatprep.subr.bf16.mxu0 0
    %3334 = vmatpush1.bf16.msra.mxu0 0
    %3335 = vmatprep.subr.bf16.mxu0 0
    %3336 = vmatpush1.bf16.msra.mxu0 0
    %3337 = vmatprep.subr.bf16.mxu0 0
    %3338 = vmatpush1.bf16.msra.mxu0 0
    %3339 = vmatprep.subr.bf16.mxu0 0
    %3340 = vmatpush1.bf16.msra.mxu0 0
    %3341 = vmatprep.subr.bf16.mxu0 0
    %3342 = vmatpush1.bf16.msra.mxu0 0
    %3343 = vmatprep.subr.bf16.mxu0 0
    %3344 = vmatpush1.bf16.msra.mxu0 0
    %3345 = vmatprep.mubr.bf16.mxu0 0
    %3346 = vmatmul.mubr.bf16.gmra.mrb[0].mxu0 %v3147
    %v3347 = vpop.f32.mrb[0].mxu0
    %v3348 = vadd.f32 0.0, %v3347
    %v3349 = vpop.f32.mrb[0].mxu0
    %v3350 = vpop.f32.mrb[0].mxu0
    %v3351 = vpop.f32.mrb[0].mxu0
    %3352 = vdwg.mxu0
    %3353 = vmatprep.subr.bf16.mxu0 0
    %3354 = vmatpush1.bf16.msra.mxu0 %v365
    %3355 = vmatprep.subr.bf16.mxu0 0
    %3356 = vmatpush1.bf16.msra.mxu0 %v366
    %3357 = vmatprep.subr.bf16.mxu0 0
    %3358 = vmatpush1.bf16.msra.mxu0 0
    %3359 = vmatprep.subr.bf16.mxu0 0
    %3360 = vmatpush1.bf16.msra.mxu0 0
    %3361 = vmatprep.subr.bf16.mxu0 0
    %3362 = vmatpush1.bf16.msra.mxu0 0
    %3363 = vmatprep.subr.bf16.mxu0 0
    %3364 = vmatpush1.bf16.msra.mxu0 0
    %3365 = vmatprep.subr.bf16.mxu0 0
    %3366 = vmatpush1.bf16.msra.mxu0 0
    %3367 = vmatprep.subr.bf16.mxu0 0
    %3368 = vmatpush1.bf16.msra.mxu0 0
    %3369 = vmatprep.subr.bf16.mxu0 0
    %3370 = vmatpush1.bf16.msra.mxu0 0
    %3371 = vmatprep.subr.bf16.mxu0 0
    %3372 = vmatpush1.bf16.msra.mxu0 0
    %3373 = vmatprep.subr.bf16.mxu0 0
    %3374 = vmatpush1.bf16.msra.mxu0 0
    %3375 = vmatprep.subr.bf16.mxu0 0
    %3376 = vmatpush1.bf16.msra.mxu0 0
    %3377 = vmatprep.subr.bf16.mxu0 0
    %3378 = vmatpush1.bf16.msra.mxu0 0
    %3379 = vmatprep.subr.bf16.mxu0 0
    %3380 = vmatpush1.bf16.msra.mxu0 0
    %3381 = vmatprep.subr.bf16.mxu0 0
    %3382 = vmatpush1.bf16.msra.mxu0 0
    %3383 = vmatprep.subr.bf16.mxu0 0
    %3384 = vmatpush1.bf16.msra.mxu0 0
    %3385 = vmatprep.mubr.bf16.mxu0 0
    %3386 = vmatmul.mubr.bf16.gmra.mrb[0].mxu0 %v3190
    %v3387 = vpop.f32.mrb[0].mxu0
    %v3388 = vadd.f32 %v3348, %v3387
    %v3389 = vpop.f32.mrb[0].mxu0
    %v3390 = vpop.f32.mrb[0].mxu0
    %v3391 = vpop.f32.mrb[0].mxu0
    %3392 = vdwg.mxu0
    %v3393 = vsel %vm53, %v3388, %v3312
    %3394 = vmatprep.subr.bf16.mxu0 0
    %3395 = vmatpush1.bf16.msra.mxu0 %v428
    %3396 = vmatprep.subr.bf16.mxu0 0
    %3397 = vmatpush1.bf16.msra.mxu0 %v429
    %3398 = vmatprep.subr.bf16.mxu0 0
    %3399 = vmatpush1.bf16.msra.mxu0 0
    %3400 = vmatprep.subr.bf16.mxu0 0
    %3401 = vmatpush1.bf16.msra.mxu0 0
    %3402 = vmatprep.subr.bf16.mxu0 0
    %3403 = vmatpush1.bf16.msra.mxu0 0
    %3404 = vmatprep.subr.bf16.mxu0 0
    %3405 = vmatpush1.bf16.msra.mxu0 0
    %3406 = vmatprep.subr.bf16.mxu0 0
    %3407 = vmatpush1.bf16.msra.mxu0 0
    %3408 = vmatprep.subr.bf16.mxu0 0
    %3409 = vmatpush1.bf16.msra.mxu0 0
    %3410 = vmatprep.subr.bf16.mxu0 0
    %3411 = vmatpush1.bf16.msra.mxu0 0
    %3412 = vmatprep.subr.bf16.mxu0 0
    %3413 = vmatpush1.bf16.msra.mxu0 0
    %3414 = vmatprep.subr.bf16.mxu0 0
    %3415 = vmatpush1.bf16.msra.mxu0 0
    %3416 = vmatprep.subr.bf16.mxu0 0
    %3417 = vmatpush1.bf16.msra.mxu0 0
    %3418 = vmatprep.subr.bf16.mxu0 0
    %3419 = vmatpush1.bf16.msra.mxu0 0
    %3420 = vmatprep.subr.bf16.mxu0 0
    %3421 = vmatpush1.bf16.msra.mxu0 0
    %3422 = vmatprep.subr.bf16.mxu0 0
    %3423 = vmatpush1.bf16.msra.mxu0 0
    %3424 = vmatprep.subr.bf16.mxu0 0
    %3425 = vmatpush1.bf16.msra.mxu0 0
    %3426 = vmatprep.mubr.bf16.mxu0 0
    %3427 = vmatmul.mubr.bf16.gmra.mrb[0].mxu0 %v3147
    %v3428 = vpop.f32.mrb[0].mxu0
    %v3429 = vadd.f32 0.0, %v3428
    %v3430 = vpop.f32.mrb[0].mxu0
    %v3431 = vpop.f32.mrb[0].mxu0
    %v3432 = vpop.f32.mrb[0].mxu0
    %3433 = vdwg.mxu0
    %3434 = vmatprep.subr.bf16.mxu0 0
    %3435 = vmatpush1.bf16.msra.mxu0 %v480
    %3436 = vmatprep.subr.bf16.mxu0 0
    %3437 = vmatpush1.bf16.msra.mxu0 %v481
    %3438 = vmatprep.subr.bf16.mxu0 0
    %3439 = vmatpush1.bf16.msra.mxu0 0
    %3440 = vmatprep.subr.bf16.mxu0 0
    %3441 = vmatpush1.bf16.msra.mxu0 0
    %3442 = vmatprep.subr.bf16.mxu0 0
    %3443 = vmatpush1.bf16.msra.mxu0 0
    %3444 = vmatprep.subr.bf16.mxu0 0
    %3445 = vmatpush1.bf16.msra.mxu0 0
    %3446 = vmatprep.subr.bf16.mxu0 0
    %3447 = vmatpush1.bf16.msra.mxu0 0
    %3448 = vmatprep.subr.bf16.mxu0 0
    %3449 = vmatpush1.bf16.msra.mxu0 0
    %3450 = vmatprep.subr.bf16.mxu0 0
    %3451 = vmatpush1.bf16.msra.mxu0 0
    %3452 = vmatprep.subr.bf16.mxu0 0
    %3453 = vmatpush1.bf16.msra.mxu0 0
    %3454 = vmatprep.subr.bf16.mxu0 0
    %3455 = vmatpush1.bf16.msra.mxu0 0
    %3456 = vmatprep.subr.bf16.mxu0 0
    %3457 = vmatpush1.bf16.msra.mxu0 0
    %3458 = vmatprep.subr.bf16.mxu0 0
    %3459 = vmatpush1.bf16.msra.mxu0 0
    %3460 = vmatprep.subr.bf16.mxu0 0
    %3461 = vmatpush1.bf16.msra.mxu0 0
    %3462 = vmatprep.subr.bf16.mxu0 0
    %3463 = vmatpush1.bf16.msra.mxu0 0
    %3464 = vmatprep.subr.bf16.mxu0 0
    %3465 = vmatpush1.bf16.msra.mxu0 0
    %3466 = vmatprep.mubr.bf16.mxu0 0
    %3467 = vmatmul.mubr.bf16.gmra.mrb[0].mxu0 %v3190
    %v3468 = vpop.f32.mrb[0].mxu0
    %v3469 = vadd.f32 %v3429, %v3468
    %v3470 = vpop.f32.mrb[0].mxu0
    %v3471 = vpop.f32.mrb[0].mxu0
    %v3472 = vpop.f32.mrb[0].mxu0
    %3473 = vdwg.mxu0
    %v3474 = vsel %vm56, %v3469, %v3393
    %v3475 = vadd.f32 %v3474, %v40
    %v3476 = vtanh.pop %v3475
    %v3477 = vxor.u32 %v3475, 2147483648
    %v3478 = vmul.f32 %v3477, 1.442695
    %v3479 = vpow.pop %v3478
    %v3480 = vadd.f32 %v3479, 1.0
    %v3481 = vrcp.pop %v3480
    %v3482 = vmul.f32 1.0, %v3481
    %v3483 = vsel %vm45, %v3476, %v3482
    %v3484 = vmul.f32 %v3483, %v3126
    %3486 = vrot.lane.b32.xlu0 %v3483, 64
    %v3487 = vpop.permute.xlu0 %3486
    %v3489 = vmul.f32 %v3483, %v3487
    %3491 = vrot.lane.b32.xlu0 %v3489, 32
    %v3492 = vpop.permute.xlu0 %3491
    %v3494 = vadd.f32 %v3484, %v3492
    %v3495 = vtanh.pop %v3494
    %3497 = vrot.lane.b32.xlu0 %v3495, 64
    %v3498 = vpop.permute.xlu0 %3497
    %v3500 = vmul.f32 %v3483, %v3498
    %s3501 = scalar_lea.vmem %s0, 72
    %v3502 = vld [vmem:[%s3501] sm:$0xff]
    %3504 = vrot.lane.b32.xlu0 %v3500, 32
    %v3505 = vpop.permute.xlu0 %3504
    %v3507 = vrot.slane %v3505, 6
    %v3508 = vsel %vm57, %v3502, %v3507
    %v3509 = vpack.c.bf16 %v3508, %v3508
    %v3510 = vpack.c.bf16 %v3500, %v3500
    %3512 = vrot.lane.b32.xlu0 %v3510, 32
    %v3513 = vpop.permute.xlu0 %3512
    %v3515 = vsel %vm81, %v3513, 0
    %3517 = vmatprep.subr.bf16.mxu0 0
    %3518 = vmatpush1.bf16.msra.mxu0 %v77
    %3519 = vmatprep.subr.bf16.mxu0 0
    %3520 = vmatpush1.bf16.msra.mxu0 %v78
    %3521 = vmatprep.subr.bf16.mxu0 0
    %3522 = vmatpush1.bf16.msra.mxu0 0
    %3523 = vmatprep.subr.bf16.mxu0 0
    %3524 = vmatpush1.bf16.msra.mxu0 0
    %3525 = vmatprep.subr.bf16.mxu0 0
    %3526 = vmatpush1.bf16.msra.mxu0 0
    %3527 = vmatprep.subr.bf16.mxu0 0
    %3528 = vmatpush1.bf16.msra.mxu0 0
    %3529 = vmatprep.subr.bf16.mxu0 0
    %3530 = vmatpush1.bf16.msra.mxu0 0
    %3531 = vmatprep.subr.bf16.mxu0 0
    %3532 = vmatpush1.bf16.msra.mxu0 0
    %3533 = vmatprep.subr.bf16.mxu0 0
    %3534 = vmatpush1.bf16.msra.mxu0 0
    %3535 = vmatprep.subr.bf16.mxu0 0
    %3536 = vmatpush1.bf16.msra.mxu0 0
    %3537 = vmatprep.subr.bf16.mxu0 0
    %3538 = vmatpush1.bf16.msra.mxu0 0
    %3539 = vmatprep.subr.bf16.mxu0 0
    %3540 = vmatpush1.bf16.msra.mxu0 0
    %3541 = vmatprep.subr.bf16.mxu0 0
    %3542 = vmatpush1.bf16.msra.mxu0 0
    %3543 = vmatprep.subr.bf16.mxu0 0
    %3544 = vmatpush1.bf16.msra.mxu0 0
    %3545 = vmatprep.subr.bf16.mxu0 0
    %3546 = vmatpush1.bf16.msra.mxu0 0
    %3547 = vmatprep.subr.bf16.mxu0 0
    %3548 = vmatpush1.bf16.msra.mxu0 0
    %3549 = vmatprep.mubr.bf16.mxu0 0
    %3550 = vmatmul.mubr.bf16.gmra.mrb[0].mxu0 %v3515
    %v3551 = vpop.f32.mrb[0].mxu0
    %v3552 = vadd.f32 0.0, %v3551
    %v3553 = vpop.f32.mrb[0].mxu0
    %v3554 = vpop.f32.mrb[0].mxu0
    %v3555 = vpop.f32.mrb[0].mxu0
    %3556 = vdwg.mxu0
    %v3558 = vsel %vm81, %v3509, 0
    %3560 = vmatprep.subr.bf16.mxu0 0
    %3561 = vmatpush1.bf16.msra.mxu0 %v133
    %3562 = vmatprep.subr.bf16.mxu0 0
    %3563 = vmatpush1.bf16.msra.mxu0 %v134
    %3564 = vmatprep.subr.bf16.mxu0 0
    %3565 = vmatpush1.bf16.msra.mxu0 0
    %3566 = vmatprep.subr.bf16.mxu0 0
    %3567 = vmatpush1.bf16.msra.mxu0 0
    %3568 = vmatprep.subr.bf16.mxu0 0
    %3569 = vmatpush1.bf16.msra.mxu0 0
    %3570 = vmatprep.subr.bf16.mxu0 0
    %3571 = vmatpush1.bf16.msra.mxu0 0
    %3572 = vmatprep.subr.bf16.mxu0 0
    %3573 = vmatpush1.bf16.msra.mxu0 0
    %3574 = vmatprep.subr.bf16.mxu0 0
    %3575 = vmatpush1.bf16.msra.mxu0 0
    %3576 = vmatprep.subr.bf16.mxu0 0
    %3577 = vmatpush1.bf16.msra.mxu0 0
    %3578 = vmatprep.subr.bf16.mxu0 0
    %3579 = vmatpush1.bf16.msra.mxu0 0
    %3580 = vmatprep.subr.bf16.mxu0 0
    %3581 = vmatpush1.bf16.msra.mxu0 0
    %3582 = vmatprep.subr.bf16.mxu0 0
    %3583 = vmatpush1.bf16.msra.mxu0 0
    %3584 = vmatprep.subr.bf16.mxu0 0
    %3585 = vmatpush1.bf16.msra.mxu0 0
    %3586 = vmatprep.subr.bf16.mxu0 0
    %3587 = vmatpush1.bf16.msra.mxu0 0
    %3588 = vmatprep.subr.bf16.mxu0 0
    %3589 = vmatpush1.bf16.msra.mxu0 0
    %3590 = vmatprep.subr.bf16.mxu0 0
    %3591 = vmatpush1.bf16.msra.mxu0 0
    %3592 = vmatprep.mubr.bf16.mxu0 0
    %3593 = vmatmul.mubr.bf16.gmra.mrb[0].mxu0 %v3558
    %v3594 = vpop.f32.mrb[0].mxu0
    %v3595 = vadd.f32 %v3552, %v3594
    %v3596 = vpop.f32.mrb[0].mxu0
    %v3597 = vpop.f32.mrb[0].mxu0
    %v3598 = vpop.f32.mrb[0].mxu0
    %3599 = vdwg.mxu0
    %3600 = vmatprep.subr.bf16.mxu0 0
    %3601 = vmatpush1.bf16.msra.mxu0 %v198
    %3602 = vmatprep.subr.bf16.mxu0 0
    %3603 = vmatpush1.bf16.msra.mxu0 %v199
    %3604 = vmatprep.subr.bf16.mxu0 0
    %3605 = vmatpush1.bf16.msra.mxu0 0
    %3606 = vmatprep.subr.bf16.mxu0 0
    %3607 = vmatpush1.bf16.msra.mxu0 0
    %3608 = vmatprep.subr.bf16.mxu0 0
    %3609 = vmatpush1.bf16.msra.mxu0 0
    %3610 = vmatprep.subr.bf16.mxu0 0
    %3611 = vmatpush1.bf16.msra.mxu0 0
    %3612 = vmatprep.subr.bf16.mxu0 0
    %3613 = vmatpush1.bf16.msra.mxu0 0
    %3614 = vmatprep.subr.bf16.mxu0 0
    %3615 = vmatpush1.bf16.msra.mxu0 0
    %3616 = vmatprep.subr.bf16.mxu0 0
    %3617 = vmatpush1.bf16.msra.mxu0 0
    %3618 = vmatprep.subr.bf16.mxu0 0
    %3619 = vmatpush1.bf16.msra.mxu0 0
    %3620 = vmatprep.subr.bf16.mxu0 0
    %3621 = vmatpush1.bf16.msra.mxu0 0
    %3622 = vmatprep.subr.bf16.mxu0 0
    %3623 = vmatpush1.bf16.msra.mxu0 0
    %3624 = vmatprep.subr.bf16.mxu0 0
    %3625 = vmatpush1.bf16.msra.mxu0 0
    %3626 = vmatprep.subr.bf16.mxu0 0
    %3627 = vmatpush1.bf16.msra.mxu0 0
    %3628 = vmatprep.subr.bf16.mxu0 0
    %3629 = vmatpush1.bf16.msra.mxu0 0
    %3630 = vmatprep.subr.bf16.mxu0 0
    %3631 = vmatpush1.bf16.msra.mxu0 0
    %3632 = vmatprep.mubr.bf16.mxu0 0
    %3633 = vmatmul.mubr.bf16.gmra.mrb[0].mxu0 %v3515
    %v3634 = vpop.f32.mrb[0].mxu0
    %v3635 = vadd.f32 0.0, %v3634
    %v3636 = vpop.f32.mrb[0].mxu0
    %v3637 = vpop.f32.mrb[0].mxu0
    %v3638 = vpop.f32.mrb[0].mxu0
    %3639 = vdwg.mxu0
    %3640 = vmatprep.subr.bf16.mxu0 0
    %3641 = vmatpush1.bf16.msra.mxu0 %v250
    %3642 = vmatprep.subr.bf16.mxu0 0
    %3643 = vmatpush1.bf16.msra.mxu0 %v251
    %3644 = vmatprep.subr.bf16.mxu0 0
    %3645 = vmatpush1.bf16.msra.mxu0 0
    %3646 = vmatprep.subr.bf16.mxu0 0
    %3647 = vmatpush1.bf16.msra.mxu0 0
    %3648 = vmatprep.subr.bf16.mxu0 0
    %3649 = vmatpush1.bf16.msra.mxu0 0
    %3650 = vmatprep.subr.bf16.mxu0 0
    %3651 = vmatpush1.bf16.msra.mxu0 0
    %3652 = vmatprep.subr.bf16.mxu0 0
    %3653 = vmatpush1.bf16.msra.mxu0 0
    %3654 = vmatprep.subr.bf16.mxu0 0
    %3655 = vmatpush1.bf16.msra.mxu0 0
    %3656 = vmatprep.subr.bf16.mxu0 0
    %3657 = vmatpush1.bf16.msra.mxu0 0
    %3658 = vmatprep.subr.bf16.mxu0 0
    %3659 = vmatpush1.bf16.msra.mxu0 0
    %3660 = vmatprep.subr.bf16.mxu0 0
    %3661 = vmatpush1.bf16.msra.mxu0 0
    %3662 = vmatprep.subr.bf16.mxu0 0
    %3663 = vmatpush1.bf16.msra.mxu0 0
    %3664 = vmatprep.subr.bf16.mxu0 0
    %3665 = vmatpush1.bf16.msra.mxu0 0
    %3666 = vmatprep.subr.bf16.mxu0 0
    %3667 = vmatpush1.bf16.msra.mxu0 0
    %3668 = vmatprep.subr.bf16.mxu0 0
    %3669 = vmatpush1.bf16.msra.mxu0 0
    %3670 = vmatprep.subr.bf16.mxu0 0
    %3671 = vmatpush1.bf16.msra.mxu0 0
    %3672 = vmatprep.mubr.bf16.mxu0 0
    %3673 = vmatmul.mubr.bf16.gmra.mrb[0].mxu0 %v3558
    %v3674 = vpop.f32.mrb[0].mxu0
    %v3675 = vadd.f32 %v3635, %v3674
    %v3676 = vpop.f32.mrb[0].mxu0
    %v3677 = vpop.f32.mrb[0].mxu0
    %v3678 = vpop.f32.mrb[0].mxu0
    %3679 = vdwg.mxu0
    %v3680 = vsel %vm50, %v3675, %v3595
    %3681 = vmatprep.subr.bf16.mxu0 0
    %3682 = vmatpush1.bf16.msra.mxu0 %v313
    %3683 = vmatprep.subr.bf16.mxu0 0
    %3684 = vmatpush1.bf16.msra.mxu0 %v314
    %3685 = vmatprep.subr.bf16.mxu0 0
    %3686 = vmatpush1.bf16.msra.mxu0 0
    %3687 = vmatprep.subr.bf16.mxu0 0
    %3688 = vmatpush1.bf16.msra.mxu0 0
    %3689 = vmatprep.subr.bf16.mxu0 0
    %3690 = vmatpush1.bf16.msra.mxu0 0
    %3691 = vmatprep.subr.bf16.mxu0 0
    %3692 = vmatpush1.bf16.msra.mxu0 0
    %3693 = vmatprep.subr.bf16.mxu0 0
    %3694 = vmatpush1.bf16.msra.mxu0 0
    %3695 = vmatprep.subr.bf16.mxu0 0
    %3696 = vmatpush1.bf16.msra.mxu0 0
    %3697 = vmatprep.subr.bf16.mxu0 0
    %3698 = vmatpush1.bf16.msra.mxu0 0
    %3699 = vmatprep.subr.bf16.mxu0 0
    %3700 = vmatpush1.bf16.msra.mxu0 0
    %3701 = vmatprep.subr.bf16.mxu0 0
    %3702 = vmatpush1.bf16.msra.mxu0 0
    %3703 = vmatprep.subr.bf16.mxu0 0
    %3704 = vmatpush1.bf16.msra.mxu0 0
    %3705 = vmatprep.subr.bf16.mxu0 0
    %3706 = vmatpush1.bf16.msra.mxu0 0
    %3707 = vmatprep.subr.bf16.mxu0 0
    %3708 = vmatpush1.bf16.msra.mxu0 0
    %3709 = vmatprep.subr.bf16.mxu0 0
    %3710 = vmatpush1.bf16.msra.mxu0 0
    %3711 = vmatprep.subr.bf16.mxu0 0
    %3712 = vmatpush1.bf16.msra.mxu0 0
    %3713 = vmatprep.mubr.bf16.mxu0 0
    %3714 = vmatmul.mubr.bf16.gmra.mrb[0].mxu0 %v3515
    %v3715 = vpop.f32.mrb[0].mxu0
    %v3716 = vadd.f32 0.0, %v3715
    %v3717 = vpop.f32.mrb[0].mxu0
    %v3718 = vpop.f32.mrb[0].mxu0
    %v3719 = vpop.f32.mrb[0].mxu0
    %3720 = vdwg.mxu0
    %3721 = vmatprep.subr.bf16.mxu0 0
    %3722 = vmatpush1.bf16.msra.mxu0 %v365
    %3723 = vmatprep.subr.bf16.mxu0 0
    %3724 = vmatpush1.bf16.msra.mxu0 %v366
    %3725 = vmatprep.subr.bf16.mxu0 0
    %3726 = vmatpush1.bf16.msra.mxu0 0
    %3727 = vmatprep.subr.bf16.mxu0 0
    %3728 = vmatpush1.bf16.msra.mxu0 0
    %3729 = vmatprep.subr.bf16.mxu0 0
    %3730 = vmatpush1.bf16.msra.mxu0 0
    %3731 = vmatprep.subr.bf16.mxu0 0
    %3732 = vmatpush1.bf16.msra.mxu0 0
    %3733 = vmatprep.subr.bf16.mxu0 0
    %3734 = vmatpush1.bf16.msra.mxu0 0
    %3735 = vmatprep.subr.bf16.mxu0 0
    %3736 = vmatpush1.bf16.msra.mxu0 0
    %3737 = vmatprep.subr.bf16.mxu0 0
    %3738 = vmatpush1.bf16.msra.mxu0 0
    %3739 = vmatprep.subr.bf16.mxu0 0
    %3740 = vmatpush1.bf16.msra.mxu0 0
    %3741 = vmatprep.subr.bf16.mxu0 0
    %3742 = vmatpush1.bf16.msra.mxu0 0
    %3743 = vmatprep.subr.bf16.mxu0 0
    %3744 = vmatpush1.bf16.msra.mxu0 0
    %3745 = vmatprep.subr.bf16.mxu0 0
    %3746 = vmatpush1.bf16.msra.mxu0 0
    %3747 = vmatprep.subr.bf16.mxu0 0
    %3748 = vmatpush1.bf16.msra.mxu0 0
    %3749 = vmatprep.subr.bf16.mxu0 0
    %3750 = vmatpush1.bf16.msra.mxu0 0
    %3751 = vmatprep.subr.bf16.mxu0 0
    %3752 = vmatpush1.bf16.msra.mxu0 0
    %3753 = vmatprep.mubr.bf16.mxu0 0
    %3754 = vmatmul.mubr.bf16.gmra.mrb[0].mxu0 %v3558
    %v3755 = vpop.f32.mrb[0].mxu0
    %v3756 = vadd.f32 %v3716, %v3755
    %v3757 = vpop.f32.mrb[0].mxu0
    %v3758 = vpop.f32.mrb[0].mxu0
    %v3759 = vpop.f32.mrb[0].mxu0
    %3760 = vdwg.mxu0
    %v3761 = vsel %vm53, %v3756, %v3680
    %3762 = vmatprep.subr.bf16.mxu0 0
    %3763 = vmatpush1.bf16.msra.mxu0 %v428
    %3764 = vmatprep.subr.bf16.mxu0 0
    %3765 = vmatpush1.bf16.msra.mxu0 %v429
    %3766 = vmatprep.subr.bf16.mxu0 0
    %3767 = vmatpush1.bf16.msra.mxu0 0
    %3768 = vmatprep.subr.bf16.mxu0 0
    %3769 = vmatpush1.bf16.msra.mxu0 0
    %3770 = vmatprep.subr.bf16.mxu0 0
    %3771 = vmatpush1.bf16.msra.mxu0 0
    %3772 = vmatprep.subr.bf16.mxu0 0
    %3773 = vmatpush1.bf16.msra.mxu0 0
    %3774 = vmatprep.subr.bf16.mxu0 0
    %3775 = vmatpush1.bf16.msra.mxu0 0
    %3776 = vmatprep.subr.bf16.mxu0 0
    %3777 = vmatpush1.bf16.msra.mxu0 0
    %3778 = vmatprep.subr.bf16.mxu0 0
    %3779 = vmatpush1.bf16.msra.mxu0 0
    %3780 = vmatprep.subr.bf16.mxu0 0
    %3781 = vmatpush1.bf16.msra.mxu0 0
    %3782 = vmatprep.subr.bf16.mxu0 0
    %3783 = vmatpush1.bf16.msra.mxu0 0
    %3784 = vmatprep.subr.bf16.mxu0 0
    %3785 = vmatpush1.bf16.msra.mxu0 0
    %3786 = vmatprep.subr.bf16.mxu0 0
    %3787 = vmatpush1.bf16.msra.mxu0 0
    %3788 = vmatprep.subr.bf16.mxu0 0
    %3789 = vmatpush1.bf16.msra.mxu0 0
    %3790 = vmatprep.subr.bf16.mxu0 0
    %3791 = vmatpush1.bf16.msra.mxu0 0
    %3792 = vmatprep.subr.bf16.mxu0 0
    %3793 = vmatpush1.bf16.msra.mxu0 0
    %3794 = vmatprep.mubr.bf16.mxu0 0
    %3795 = vmatmul.mubr.bf16.gmra.mrb[0].mxu0 %v3515
    %v3796 = vpop.f32.mrb[0].mxu0
    %v3797 = vadd.f32 0.0, %v3796
    %v3798 = vpop.f32.mrb[0].mxu0
    %v3799 = vpop.f32.mrb[0].mxu0
    %v3800 = vpop.f32.mrb[0].mxu0
    %3801 = vdwg.mxu0
    %3802 = vmatprep.subr.bf16.mxu0 0
    %3803 = vmatpush1.bf16.msra.mxu0 %v480
    %3804 = vmatprep.subr.bf16.mxu0 0
    %3805 = vmatpush1.bf16.msra.mxu0 %v481
    %3806 = vmatprep.subr.bf16.mxu0 0
    %3807 = vmatpush1.bf16.msra.mxu0 0
    %3808 = vmatprep.subr.bf16.mxu0 0
    %3809 = vmatpush1.bf16.msra.mxu0 0
    %3810 = vmatprep.subr.bf16.mxu0 0
    %3811 = vmatpush1.bf16.msra.mxu0 0
    %3812 = vmatprep.subr.bf16.mxu0 0
    %3813 = vmatpush1.bf16.msra.mxu0 0
    %3814 = vmatprep.subr.bf16.mxu0 0
    %3815 = vmatpush1.bf16.msra.mxu0 0
    %3816 = vmatprep.subr.bf16.mxu0 0
    %3817 = vmatpush1.bf16.msra.mxu0 0
    %3818 = vmatprep.subr.bf16.mxu0 0
    %3819 = vmatpush1.bf16.msra.mxu0 0
    %3820 = vmatprep.subr.bf16.mxu0 0
    %3821 = vmatpush1.bf16.msra.mxu0 0
    %3822 = vmatprep.subr.bf16.mxu0 0
    %3823 = vmatpush1.bf16.msra.mxu0 0
    %3824 = vmatprep.subr.bf16.mxu0 0
    %3825 = vmatpush1.bf16.msra.mxu0 0
    %3826 = vmatprep.subr.bf16.mxu0 0
    %3827 = vmatpush1.bf16.msra.mxu0 0
    %3828 = vmatprep.subr.bf16.mxu0 0
    %3829 = vmatpush1.bf16.msra.mxu0 0
    %3830 = vmatprep.subr.bf16.mxu0 0
    %3831 = vmatpush1.bf16.msra.mxu0 0
    %3832 = vmatprep.subr.bf16.mxu0 0
    %3833 = vmatpush1.bf16.msra.mxu0 0
    %3834 = vmatprep.mubr.bf16.mxu0 0
    %3835 = vmatmul.mubr.bf16.gmra.mrb[0].mxu0 %v3558
    %v3836 = vpop.f32.mrb[0].mxu0
    %v3837 = vadd.f32 %v3797, %v3836
    %v3838 = vpop.f32.mrb[0].mxu0
    %v3839 = vpop.f32.mrb[0].mxu0
    %v3840 = vpop.f32.mrb[0].mxu0
    %3841 = vdwg.mxu0
    %v3842 = vsel %vm56, %v3837, %v3761
    %v3843 = vadd.f32 %v3842, %v40
    %v3844 = vtanh.pop %v3843
    %v3845 = vxor.u32 %v3843, 2147483648
    %v3846 = vmul.f32 %v3845, 1.442695
    %v3847 = vpow.pop %v3846
    %v3848 = vadd.f32 %v3847, 1.0
    %v3849 = vrcp.pop %v3848
    %v3850 = vmul.f32 1.0, %v3849
    %v3851 = vsel %vm45, %v3844, %v3850
    %v3852 = vmul.f32 %v3851, %v3494
    %3854 = vrot.lane.b32.xlu0 %v3851, 64
    %v3855 = vpop.permute.xlu0 %3854
    %v3857 = vmul.f32 %v3851, %v3855
    %3859 = vrot.lane.b32.xlu0 %v3857, 32
    %v3860 = vpop.permute.xlu0 %3859
    %v3862 = vadd.f32 %v3852, %v3860
    %v3863 = vtanh.pop %v3862
    %3865 = vrot.lane.b32.xlu0 %v3863, 64
    %v3866 = vpop.permute.xlu0 %3865
    %v3868 = vmul.f32 %v3851, %v3866
    %s3869 = scalar_lea.vmem %s0, 80
    %v3870 = vld [vmem:[%s3869] sm:$0xff]
    %3872 = vrot.lane.b32.xlu0 %v3868, 32
    %v3873 = vpop.permute.xlu0 %3872
    %v3875 = vrot.slane %v3873, 6
    %v3876 = vsel %vm57, %v3870, %v3875
    %v3877 = vpack.c.bf16 %v3876, %v3876
    %v3878 = vpack.c.bf16 %v3868, %v3868
    %3880 = vrot.lane.b32.xlu0 %v3878, 32
    %v3881 = vpop.permute.xlu0 %3880
    %v3883 = vsel %vm81, %v3881, 0
    %3885 = vmatprep.subr.bf16.mxu0 0
    %3886 = vmatpush1.bf16.msra.mxu0 %v77
    %3887 = vmatprep.subr.bf16.mxu0 0
    %3888 = vmatpush1.bf16.msra.mxu0 %v78
    %3889 = vmatprep.subr.bf16.mxu0 0
    %3890 = vmatpush1.bf16.msra.mxu0 0
    %3891 = vmatprep.subr.bf16.mxu0 0
    %3892 = vmatpush1.bf16.msra.mxu0 0
    %3893 = vmatprep.subr.bf16.mxu0 0
    %3894 = vmatpush1.bf16.msra.mxu0 0
    %3895 = vmatprep.subr.bf16.mxu0 0
    %3896 = vmatpush1.bf16.msra.mxu0 0
    %3897 = vmatprep.subr.bf16.mxu0 0
    %3898 = vmatpush1.bf16.msra.mxu0 0
    %3899 = vmatprep.subr.bf16.mxu0 0
    %3900 = vmatpush1.bf16.msra.mxu0 0
    %3901 = vmatprep.subr.bf16.mxu0 0
    %3902 = vmatpush1.bf16.msra.mxu0 0
    %3903 = vmatprep.subr.bf16.mxu0 0
    %3904 = vmatpush1.bf16.msra.mxu0 0
    %3905 = vmatprep.subr.bf16.mxu0 0
    %3906 = vmatpush1.bf16.msra.mxu0 0
    %3907 = vmatprep.subr.bf16.mxu0 0
    %3908 = vmatpush1.bf16.msra.mxu0 0
    %3909 = vmatprep.subr.bf16.mxu0 0
    %3910 = vmatpush1.bf16.msra.mxu0 0
    %3911 = vmatprep.subr.bf16.mxu0 0
    %3912 = vmatpush1.bf16.msra.mxu0 0
    %3913 = vmatprep.subr.bf16.mxu0 0
    %3914 = vmatpush1.bf16.msra.mxu0 0
    %3915 = vmatprep.subr.bf16.mxu0 0
    %3916 = vmatpush1.bf16.msra.mxu0 0
    %3917 = vmatprep.mubr.bf16.mxu0 0
    %3918 = vmatmul.mubr.bf16.gmra.mrb[0].mxu0 %v3883
    %v3919 = vpop.f32.mrb[0].mxu0
    %v3920 = vadd.f32 0.0, %v3919
    %v3921 = vpop.f32.mrb[0].mxu0
    %v3922 = vpop.f32.mrb[0].mxu0
    %v3923 = vpop.f32.mrb[0].mxu0
    %3924 = vdwg.mxu0
    %v3926 = vsel %vm81, %v3877, 0
    %3928 = vmatprep.subr.bf16.mxu0 0
    %3929 = vmatpush1.bf16.msra.mxu0 %v133
    %3930 = vmatprep.subr.bf16.mxu0 0
    %3931 = vmatpush1.bf16.msra.mxu0 %v134
    %3932 = vmatprep.subr.bf16.mxu0 0
    %3933 = vmatpush1.bf16.msra.mxu0 0
    %3934 = vmatprep.subr.bf16.mxu0 0
    %3935 = vmatpush1.bf16.msra.mxu0 0
    %3936 = vmatprep.subr.bf16.mxu0 0
    %3937 = vmatpush1.bf16.msra.mxu0 0
    %3938 = vmatprep.subr.bf16.mxu0 0
    %3939 = vmatpush1.bf16.msra.mxu0 0
    %3940 = vmatprep.subr.bf16.mxu0 0
    %3941 = vmatpush1.bf16.msra.mxu0 0
    %3942 = vmatprep.subr.bf16.mxu0 0
    %3943 = vmatpush1.bf16.msra.mxu0 0
    %3944 = vmatprep.subr.bf16.mxu0 0
    %3945 = vmatpush1.bf16.msra.mxu0 0
    %3946 = vmatprep.subr.bf16.mxu0 0
    %3947 = vmatpush1.bf16.msra.mxu0 0
    %3948 = vmatprep.subr.bf16.mxu0 0
    %3949 = vmatpush1.bf16.msra.mxu0 0
    %3950 = vmatprep.subr.bf16.mxu0 0
    %3951 = vmatpush1.bf16.msra.mxu0 0
    %3952 = vmatprep.subr.bf16.mxu0 0
    %3953 = vmatpush1.bf16.msra.mxu0 0
    %3954 = vmatprep.subr.bf16.mxu0 0
    %3955 = vmatpush1.bf16.msra.mxu0 0
    %3956 = vmatprep.subr.bf16.mxu0 0
    %3957 = vmatpush1.bf16.msra.mxu0 0
    %3958 = vmatprep.subr.bf16.mxu0 0
    %3959 = vmatpush1.bf16.msra.mxu0 0
    %3960 = vmatprep.mubr.bf16.mxu0 0
    %3961 = vmatmul.mubr.bf16.gmra.mrb[0].mxu0 %v3926
    %v3962 = vpop.f32.mrb[0].mxu0
    %v3963 = vadd.f32 %v3920, %v3962
    %v3964 = vpop.f32.mrb[0].mxu0
    %v3965 = vpop.f32.mrb[0].mxu0
    %v3966 = vpop.f32.mrb[0].mxu0
    %3967 = vdwg.mxu0
    %3968 = vmatprep.subr.bf16.mxu0 0
    %3969 = vmatpush1.bf16.msra.mxu0 %v198
    %3970 = vmatprep.subr.bf16.mxu0 0
    %3971 = vmatpush1.bf16.msra.mxu0 %v199
    %3972 = vmatprep.subr.bf16.mxu0 0
    %3973 = vmatpush1.bf16.msra.mxu0 0
    %3974 = vmatprep.subr.bf16.mxu0 0
    %3975 = vmatpush1.bf16.msra.mxu0 0
    %3976 = vmatprep.subr.bf16.mxu0 0
    %3977 = vmatpush1.bf16.msra.mxu0 0
    %3978 = vmatprep.subr.bf16.mxu0 0
    %3979 = vmatpush1.bf16.msra.mxu0 0
    %3980 = vmatprep.subr.bf16.mxu0 0
    %3981 = vmatpush1.bf16.msra.mxu0 0
    %3982 = vmatprep.subr.bf16.mxu0 0
    %3983 = vmatpush1.bf16.msra.mxu0 0
    %3984 = vmatprep.subr.bf16.mxu0 0
    %3985 = vmatpush1.bf16.msra.mxu0 0
    %3986 = vmatprep.subr.bf16.mxu0 0
    %3987 = vmatpush1.bf16.msra.mxu0 0
    %3988 = vmatprep.subr.bf16.mxu0 0
    %3989 = vmatpush1.bf16.msra.mxu0 0
    %3990 = vmatprep.subr.bf16.mxu0 0
    %3991 = vmatpush1.bf16.msra.mxu0 0
    %3992 = vmatprep.subr.bf16.mxu0 0
    %3993 = vmatpush1.bf16.msra.mxu0 0
    %3994 = vmatprep.subr.bf16.mxu0 0
    %3995 = vmatpush1.bf16.msra.mxu0 0
    %3996 = vmatprep.subr.bf16.mxu0 0
    %3997 = vmatpush1.bf16.msra.mxu0 0
    %3998 = vmatprep.subr.bf16.mxu0 0
    %3999 = vmatpush1.bf16.msra.mxu0 0
    %4000 = vmatprep.mubr.bf16.mxu0 0
    %4001 = vmatmul.mubr.bf16.gmra.mrb[0].mxu0 %v3883
    %v4002 = vpop.f32.mrb[0].mxu0
    %v4003 = vadd.f32 0.0, %v4002
    %v4004 = vpop.f32.mrb[0].mxu0
    %v4005 = vpop.f32.mrb[0].mxu0
    %v4006 = vpop.f32.mrb[0].mxu0
    %4007 = vdwg.mxu0
    %4008 = vmatprep.subr.bf16.mxu0 0
    %4009 = vmatpush1.bf16.msra.mxu0 %v250
    %4010 = vmatprep.subr.bf16.mxu0 0
    %4011 = vmatpush1.bf16.msra.mxu0 %v251
    %4012 = vmatprep.subr.bf16.mxu0 0
    %4013 = vmatpush1.bf16.msra.mxu0 0
    %4014 = vmatprep.subr.bf16.mxu0 0
    %4015 = vmatpush1.bf16.msra.mxu0 0
    %4016 = vmatprep.subr.bf16.mxu0 0
    %4017 = vmatpush1.bf16.msra.mxu0 0
    %4018 = vmatprep.subr.bf16.mxu0 0
    %4019 = vmatpush1.bf16.msra.mxu0 0
    %4020 = vmatprep.subr.bf16.mxu0 0
    %4021 = vmatpush1.bf16.msra.mxu0 0
    %4022 = vmatprep.subr.bf16.mxu0 0
    %4023 = vmatpush1.bf16.msra.mxu0 0
    %4024 = vmatprep.subr.bf16.mxu0 0
    %4025 = vmatpush1.bf16.msra.mxu0 0
    %4026 = vmatprep.subr.bf16.mxu0 0
    %4027 = vmatpush1.bf16.msra.mxu0 0
    %4028 = vmatprep.subr.bf16.mxu0 0
    %4029 = vmatpush1.bf16.msra.mxu0 0
    %4030 = vmatprep.subr.bf16.mxu0 0
    %4031 = vmatpush1.bf16.msra.mxu0 0
    %4032 = vmatprep.subr.bf16.mxu0 0
    %4033 = vmatpush1.bf16.msra.mxu0 0
    %4034 = vmatprep.subr.bf16.mxu0 0
    %4035 = vmatpush1.bf16.msra.mxu0 0
    %4036 = vmatprep.subr.bf16.mxu0 0
    %4037 = vmatpush1.bf16.msra.mxu0 0
    %4038 = vmatprep.subr.bf16.mxu0 0
    %4039 = vmatpush1.bf16.msra.mxu0 0
    %4040 = vmatprep.mubr.bf16.mxu0 0
    %4041 = vmatmul.mubr.bf16.gmra.mrb[0].mxu0 %v3926
    %v4042 = vpop.f32.mrb[0].mxu0
    %v4043 = vadd.f32 %v4003, %v4042
    %v4044 = vpop.f32.mrb[0].mxu0
    %v4045 = vpop.f32.mrb[0].mxu0
    %v4046 = vpop.f32.mrb[0].mxu0
    %4047 = vdwg.mxu0
    %v4048 = vsel %vm50, %v4043, %v3963
    %4049 = vmatprep.subr.bf16.mxu0 0
    %4050 = vmatpush1.bf16.msra.mxu0 %v313
    %4051 = vmatprep.subr.bf16.mxu0 0
    %4052 = vmatpush1.bf16.msra.mxu0 %v314
    %4053 = vmatprep.subr.bf16.mxu0 0
    %4054 = vmatpush1.bf16.msra.mxu0 0
    %4055 = vmatprep.subr.bf16.mxu0 0
    %4056 = vmatpush1.bf16.msra.mxu0 0
    %4057 = vmatprep.subr.bf16.mxu0 0
    %4058 = vmatpush1.bf16.msra.mxu0 0
    %4059 = vmatprep.subr.bf16.mxu0 0
    %4060 = vmatpush1.bf16.msra.mxu0 0
    %4061 = vmatprep.subr.bf16.mxu0 0
    %4062 = vmatpush1.bf16.msra.mxu0 0
    %4063 = vmatprep.subr.bf16.mxu0 0
    %4064 = vmatpush1.bf16.msra.mxu0 0
    %4065 = vmatprep.subr.bf16.mxu0 0
    %4066 = vmatpush1.bf16.msra.mxu0 0
    %4067 = vmatprep.subr.bf16.mxu0 0
    %4068 = vmatpush1.bf16.msra.mxu0 0
    %4069 = vmatprep.subr.bf16.mxu0 0
    %4070 = vmatpush1.bf16.msra.mxu0 0
    %4071 = vmatprep.subr.bf16.mxu0 0
    %4072 = vmatpush1.bf16.msra.mxu0 0
    %4073 = vmatprep.subr.bf16.mxu0 0
    %4074 = vmatpush1.bf16.msra.mxu0 0
    %4075 = vmatprep.subr.bf16.mxu0 0
    %4076 = vmatpush1.bf16.msra.mxu0 0
    %4077 = vmatprep.subr.bf16.mxu0 0
    %4078 = vmatpush1.bf16.msra.mxu0 0
    %4079 = vmatprep.subr.bf16.mxu0 0
    %4080 = vmatpush1.bf16.msra.mxu0 0
    %4081 = vmatprep.mubr.bf16.mxu0 0
    %4082 = vmatmul.mubr.bf16.gmra.mrb[0].mxu0 %v3883
    %v4083 = vpop.f32.mrb[0].mxu0
    %v4084 = vadd.f32 0.0, %v4083
    %v4085 = vpop.f32.mrb[0].mxu0
    %v4086 = vpop.f32.mrb[0].mxu0
    %v4087 = vpop.f32.mrb[0].mxu0
    %4088 = vdwg.mxu0
    %4089 = vmatprep.subr.bf16.mxu0 0
    %4090 = vmatpush1.bf16.msra.mxu0 %v365
    %4091 = vmatprep.subr.bf16.mxu0 0
    %4092 = vmatpush1.bf16.msra.mxu0 %v366
    %4093 = vmatprep.subr.bf16.mxu0 0
    %4094 = vmatpush1.bf16.msra.mxu0 0
    %4095 = vmatprep.subr.bf16.mxu0 0
    %4096 = vmatpush1.bf16.msra.mxu0 0
    %4097 = vmatprep.subr.bf16.mxu0 0
    %4098 = vmatpush1.bf16.msra.mxu0 0
    %4099 = vmatprep.subr.bf16.mxu0 0
    %4100 = vmatpush1.bf16.msra.mxu0 0
    %4101 = vmatprep.subr.bf16.mxu0 0
    %4102 = vmatpush1.bf16.msra.mxu0 0
    %4103 = vmatprep.subr.bf16.mxu0 0
    %4104 = vmatpush1.bf16.msra.mxu0 0
    %4105 = vmatprep.subr.bf16.mxu0 0
    %4106 = vmatpush1.bf16.msra.mxu0 0
    %4107 = vmatprep.subr.bf16.mxu0 0
    %4108 = vmatpush1.bf16.msra.mxu0 0
    %4109 = vmatprep.subr.bf16.mxu0 0
    %4110 = vmatpush1.bf16.msra.mxu0 0
    %4111 = vmatprep.subr.bf16.mxu0 0
    %4112 = vmatpush1.bf16.msra.mxu0 0
    %4113 = vmatprep.subr.bf16.mxu0 0
    %4114 = vmatpush1.bf16.msra.mxu0 0
    %4115 = vmatprep.subr.bf16.mxu0 0
    %4116 = vmatpush1.bf16.msra.mxu0 0
    %4117 = vmatprep.subr.bf16.mxu0 0
    %4118 = vmatpush1.bf16.msra.mxu0 0
    %4119 = vmatprep.subr.bf16.mxu0 0
    %4120 = vmatpush1.bf16.msra.mxu0 0
    %4121 = vmatprep.mubr.bf16.mxu0 0
    %4122 = vmatmul.mubr.bf16.gmra.mrb[0].mxu0 %v3926
    %v4123 = vpop.f32.mrb[0].mxu0
    %v4124 = vadd.f32 %v4084, %v4123
    %v4125 = vpop.f32.mrb[0].mxu0
    %v4126 = vpop.f32.mrb[0].mxu0
    %v4127 = vpop.f32.mrb[0].mxu0
    %4128 = vdwg.mxu0
    %v4129 = vsel %vm53, %v4124, %v4048
    %4130 = vmatprep.subr.bf16.mxu0 0
    %4131 = vmatpush1.bf16.msra.mxu0 %v428
    %4132 = vmatprep.subr.bf16.mxu0 0
    %4133 = vmatpush1.bf16.msra.mxu0 %v429
    %4134 = vmatprep.subr.bf16.mxu0 0
    %4135 = vmatpush1.bf16.msra.mxu0 0
    %4136 = vmatprep.subr.bf16.mxu0 0
    %4137 = vmatpush1.bf16.msra.mxu0 0
    %4138 = vmatprep.subr.bf16.mxu0 0
    %4139 = vmatpush1.bf16.msra.mxu0 0
    %4140 = vmatprep.subr.bf16.mxu0 0
    %4141 = vmatpush1.bf16.msra.mxu0 0
    %4142 = vmatprep.subr.bf16.mxu0 0
    %4143 = vmatpush1.bf16.msra.mxu0 0
    %4144 = vmatprep.subr.bf16.mxu0 0
    %4145 = vmatpush1.bf16.msra.mxu0 0
    %4146 = vmatprep.subr.bf16.mxu0 0
    %4147 = vmatpush1.bf16.msra.mxu0 0
    %4148 = vmatprep.subr.bf16.mxu0 0
    %4149 = vmatpush1.bf16.msra.mxu0 0
    %4150 = vmatprep.subr.bf16.mxu0 0
    %4151 = vmatpush1.bf16.msra.mxu0 0
    %4152 = vmatprep.subr.bf16.mxu0 0
    %4153 = vmatpush1.bf16.msra.mxu0 0
    %4154 = vmatprep.subr.bf16.mxu0 0
    %4155 = vmatpush1.bf16.msra.mxu0 0
    %4156 = vmatprep.subr.bf16.mxu0 0
    %4157 = vmatpush1.bf16.msra.mxu0 0
    %4158 = vmatprep.subr.bf16.mxu0 0
    %4159 = vmatpush1.bf16.msra.mxu0 0
    %4160 = vmatprep.subr.bf16.mxu0 0
    %4161 = vmatpush1.bf16.msra.mxu0 0
    %4162 = vmatprep.mubr.bf16.mxu0 0
    %4163 = vmatmul.mubr.bf16.gmra.mrb[0].mxu0 %v3883
    %v4164 = vpop.f32.mrb[0].mxu0
    %v4165 = vadd.f32 0.0, %v4164
    %v4166 = vpop.f32.mrb[0].mxu0
    %v4167 = vpop.f32.mrb[0].mxu0
    %v4168 = vpop.f32.mrb[0].mxu0
    %4169 = vdwg.mxu0
    %4170 = vmatprep.subr.bf16.mxu0 0
    %4171 = vmatpush1.bf16.msra.mxu0 %v480
    %4172 = vmatprep.subr.bf16.mxu0 0
    %4173 = vmatpush1.bf16.msra.mxu0 %v481
    %4174 = vmatprep.subr.bf16.mxu0 0
    %4175 = vmatpush1.bf16.msra.mxu0 0
    %4176 = vmatprep.subr.bf16.mxu0 0
    %4177 = vmatpush1.bf16.msra.mxu0 0
    %4178 = vmatprep.subr.bf16.mxu0 0
    %4179 = vmatpush1.bf16.msra.mxu0 0
    %4180 = vmatprep.subr.bf16.mxu0 0
    %4181 = vmatpush1.bf16.msra.mxu0 0
    %4182 = vmatprep.subr.bf16.mxu0 0
    %4183 = vmatpush1.bf16.msra.mxu0 0
    %4184 = vmatprep.subr.bf16.mxu0 0
    %4185 = vmatpush1.bf16.msra.mxu0 0
    %4186 = vmatprep.subr.bf16.mxu0 0
    %4187 = vmatpush1.bf16.msra.mxu0 0
    %4188 = vmatprep.subr.bf16.mxu0 0
    %4189 = vmatpush1.bf16.msra.mxu0 0
    %4190 = vmatprep.subr.bf16.mxu0 0
    %4191 = vmatpush1.bf16.msra.mxu0 0
    %4192 = vmatprep.subr.bf16.mxu0 0
    %4193 = vmatpush1.bf16.msra.mxu0 0
    %4194 = vmatprep.subr.bf16.mxu0 0
    %4195 = vmatpush1.bf16.msra.mxu0 0
    %4196 = vmatprep.subr.bf16.mxu0 0
    %4197 = vmatpush1.bf16.msra.mxu0 0
    %4198 = vmatprep.subr.bf16.mxu0 0
    %4199 = vmatpush1.bf16.msra.mxu0 0
    %4200 = vmatprep.subr.bf16.mxu0 0
    %4201 = vmatpush1.bf16.msra.mxu0 0
    %4202 = vmatprep.mubr.bf16.mxu0 0
    %4203 = vmatmul.mubr.bf16.gmra.mrb[0].mxu0 %v3926
    %v4204 = vpop.f32.mrb[0].mxu0
    %v4205 = vadd.f32 %v4165, %v4204
    %v4206 = vpop.f32.mrb[0].mxu0
    %v4207 = vpop.f32.mrb[0].mxu0
    %v4208 = vpop.f32.mrb[0].mxu0
    %4209 = vdwg.mxu0
    %v4210 = vsel %vm56, %v4205, %v4129
    %v4211 = vadd.f32 %v4210, %v40
    %v4212 = vtanh.pop %v4211
    %v4213 = vxor.u32 %v4211, 2147483648
    %v4214 = vmul.f32 %v4213, 1.442695
    %v4215 = vpow.pop %v4214
    %v4216 = vadd.f32 %v4215, 1.0
    %v4217 = vrcp.pop %v4216
    %v4218 = vmul.f32 1.0, %v4217
    %v4219 = vsel %vm45, %v4212, %v4218
    %v4220 = vmul.f32 %v4219, %v3862
    %4222 = vrot.lane.b32.xlu0 %v4219, 64
    %v4223 = vpop.permute.xlu0 %4222
    %v4225 = vmul.f32 %v4219, %v4223
    %4227 = vrot.lane.b32.xlu0 %v4225, 32
    %v4228 = vpop.permute.xlu0 %4227
    %v4230 = vadd.f32 %v4220, %v4228
    %v4231 = vtanh.pop %v4230
    %4233 = vrot.lane.b32.xlu0 %v4231, 64
    %v4234 = vpop.permute.xlu0 %4233
    %v4236 = vmul.f32 %v4219, %v4234
    %v4237 = vld [vmem:[%s4] sm:$0x1]
    %v4239 = vlaneseq
    %v4240 = vshrl.u32 %v4239, 7
    %v4241 = vsub.s32 0, %v4240
    %v4242 = vrot.slane %v4237, %v4241
    %4243 = vrot.lane.b32.xlu0 %v4242, 96
    %v4244 = vpop.permute.xlu0 %4243
    %v4246 = vmul.f32 %v4236, %v4244
    %4248 = vrot.lane.b32.xlu0 %v4246, 32
    %v4249 = vpop.permute.xlu0 %4248
    %vm4251 = vcmask 261126
    %v4252 = vsel %vm4251, %v4249, 0.0
    %4253 = vadd.xlane.f32.xlu0 %v4252
    %v4254 = vpop.xlane.xlu0 %4253
    %v4255 = vld [vmem:[#allocation2] sm:$0x1]
    %v4257 = vlaneseq
    %v4258 = vshrl.u32 %v4257, 7
    %v4259 = vsub.s32 0, %v4258
    %v4260 = vrot.slane %v4255, %v4259
    %v4262 = vadd.f32 %v4254, %v4260
    %vm4263 = vcmask 7174
    %4264 = vst.msk [vmem:[%s6 - $0x6] sm:$0xc0] %vm4263, %v4262
    // Predicated region
    $region30: #{lstm_forward.1} parent=1 // pred_check
      _
    $region31: #{lstm_forward.1} parent=1 // pred_check_branch
      %4266 = sbr.rel (0) target = $region33
    $region32: #{lstm_forward.1} parent=1 // pred_region
      _
    $region33: #{lstm_forward.1} parent=1 // pred_fallthru
      _
    // Predicated region
    $region34: #{lstm_forward.1} parent=1 // pred_check
      _
    $region35: #{lstm_forward.1} parent=1 // pred_check_branch
      %4268 = sbr.rel (0) target = $region37
    $region36: #{lstm_forward.1} parent=1 // pred_region
      _
    $region37: #{lstm_forward.1} parent=1 // pred_fallthru
      _
    %4269 = vsyncpa [#allocation4], 1

</llo_original>
